<compile_context>
chip_gen: v7x
topology: tpu7x:2x2x1
jax: 0.10.0
libtpu: 0.0.40
codegen_flags: <defaults>
</compile_context>

<pallas_src>
import jax
import jax.numpy as jnp
from jax import lax
from jax.experimental import pallas as pl
from jax.experimental.pallas import tpu as pltpu


# --------------------------------------------------------------------------- #
# Kernel factory (static time-block size / tail-mask config baked in)
# --------------------------------------------------------------------------- #
def _make_lstm_disc_kernel(t_valid, tt, needs_mask, unroll):

    def kernel(emb_ref,                         # (tt, bb, Ep)   matmul dtype
               wih0_ref, whh0_ref, b0_ref,      # (Ep,4Hp) (Hp,4Hp) (1,4Hp)
               wih1_ref, whh1_ref, b1_ref,      # (Hp,4Hp) (Hp,4Hp) (1,4Hp)
               fcw_ref, fcb_ref,                # (Hp,1) (1,1)
               out_ref,                         # (bb, 1) f32
               xproj_ref,                       # (tt, bb, 4Hp) f32 scratch
               h0_ref, c0_ref, h1_ref, c1_ref):  # (bb, Hp) f32 scratch
        t_id = pl.program_id(1)
        _, bb, Ep = emb_ref.shape
        Hp = whh0_ref.shape[0]
        f32 = jnp.float32

        # -- init carried state at the first time block of each batch block ----
        @pl.when(t_id == 0)
        def _init():
            z = jnp.zeros((bb, Hp), f32)
            h0_ref[...] = z
            c0_ref[...] = z
            h1_ref[...] = z
            c1_ref[...] = z

        # weights are VMEM-resident (constant index_map); load once per block
        whh0 = whh0_ref[...]
        wih1 = wih1_ref[...]
        whh1 = whh1_ref[...]
        # hoisted bias broadcast (JAX does not CSE broadcast_in_dim inside loops)
        b1b = jnp.broadcast_to(b1_ref[...], (bb, 4 * Hp))

        # -- hoisted layer-0 input projection for the whole time block ---------
        # one well-shaped (tt*bb, Ep) @ (Ep, 4Hp) MXU matmul, bias folded in;
        # stored time-major so the per-step read is a leading-dim slice.
        x = emb_ref[...].reshape(tt * bb, Ep)
        xproj_ref[...] = (
            jnp.dot(x, wih0_ref[...], preferred_element_type=f32) + b0_ref[...]
        ).reshape(tt, bb, 4 * Hp)

        def sig(v):  # sigmoid(x) == 0.5*tanh(0.5*x)+0.5 : 1 EUP op, not exp+recip
            return 0.5 * jnp.tanh(0.5 * v) + 0.5

        def gates(pre):  # PyTorch gate order [i, f, g, o]
            i = sig(pre[:, 0 * Hp:1 * Hp])
            f = sig(pre[:, 1 * Hp:2 * Hp])
            g = jnp.tanh(pre[:, 2 * Hp:3 * Hp])
            o = sig(pre[:, 3 * Hp:4 * Hp])
            return i, f, g, o

        def body(k, carry):
            h0, c0, h1, c1 = carry
            xk = xproj_ref[k]                       # (bb, 4Hp) leading-dim slice

            # ---- layer 0: only the recurrent matmul on the serialized path ---
            pre0 = xk + jnp.dot(h0.astype(whh0.dtype), whh0,
                                preferred_element_type=f32)
            i0, f0, g0, o0 = gates(pre0)
            c0n = f0 * c0 + i0 * g0
            h0n = o0 * jnp.tanh(c0n)

            # ---- layer 1: two back-to-back MXU dots (no per-step concat) -----
            pre1 = (jnp.dot(h0n.astype(wih1.dtype), wih1,
                            preferred_element_type=f32)
                    + jnp.dot(h1.astype(whh1.dtype), whh1,
                              preferred_element_type=f32)
                    + b1b)
            i1, f1, g1, o1 = gates(pre1)
            c1n = f1 * c1 + i1 * g1
            h1n = o1 * jnp.tanh(c1n)

            if needs_mask:
                # zero-padded timestep: biases would still move the state,
                # so gate the update instead of relying on padding.
                valid = (t_id * tt + k) < t_valid
                h0n = jnp.where(valid, h0n, h0)
                c0n = jnp.where(valid, c0n, c0)
                h1n = jnp.where(valid, h1n, h1)
                c1n = jnp.where(valid, c1n, c1)
            return h0n, c0n, h1n, c1n

        h0, c0, h1, c1 = lax.fori_loop(
            0, tt, body,
            (h0_ref[...], c0_ref[...], h1_ref[...], c1_ref[...]),
            unroll=unroll)

        # write state back for the next time block
        h0_ref[...] = h0
        c0_ref[...] = c0
        h1_ref[...] = h1
        c1_ref[...] = c1

        # -- final projection on the last time block ----------------------------
        @pl.when(t_id == pl.num_programs(1) - 1)
        def _finalize():
            out_ref[...] = (jnp.dot(h1.astype(fcw_ref.dtype), fcw_ref[...],
                                    preferred_element_type=f32)
                            + fcb_ref[...]).astype(out_ref.dtype)

    return kernel


# --------------------------------------------------------------------------- #
# Parameter init (PyTorch-style, unpadded layout)
# --------------------------------------------------------------------------- #
def init_params(key, vocab_size, embedding_dim, hidden_dim):
    H, E, V = hidden_dim, embedding_dim, vocab_size
    ks = jax.random.split(key, 12)
    stdv = 1.0 / jnp.sqrt(jnp.float32(H))

    def u(k, shape):
        return jax.random.uniform(k, shape, jnp.float32, -stdv, stdv)

    return {
        "embedding": jax.random.normal(ks[0], (V, E), jnp.float32),
        # layer 0 (input size E); weights pre-transposed to (in_dim, 4H)
        "w_ih0": u(ks[1], (E, 4 * H)),
        "w_hh0": u(ks[2], (H, 4 * H)),
        "b0": (u(ks[3], (4 * H,)) + u(ks[4], (4 * H,))).reshape(1, 4 * H),
        # layer 1 (input size H)
        "w_ih1": u(ks[5], (H, 4 * H)),
        "w_hh1": u(ks[6], (H, 4 * H)),
        "b1": (u(ks[7], (4 * H,)) + u(ks[8], (4 * H,))).reshape(1, 4 * H),
        # fc: Linear(H, 1)
        "fc_w": u(ks[9], (H, 1)),
        "fc_b": u(ks[10], (1, 1)),
    }


# --------------------------------------------------------------------------- #
# Packing / padding helpers (exact zero-padding to (8,128)-aligned shapes)
# --------------------------------------------------------------------------- #
def _round_up(x, m):
    return (x + m - 1) // m * m


def _pad_gate_cols(w, H, Hp):
    """(in_dim, 4H) -> (in_dim, 4Hp): zero-pad each gate block [i,f,g,o] to Hp."""
    in_dim = w.shape[0]
    w = w.reshape(in_dim, 4, H)
    w = jnp.pad(w, ((0, 0), (0, 0), (0, Hp - H)))
    return w.reshape(in_dim, 4 * Hp)


def _pad_rows(w, new_rows):
    return jnp.pad(w, ((0, new_rows - w.shape[0]),) + ((0, 0),) * (w.ndim - 1))


# --------------------------------------------------------------------------- #
# Wrapper
# --------------------------------------------------------------------------- #
def discriminator_forward(tokens, params, *,
                          matmul_dtype=jnp.bfloat16,   # bf16 MXU (state stays f32)
                          max_block_batch=128,         # raise to 256 on v6e/v7x for B>=256
                          num_batch_shards=1,          # set 2 on v7x when B<=128 (megacore)
                          unroll=8):
    """tokens: int32 (B, T) -> logits f32 (B,)."""
    B, T = tokens.shape
    E = params["embedding"].shape[1]
    H = params["w_hh0"].shape[0]
    f32 = jnp.float32

    # --- (8,128)-aligned padded dims -------------------------------------------
    Ep = _round_up(E, 128)
    Hp = _round_up(H, 128)

    # --- batch block ------------------------------------------------------------
    if B <= max_block_batch and num_batch_shards == 1:
        bb = _round_up(max(B, 8), 8)
        Bp = bb
    else:
        shards = max(num_batch_shards, -(-B // max_block_batch))
        bb = _round_up(-(-B // shards), 8)
        Bp = bb * shards

    # --- time block: keep the f32 xproj scratch <= ~8 MiB, cap at 32 steps ------
    xproj_budget = 8 * 1024 * 1024
    tt_cap = max(1, min(32, xproj_budget // (bb * 4 * Hp * 4)))
    tt = min(T, tt_cap)
    T_pad = _round_up(T, tt)
    needs_mask = (T_pad != T)

    # --- pack / pad parameters (gate order [i, f, g, o] along the 4H axis) ------
    w_ih0 = _pad_rows(_pad_gate_cols(params["w_ih0"], H, Hp), Ep).astype(matmul_dtype)
    w_hh0 = _pad_rows(_pad_gate_cols(params["w_hh0"], H, Hp), Hp).astype(matmul_dtype)
    b0 = _pad_gate_cols(params["b0"], H, Hp).astype(f32)
    w_ih1 = _pad_rows(_pad_gate_cols(params["w_ih1"], H, Hp), Hp).astype(matmul_dtype)
    w_hh1 = _pad_rows(_pad_gate_cols(params["w_hh1"], H, Hp), Hp).astype(matmul_dtype)
    b1 = _pad_gate_cols(params["b1"], H, Hp).astype(f32)
    fc_w = _pad_rows(params["fc_w"], Hp).astype(matmul_dtype)             # (Hp, 1)
    fc_b = params["fc_b"].astype(f32)                                     # (1, 1)

    # --- embedding lookup (glue: XLA gather), TIME-MAJOR, zero-padded ------------
    emb = params["embedding"][tokens.T].astype(matmul_dtype)              # (T, B, E)
    emb = jnp.pad(emb, ((0, T_pad - T), (0, Bp - B), (0, Ep - E)))        # (T_pad, Bp, Ep)

    grid = (Bp // bb, T_pad // tt)
    const = lambda b, t: (0, 0)

    # --- explicit VMEM budget (covers v5e 16 MiB default / v7x 64 MiB physical) --
    mmb = jnp.dtype(matmul_dtype).itemsize
    vmem_needed = (
        2 * tt * bb * Ep * mmb                      # double-buffered emb block
        + tt * bb * 4 * Hp * 4                      # xproj f32 scratch
        + 2 * (Ep + 2 * Hp) * 4 * Hp * mmb          # weight buffers (double-buffered)
        + 2 * (Hp * mmb + 3 * 4 * Hp * 4)           # fc_w + biases (loose)
        + 4 * bb * Hp * 4                           # carried h/c state
        + 2 * bb * 4                                # output block
    )
    vmem_limit = int(vmem_needed * 1.5) + (4 << 20)
    vmem_limit = min(max(vmem_limit, 32 * 1024 * 1024), 64 * 1024 * 1024)

    kernel = _make_lstm_disc_kernel(T, tt, needs_mask, min(unroll, tt))

    out = pl.pallas_call(
        kernel,
        out_shape=jax.ShapeDtypeStruct((Bp, 1), f32),
        grid_spec=pltpu.PrefetchScalarGridSpec(
            num_scalar_prefetch=0,
            grid=grid,
            in_specs=[
                pl.BlockSpec((tt, bb, Ep), lambda b, t: (t, b, 0)),   # embeddings
                pl.BlockSpec((Ep, 4 * Hp), const),                    # W_ih0
                pl.BlockSpec((Hp, 4 * Hp), const),                    # W_hh0
                pl.BlockSpec((1, 4 * Hp), const),                     # b0
                pl.BlockSpec((Hp, 4 * Hp), const),                    # W_ih1
                pl.BlockSpec((Hp, 4 * Hp), const),                    # W_hh1
                pl.BlockSpec((1, 4 * Hp), const),                     # b1
                pl.BlockSpec((Hp, 1), const),                         # fc_w
                pl.BlockSpec((1, 1), const),                          # fc_b
            ],
            out_specs=pl.BlockSpec((bb, 1), lambda b, t: (b, 0)),
            scratch_shapes=[
                pltpu.VMEM((tt, bb, 4 * Hp), f32),                    # xproj
                pltpu.VMEM((bb, Hp), f32),                            # h0
                pltpu.VMEM((bb, Hp), f32),                            # c0
                pltpu.VMEM((bb, Hp), f32),                            # h1
                pltpu.VMEM((bb, Hp), f32),                            # c1
            ],
        ),
        compiler_params=pltpu.CompilerParams(
            dimension_semantics=("parallel", "arbitrary"),
            vmem_limit_bytes=vmem_limit),
    )(emb, w_ih0, w_hh0, b0, w_ih1, w_hh1, b1, fc_w, fc_b)

    return out[:B, 0]                                                     # squeeze(-1)


# --------------------------------------------------------------------------- #
# Pure-JAX reference (same math, unpadded) for the correctness check
# --------------------------------------------------------------------------- #
def discriminator_forward_ref(tokens, params):
    embedded = params["embedding"][tokens]              # (B, T, E)
    B, T, _ = embedded.shape
    H = params["w_hh0"].shape[0]

    def cell(x_t, h, c, wih, whh, b):
        g = x_t @ wih + h @ whh + b
        i = jax.nn.sigmoid(g[:, 0 * H:1 * H])
        f = jax.nn.sigmoid(g[:, 1 * H:2 * H])
        gg = jnp.tanh(g[:, 2 * H:3 * H])
        o = jax.nn.sigmoid(g[:, 3 * H:4 * H])
        c = f * c + i * gg
        return o * jnp.tanh(c), c

    h0 = c0 = h1 = c1 = jnp.zeros((B, H), jnp.float32)
    for t in range(T):
        x_t = embedded[:, t, :]
        h0, c0 = cell(x_t, h0, c0, params["w_ih0"], params["w_hh0"], params["b0"])
        h1, c1 = cell(h0, h1, c1, params["w_ih1"], params["w_hh1"], params["b1"])
    return (h1 @ params["fc_w"] + params["fc_b"])[:, 0]


# --------------------------------------------------------------------------- #
if __name__ == "__main__":
    vocab_size, embedding_dim, hidden_dim = 50, 16, 32
    B, T = 2, 8

    key = jax.random.PRNGKey(0)
    k_par, k_tok = jax.random.split(key)
    params = init_params(k_par, vocab_size, embedding_dim, hidden_dim)
    tokens = jax.random.randint(k_tok, (B, T), 0, vocab_size, dtype=jnp.int32)

    ref = jax.block_until_ready(discriminator_forward_ref(tokens, params))

    # f32 matmul path: tight tolerance
    out_f32 = jax.block_until_ready(
        discriminator_forward(tokens, params, matmul_dtype=jnp.float32))
    assert out_f32.shape == (B,)
    assert jnp.allclose(out_f32, ref, atol=2e-3, rtol=2e-3), (out_f32, ref)

    # default bf16 MXU path: looser tolerance (weights/emb/h rounded to bf16)
    out_bf16 = jax.block_until_ready(discriminator_forward(tokens, params))
    assert out_bf16.shape == (B,)
    assert jnp.allclose(out_bf16, ref, atol=5e-2, rtol=5e-2), (out_bf16, ref)

    print("KERNEL_OK")
</pallas_src>

<mosaic_0001>
module attributes {stable_mosaic.version = 11 : i64} {
  func.func @kernel(%arg0: i32, %arg1: i32, %arg2: memref<8x8x128xf32, #tpu.memory_space<vmem>>, %arg3: memref<128x512xf32, #tpu.memory_space<vmem>>, %arg4: memref<128x512xf32, #tpu.memory_space<vmem>>, %arg5: memref<1x512xf32, #tpu.memory_space<vmem>>, %arg6: memref<128x512xf32, #tpu.memory_space<vmem>>, %arg7: memref<128x512xf32, #tpu.memory_space<vmem>>, %arg8: memref<1x512xf32, #tpu.memory_space<vmem>>, %arg9: memref<128x1xf32, #tpu.memory_space<vmem>>, %arg10: memref<1x1xf32, #tpu.memory_space<vmem>>, %arg11: memref<8x1xf32, #tpu.memory_space<vmem>>, %arg12: memref<8x8x512xf32, #tpu.memory_space<vmem>>, %arg13: memref<8x128xf32, #tpu.memory_space<vmem>>, %arg14: memref<8x128xf32, #tpu.memory_space<vmem>>, %arg15: memref<8x128xf32, #tpu.memory_space<vmem>>, %arg16: memref<8x128xf32, #tpu.memory_space<vmem>>) attributes {dimension_semantics = [#tpu.dimension_semantics<parallel>, #tpu.dimension_semantics<arbitrary>], iteration_bounds = array<i64: 1, 1>, scalar_prefetch = 0 : i64, scratch_operands = 5 : i64, tpu.core_type = #tpu.core_type<tc>, window_params = [{transform_indices = @transform_0, window_bounds = array<i64: 8, 8, 128>}, {pipeline_mode = #tpu.pipeline_mode<synchronous>, transform_indices = @transform_1, window_bounds = array<i64: 128, 512>}, {pipeline_mode = #tpu.pipeline_mode<synchronous>, transform_indices = @transform_2, window_bounds = array<i64: 128, 512>}, {pipeline_mode = #tpu.pipeline_mode<synchronous>, transform_indices = @transform_3, window_bounds = array<i64: 1, 512>}, {pipeline_mode = #tpu.pipeline_mode<synchronous>, transform_indices = @transform_4, window_bounds = array<i64: 128, 512>}, {pipeline_mode = #tpu.pipeline_mode<synchronous>, transform_indices = @transform_5, window_bounds = array<i64: 128, 512>}, {pipeline_mode = #tpu.pipeline_mode<synchronous>, transform_indices = @transform_6, window_bounds = array<i64: 1, 512>}, {pipeline_mode = #tpu.pipeline_mode<synchronous>, transform_indices = @transform_7, window_bounds = array<i64: 128, 1>}, {pipeline_mode = #tpu.pipeline_mode<synchronous>, transform_indices = @transform_8, window_bounds = array<i64: 1, 1>}, {transform_indices = @transform_9, window_bounds = array<i64: 8, 1>}]} {
    %c0_i32 = arith.constant 0 : i32
    %0 = arith.cmpi eq, %arg1, %c0_i32 : i32
    %1 = arith.extui %0 : i1 to i32
    %c0_i32_0 = arith.constant 0 : i32
    %2 = arith.cmpi ne, %1, %c0_i32_0 : i32
    scf.if %2 {
      %cst_221 = arith.constant 0.000000e+00 : f32
      %597 = vector.broadcast %cst_221 : f32 to vector<8x128xf32>
      %c0_222 = arith.constant 0 : index
      %c0_223 = arith.constant 0 : index
      %598 = vector.load %arg13[%c0_222, %c0_223] : memref<8x128xf32, #tpu.memory_space<vmem>>, vector<8x128xf32>
      tpu.vector_store %arg13[%c0_222, %c0_223], %597 {strides = array<i32>} : memref<8x128xf32, #tpu.memory_space<vmem>>, vector<8x128xf32>,
      %c0_224 = arith.constant 0 : index
      %c0_225 = arith.constant 0 : index
      %599 = vector.load %arg14[%c0_224, %c0_225] : memref<8x128xf32, #tpu.memory_space<vmem>>, vector<8x128xf32>
      tpu.vector_store %arg14[%c0_224, %c0_225], %597 {strides = array<i32>} : memref<8x128xf32, #tpu.memory_space<vmem>>, vector<8x128xf32>,
      %c0_226 = arith.constant 0 : index
      %c0_227 = arith.constant 0 : index
      %600 = vector.load %arg15[%c0_226, %c0_227] : memref<8x128xf32, #tpu.memory_space<vmem>>, vector<8x128xf32>
      tpu.vector_store %arg15[%c0_226, %c0_227], %597 {strides = array<i32>} : memref<8x128xf32, #tpu.memory_space<vmem>>, vector<8x128xf32>,
      %c0_228 = arith.constant 0 : index
      %c0_229 = arith.constant 0 : index
      %601 = vector.load %arg16[%c0_228, %c0_229] : memref<8x128xf32, #tpu.memory_space<vmem>>, vector<8x128xf32>
      tpu.vector_store %arg16[%c0_228, %c0_229], %597 {strides = array<i32>} : memref<8x128xf32, #tpu.memory_space<vmem>>, vector<8x128xf32>,
    } else {
    }
    %c0 = arith.constant 0 : index
    %c0_1 = arith.constant 0 : index
    %3 = vector.load %arg4[%c0, %c0_1] : memref<128x512xf32, #tpu.memory_space<vmem>>, vector<128x512xf32>
    %c0_2 = arith.constant 0 : index
    %c0_3 = arith.constant 0 : index
    %4 = vector.load %arg6[%c0_2, %c0_3] : memref<128x512xf32, #tpu.memory_space<vmem>>, vector<128x512xf32>
    %c0_4 = arith.constant 0 : index
    %c0_5 = arith.constant 0 : index
    %5 = vector.load %arg7[%c0_4, %c0_5] : memref<128x512xf32, #tpu.memory_space<vmem>>, vector<128x512xf32>
    %c0_6 = arith.constant 0 : index
    %c0_7 = arith.constant 0 : index
    %6 = vector.load %arg8[%c0_6, %c0_7] : memref<1x512xf32, #tpu.memory_space<vmem>>, vector<1x512xf32>
    %7 = vector.shape_cast %6 : vector<1x512xf32> to vector<1x512xf32>
    %8 = vector.broadcast %7 : vector<1x512xf32> to vector<8x512xf32>
    %c0_8 = arith.constant 0 : index
    %c0_9 = arith.constant 0 : index
    %c0_10 = arith.constant 0 : index
    %9 = vector.load %arg2[%c0_8, %c0_9, %c0_10] : memref<8x8x128xf32, #tpu.memory_space<vmem>>, vector<8x8x128xf32>
    %10 = vector.shape_cast %9 : vector<8x8x128xf32> to vector<64x128xf32>
    %c0_11 = arith.constant 0 : index
    %c0_12 = arith.constant 0 : index
    %11 = vector.load %arg3[%c0_11, %c0_12] : memref<128x512xf32, #tpu.memory_space<vmem>>, vector<128x512xf32>
    %cst = arith.constant dense<0.000000e+00> : vector<64x512xf32>
    %12 = tpu.matmul %10, %11, %cst {dimension_numbers = #tpu.dot_dimension_numbers<[1], [0], [0], [1], [0, 0, 1, 1], [], []>} : vector<64x128xf32>, vector<128x512xf32>, vector<64x512xf32> -> vector<64x512xf32>
    %c0_13 = arith.constant 0 : index
    %c0_14 = arith.constant 0 : index
    %13 = vector.load %arg5[%c0_13, %c0_14] : memref<1x512xf32, #tpu.memory_space<vmem>>, vector<1x512xf32>
    %14 = vector.broadcast %13 : vector<1x512xf32> to vector<64x512xf32>
    %15 = arith.addf %12, %14 : vector<64x512xf32>
    %16 = vector.shape_cast %15 : vector<64x512xf32> to vector<8x8x512xf32>
    %c0_15 = arith.constant 0 : index
    %c0_16 = arith.constant 0 : index
    %c0_17 = arith.constant 0 : index
    %17 = vector.load %arg12[%c0_15, %c0_16, %c0_17] : memref<8x8x512xf32, #tpu.memory_space<vmem>>, vector<8x8x512xf32>
    tpu.vector_store %arg12[%c0_15, %c0_16, %c0_17], %16 {strides = array<i32>} : memref<8x8x512xf32, #tpu.memory_space<vmem>>, vector<8x8x512xf32>,
    %c0_18 = arith.constant 0 : index
    %c0_19 = arith.constant 0 : index
    %18 = vector.load %arg13[%c0_18, %c0_19] : memref<8x128xf32, #tpu.memory_space<vmem>>, vector<8x128xf32>
    %c0_20 = arith.constant 0 : index
    %c0_21 = arith.constant 0 : index
    %19 = vector.load %arg14[%c0_20, %c0_21] : memref<8x128xf32, #tpu.memory_space<vmem>>, vector<8x128xf32>
    %c0_22 = arith.constant 0 : index
    %c0_23 = arith.constant 0 : index
    %20 = vector.load %arg15[%c0_22, %c0_23] : memref<8x128xf32, #tpu.memory_space<vmem>>, vector<8x128xf32>
    %c0_24 = arith.constant 0 : index
    %c0_25 = arith.constant 0 : index
    %21 = vector.load %arg16[%c0_24, %c0_25] : memref<8x128xf32, #tpu.memory_space<vmem>>, vector<8x128xf32>
    %c0_i32_26 = arith.constant 0 : i32
    %22 = arith.index_cast %c0_i32_26 : i32 to index
    %c0_27 = arith.constant 0 : index
    %c0_28 = arith.constant 0 : index
    %23 = vector.load %arg12[%22, %c0_27, %c0_28] : memref<8x8x512xf32, #tpu.memory_space<vmem>>, vector<1x8x512xf32>
    %24 = vector.shape_cast %23 : vector<1x8x512xf32> to vector<8x512xf32>
    %cst_29 = arith.constant dense<0.000000e+00> : vector<8x512xf32>
    %25 = tpu.matmul %18, %3, %cst_29 {dimension_numbers = #tpu.dot_dimension_numbers<[1], [0], [0], [1], [0, 0, 1, 1], [], []>} : vector<8x128xf32>, vector<128x512xf32>, vector<8x512xf32> -> vector<8x512xf32>
    %26 = arith.addf %24, %25 : vector<8x512xf32>
    %27 = vector.extract_strided_slice %26 {offsets = [0, 0], sizes = [8, 128], strides = [1, 1]} : vector<8x512xf32> to vector<8x128xf32>
    %cst_30 = arith.constant 5.000000e-01 : f32
    %28 = vector.broadcast %cst_30 : f32 to vector<8x128xf32>
    %29 = arith.mulf %28, %27 : vector<8x128xf32>
    %30 = math.tanh %29 : vector<8x128xf32>
    %cst_31 = arith.constant 5.000000e-01 : f32
    %31 = vector.broadcast %cst_31 : f32 to vector<8x128xf32>
    %32 = arith.mulf %31, %30 : vector<8x128xf32>
    %cst_32 = arith.constant 5.000000e-01 : f32
    %33 = vector.broadcast %cst_32 : f32 to vector<8x128xf32>
    %34 = arith.addf %32, %33 : vector<8x128xf32>
    %35 = vector.extract_strided_slice %26 {offsets = [0, 128], sizes = [8, 128], strides = [1, 1]} : vector<8x512xf32> to vector<8x128xf32>
    %cst_33 = arith.constant 5.000000e-01 : f32
    %36 = vector.broadcast %cst_33 : f32 to vector<8x128xf32>
    %37 = arith.mulf %36, %35 : vector<8x128xf32>
    %38 = math.tanh %37 : vector<8x128xf32>
    %cst_34 = arith.constant 5.000000e-01 : f32
    %39 = vector.broadcast %cst_34 : f32 to vector<8x128xf32>
    %40 = arith.mulf %39, %38 : vector<8x128xf32>
    %cst_35 = arith.constant 5.000000e-01 : f32
    %41 = vector.broadcast %cst_35 : f32 to vector<8x128xf32>
    %42 = arith.addf %40, %41 : vector<8x128xf32>
    %43 = vector.extract_strided_slice %26 {offsets = [0, 256], sizes = [8, 128], strides = [1, 1]} : vector<8x512xf32> to vector<8x128xf32>
    %44 = math.tanh %43 : vector<8x128xf32>
    %45 = vector.extract_strided_slice %26 {offsets = [0, 384], sizes = [8, 128], strides = [1, 1]} : vector<8x512xf32> to vector<8x128xf32>
    %cst_36 = arith.constant 5.000000e-01 : f32
    %46 = vector.broadcast %cst_36 : f32 to vector<8x128xf32>
    %47 = arith.mulf %46, %45 : vector<8x128xf32>
    %48 = math.tanh %47 : vector<8x128xf32>
    %cst_37 = arith.constant 5.000000e-01 : f32
    %49 = vector.broadcast %cst_37 : f32 to vector<8x128xf32>
    %50 = arith.mulf %49, %48 : vector<8x128xf32>
    %cst_38 = arith.constant 5.000000e-01 : f32
    %51 = vector.broadcast %cst_38 : f32 to vector<8x128xf32>
    %52 = arith.addf %50, %51 : vector<8x128xf32>
    %53 = arith.mulf %42, %19 : vector<8x128xf32>
    %54 = arith.mulf %34, %44 : vector<8x128xf32>
    %55 = arith.addf %53, %54 : vector<8x128xf32>
    %56 = math.tanh %55 : vector<8x128xf32>
    %57 = arith.mulf %52, %56 : vector<8x128xf32>
    %cst_39 = arith.constant dense<0.000000e+00> : vector<8x512xf32>
    %58 = tpu.matmul %57, %4, %cst_39 {dimension_numbers = #tpu.dot_dimension_numbers<[1], [0], [0], [1], [0, 0, 1, 1], [], []>} : vector<8x128xf32>, vector<128x512xf32>, vector<8x512xf32> -> vector<8x512xf32>
    %cst_40 = arith.constant dense<0.000000e+00> : vector<8x512xf32>
    %59 = tpu.matmul %20, %5, %cst_40 {dimension_numbers = #tpu.dot_dimension_numbers<[1], [0], [0], [1], [0, 0, 1, 1], [], []>} : vector<8x128xf32>, vector<128x512xf32>, vector<8x512xf32> -> vector<8x512xf32>
    %60 = arith.addf %58, %59 : vector<8x512xf32>
    %61 = arith.addf %60, %8 : vector<8x512xf32>
    %62 = vector.extract_strided_slice %61 {offsets = [0, 0], sizes = [8, 128], strides = [1, 1]} : vector<8x512xf32> to vector<8x128xf32>
    %cst_41 = arith.constant 5.000000e-01 : f32
    %63 = vector.broadcast %cst_41 : f32 to vector<8x128xf32>
    %64 = arith.mulf %63, %62 : vector<8x128xf32>
    %65 = math.tanh %64 : vector<8x128xf32>
    %cst_42 = arith.constant 5.000000e-01 : f32
    %66 = vector.broadcast %cst_42 : f32 to vector<8x128xf32>
    %67 = arith.mulf %66, %65 : vector<8x128xf32>
    %cst_43 = arith.constant 5.000000e-01 : f32
    %68 = vector.broadcast %cst_43 : f32 to vector<8x128xf32>
    %69 = arith.addf %67, %68 : vector<8x128xf32>
    %70 = vector.extract_strided_slice %61 {offsets = [0, 128], sizes = [8, 128], strides = [1, 1]} : vector<8x512xf32> to vector<8x128xf32>
    %cst_44 = arith.constant 5.000000e-01 : f32
    %71 = vector.broadcast %cst_44 : f32 to vector<8x128xf32>
    %72 = arith.mulf %71, %70 : vector<8x128xf32>
    %73 = math.tanh %72 : vector<8x128xf32>
    %cst_45 = arith.constant 5.000000e-01 : f32
    %74 = vector.broadcast %cst_45 : f32 to vector<8x128xf32>
    %75 = arith.mulf %74, %73 : vector<8x128xf32>
    %cst_46 = arith.constant 5.000000e-01 : f32
    %76 = vector.broadcast %cst_46 : f32 to vector<8x128xf32>
    %77 = arith.addf %75, %76 : vector<8x128xf32>
    %78 = vector.extract_strided_slice %61 {offsets = [0, 256], sizes = [8, 128], strides = [1, 1]} : vector<8x512xf32> to vector<8x128xf32>
    %79 = math.tanh %78 : vector<8x128xf32>
    %80 = vector.extract_strided_slice %61 {offsets = [0, 384], sizes = [8, 128], strides = [1, 1]} : vector<8x512xf32> to vector<8x128xf32>
    %cst_47 = arith.constant 5.000000e-01 : f32
    %81 = vector.broadcast %cst_47 : f32 to vector<8x128xf32>
    %82 = arith.mulf %81, %80 : vector<8x128xf32>
    %83 = math.tanh %82 : vector<8x128xf32>
    %cst_48 = arith.constant 5.000000e-01 : f32
    %84 = vector.broadcast %cst_48 : f32 to vector<8x128xf32>
    %85 = arith.mulf %84, %83 : vector<8x128xf32>
    %cst_49 = arith.constant 5.000000e-01 : f32
    %86 = vector.broadcast %cst_49 : f32 to vector<8x128xf32>
    %87 = arith.addf %85, %86 : vector<8x128xf32>
    %88 = arith.mulf %77, %21 : vector<8x128xf32>
    %89 = arith.mulf %69, %79 : vector<8x128xf32>
    %90 = arith.addf %88, %89 : vector<8x128xf32>
    %91 = math.tanh %90 : vector<8x128xf32>
    %92 = arith.mulf %87, %91 : vector<8x128xf32>
    %c1_i32 = arith.constant 1 : i32
    %93 = arith.index_cast %c1_i32 : i32 to index
    %c0_50 = arith.constant 0 : index
    %c0_51 = arith.constant 0 : index
    %94 = vector.load %arg12[%93, %c0_50, %c0_51] : memref<8x8x512xf32, #tpu.memory_space<vmem>>, vector<1x8x512xf32>
    %95 = vector.shape_cast %94 : vector<1x8x512xf32> to vector<8x512xf32>
    %cst_52 = arith.constant dense<0.000000e+00> : vector<8x512xf32>
    %96 = tpu.matmul %57, %3, %cst_52 {dimension_numbers = #tpu.dot_dimension_numbers<[1], [0], [0], [1], [0, 0, 1, 1], [], []>} : vector<8x128xf32>, vector<128x512xf32>, vector<8x512xf32> -> vector<8x512xf32>
    %97 = arith.addf %95, %96 : vector<8x512xf32>
    %98 = vector.extract_strided_slice %97 {offsets = [0, 0], sizes = [8, 128], strides = [1, 1]} : vector<8x512xf32> to vector<8x128xf32>
    %cst_53 = arith.constant 5.000000e-01 : f32
    %99 = vector.broadcast %cst_53 : f32 to vector<8x128xf32>
    %100 = arith.mulf %99, %98 : vector<8x128xf32>
    %101 = math.tanh %100 : vector<8x128xf32>
    %cst_54 = arith.constant 5.000000e-01 : f32
    %102 = vector.broadcast %cst_54 : f32 to vector<8x128xf32>
    %103 = arith.mulf %102, %101 : vector<8x128xf32>
    %cst_55 = arith.constant 5.000000e-01 : f32
    %104 = vector.broadcast %cst_55 : f32 to vector<8x128xf32>
    %105 = arith.addf %103, %104 : vector<8x128xf32>
    %106 = vector.extract_strided_slice %97 {offsets = [0, 128], sizes = [8, 128], strides = [1, 1]} : vector<8x512xf32> to vector<8x128xf32>
    %cst_56 = arith.constant 5.000000e-01 : f32
    %107 = vector.broadcast %cst_56 : f32 to vector<8x128xf32>
    %108 = arith.mulf %107, %106 : vector<8x128xf32>
    %109 = math.tanh %108 : vector<8x128xf32>
    %cst_57 = arith.constant 5.000000e-01 : f32
    %110 = vector.broadcast %cst_57 : f32 to vector<8x128xf32>
    %111 = arith.mulf %110, %109 : vector<8x128xf32>
    %cst_58 = arith.constant 5.000000e-01 : f32
    %112 = vector.broadcast %cst_58 : f32 to vector<8x128xf32>
    %113 = arith.addf %111, %112 : vector<8x128xf32>
    %114 = vector.extract_strided_slice %97 {offsets = [0, 256], sizes = [8, 128], strides = [1, 1]} : vector<8x512xf32> to vector<8x128xf32>
    %115 = math.tanh %114 : vector<8x128xf32>
    %116 = vector.extract_strided_slice %97 {offsets = [0, 384], sizes = [8, 128], strides = [1, 1]} : vector<8x512xf32> to vector<8x128xf32>
    %cst_59 = arith.constant 5.000000e-01 : f32
    %117 = vector.broadcast %cst_59 : f32 to vector<8x128xf32>
    %118 = arith.mulf %117, %116 : vector<8x128xf32>
    %119 = math.tanh %118 : vector<8x128xf32>
    %cst_60 = arith.constant 5.000000e-01 : f32
    %120 = vector.broadcast %cst_60 : f32 to vector<8x128xf32>
    %121 = arith.mulf %120, %119 : vector<8x128xf32>
    %cst_61 = arith.constant 5.000000e-01 : f32
    %122 = vector.broadcast %cst_61 : f32 to vector<8x128xf32>
    %123 = arith.addf %121, %122 : vector<8x128xf32>
    %124 = arith.mulf %113, %55 : vector<8x128xf32>
    %125 = arith.mulf %105, %115 : vector<8x128xf32>
    %126 = arith.addf %124, %125 : vector<8x128xf32>
    %127 = math.tanh %126 : vector<8x128xf32>
    %128 = arith.mulf %123, %127 : vector<8x128xf32>
    %cst_62 = arith.constant dense<0.000000e+00> : vector<8x512xf32>
    %129 = tpu.matmul %128, %4, %cst_62 {dimension_numbers = #tpu.dot_dimension_numbers<[1], [0], [0], [1], [0, 0, 1, 1], [], []>} : vector<8x128xf32>, vector<128x512xf32>, vector<8x512xf32> -> vector<8x512xf32>
    %cst_63 = arith.constant dense<0.000000e+00> : vector<8x512xf32>
    %130 = tpu.matmul %92, %5, %cst_63 {dimension_numbers = #tpu.dot_dimension_numbers<[1], [0], [0], [1], [0, 0, 1, 1], [], []>} : vector<8x128xf32>, vector<128x512xf32>, vector<8x512xf32> -> vector<8x512xf32>
    %131 = arith.addf %129, %130 : vector<8x512xf32>
    %132 = arith.addf %131, %8 : vector<8x512xf32>
    %133 = vector.extract_strided_slice %132 {offsets = [0, 0], sizes = [8, 128], strides = [1, 1]} : vector<8x512xf32> to vector<8x128xf32>
    %cst_64 = arith.constant 5.000000e-01 : f32
    %134 = vector.broadcast %cst_64 : f32 to vector<8x128xf32>
    %135 = arith.mulf %134, %133 : vector<8x128xf32>
    %136 = math.tanh %135 : vector<8x128xf32>
    %cst_65 = arith.constant 5.000000e-01 : f32
    %137 = vector.broadcast %cst_65 : f32 to vector<8x128xf32>
    %138 = arith.mulf %137, %136 : vector<8x128xf32>
    %cst_66 = arith.constant 5.000000e-01 : f32
    %139 = vector.broadcast %cst_66 : f32 to vector<8x128xf32>
    %140 = arith.addf %138, %139 : vector<8x128xf32>
    %141 = vector.extract_strided_slice %132 {offsets = [0, 128], sizes = [8, 128], strides = [1, 1]} : vector<8x512xf32> to vector<8x128xf32>
    %cst_67 = arith.constant 5.000000e-01 : f32
    %142 = vector.broadcast %cst_67 : f32 to vector<8x128xf32>
    %143 = arith.mulf %142, %141 : vector<8x128xf32>
    %144 = math.tanh %143 : vector<8x128xf32>
    %cst_68 = arith.constant 5.000000e-01 : f32
    %145 = vector.broadcast %cst_68 : f32 to vector<8x128xf32>
    %146 = arith.mulf %145, %144 : vector<8x128xf32>
    %cst_69 = arith.constant 5.000000e-01 : f32
    %147 = vector.broadcast %cst_69 : f32 to vector<8x128xf32>
    %148 = arith.addf %146, %147 : vector<8x128xf32>
    %149 = vector.extract_strided_slice %132 {offsets = [0, 256], sizes = [8, 128], strides = [1, 1]} : vector<8x512xf32> to vector<8x128xf32>
    %150 = math.tanh %149 : vector<8x128xf32>
    %151 = vector.extract_strided_slice %132 {offsets = [0, 384], sizes = [8, 128], strides = [1, 1]} : vector<8x512xf32> to vector<8x128xf32>
    %cst_70 = arith.constant 5.000000e-01 : f32
    %152 = vector.broadcast %cst_70 : f32 to vector<8x128xf32>
    %153 = arith.mulf %152, %151 : vector<8x128xf32>
    %154 = math.tanh %153 : vector<8x128xf32>
    %cst_71 = arith.constant 5.000000e-01 : f32
    %155 = vector.broadcast %cst_71 : f32 to vector<8x128xf32>
    %156 = arith.mulf %155, %154 : vector<8x128xf32>
    %cst_72 = arith.constant 5.000000e-01 : f32
    %157 = vector.broadcast %cst_72 : f32 to vector<8x128xf32>
    %158 = arith.addf %156, %157 : vector<8x128xf32>
    %159 = arith.mulf %148, %90 : vector<8x128xf32>
    %160 = arith.mulf %140, %150 : vector<8x128xf32>
    %161 = arith.addf %159, %160 : vector<8x128xf32>
    %162 = math.tanh %161 : vector<8x128xf32>
    %163 = arith.mulf %158, %162 : vector<8x128xf32>
    %c2_i32 = arith.constant 2 : i32
    %164 = arith.index_cast %c2_i32 : i32 to index
    %c0_73 = arith.constant 0 : index
    %c0_74 = arith.constant 0 : index
    %165 = vector.load %arg12[%164, %c0_73, %c0_74] : memref<8x8x512xf32, #tpu.memory_space<vmem>>, vector<1x8x512xf32>
    %166 = vector.shape_cast %165 : vector<1x8x512xf32> to vector<8x512xf32>
    %cst_75 = arith.constant dense<0.000000e+00> : vector<8x512xf32>
    %167 = tpu.matmul %128, %3, %cst_75 {dimension_numbers = #tpu.dot_dimension_numbers<[1], [0], [0], [1], [0, 0, 1, 1], [], []>} : vector<8x128xf32>, vector<128x512xf32>, vector<8x512xf32> -> vector<8x512xf32>
    %168 = arith.addf %166, %167 : vector<8x512xf32>
    %169 = vector.extract_strided_slice %168 {offsets = [0, 0], sizes = [8, 128], strides = [1, 1]} : vector<8x512xf32> to vector<8x128xf32>
    %cst_76 = arith.constant 5.000000e-01 : f32
    %170 = vector.broadcast %cst_76 : f32 to vector<8x128xf32>
    %171 = arith.mulf %170, %169 : vector<8x128xf32>
    %172 = math.tanh %171 : vector<8x128xf32>
    %cst_77 = arith.constant 5.000000e-01 : f32
    %173 = vector.broadcast %cst_77 : f32 to vector<8x128xf32>
    %174 = arith.mulf %173, %172 : vector<8x128xf32>
    %cst_78 = arith.constant 5.000000e-01 : f32
    %175 = vector.broadcast %cst_78 : f32 to vector<8x128xf32>
    %176 = arith.addf %174, %175 : vector<8x128xf32>
    %177 = vector.extract_strided_slice %168 {offsets = [0, 128], sizes = [8, 128], strides = [1, 1]} : vector<8x512xf32> to vector<8x128xf32>
    %cst_79 = arith.constant 5.000000e-01 : f32
    %178 = vector.broadcast %cst_79 : f32 to vector<8x128xf32>
    %179 = arith.mulf %178, %177 : vector<8x128xf32>
    %180 = math.tanh %179 : vector<8x128xf32>
    %cst_80 = arith.constant 5.000000e-01 : f32
    %181 = vector.broadcast %cst_80 : f32 to vector<8x128xf32>
    %182 = arith.mulf %181, %180 : vector<8x128xf32>
    %cst_81 = arith.constant 5.000000e-01 : f32
    %183 = vector.broadcast %cst_81 : f32 to vector<8x128xf32>
    %184 = arith.addf %182, %183 : vector<8x128xf32>
    %185 = vector.extract_strided_slice %168 {offsets = [0, 256], sizes = [8, 128], strides = [1, 1]} : vector<8x512xf32> to vector<8x128xf32>
    %186 = math.tanh %185 : vector<8x128xf32>
    %187 = vector.extract_strided_slice %168 {offsets = [0, 384], sizes = [8, 128], strides = [1, 1]} : vector<8x512xf32> to vector<8x128xf32>
    %cst_82 = arith.constant 5.000000e-01 : f32
    %188 = vector.broadcast %cst_82 : f32 to vector<8x128xf32>
    %189 = arith.mulf %188, %187 : vector<8x128xf32>
    %190 = math.tanh %189 : vector<8x128xf32>
    %cst_83 = arith.constant 5.000000e-01 : f32
    %191 = vector.broadcast %cst_83 : f32 to vector<8x128xf32>
    %192 = arith.mulf %191, %190 : vector<8x128xf32>
    %cst_84 = arith.constant 5.000000e-01 : f32
    %193 = vector.broadcast %cst_84 : f32 to vector<8x128xf32>
    %194 = arith.addf %192, %193 : vector<8x128xf32>
    %195 = arith.mulf %184, %126 : vector<8x128xf32>
    %196 = arith.mulf %176, %186 : vector<8x128xf32>
    %197 = arith.addf %195, %196 : vector<8x128xf32>
    %198 = math.tanh %197 : vector<8x128xf32>
    %199 = arith.mulf %194, %198 : vector<8x128xf32>
    %cst_85 = arith.constant dense<0.000000e+00> : vector<8x512xf32>
    %200 = tpu.matmul %199, %4, %cst_85 {dimension_numbers = #tpu.dot_dimension_numbers<[1], [0], [0], [1], [0, 0, 1, 1], [], []>} : vector<8x128xf32>, vector<128x512xf32>, vector<8x512xf32> -> vector<8x512xf32>
    %cst_86 = arith.constant dense<0.000000e+00> : vector<8x512xf32>
    %201 = tpu.matmul %163, %5, %cst_86 {dimension_numbers = #tpu.dot_dimension_numbers<[1], [0], [0], [1], [0, 0, 1, 1], [], []>} : vector<8x128xf32>, vector<128x512xf32>, vector<8x512xf32> -> vector<8x512xf32>
    %202 = arith.addf %200, %201 : vector<8x512xf32>
    %203 = arith.addf %202, %8 : vector<8x512xf32>
    %204 = vector.extract_strided_slice %203 {offsets = [0, 0], sizes = [8, 128], strides = [1, 1]} : vector<8x512xf32> to vector<8x128xf32>
    %cst_87 = arith.constant 5.000000e-01 : f32
    %205 = vector.broadcast %cst_87 : f32 to vector<8x128xf32>
    %206 = arith.mulf %205, %204 : vector<8x128xf32>
    %207 = math.tanh %206 : vector<8x128xf32>
    %cst_88 = arith.constant 5.000000e-01 : f32
    %208 = vector.broadcast %cst_88 : f32 to vector<8x128xf32>
    %209 = arith.mulf %208, %207 : vector<8x128xf32>
    %cst_89 = arith.constant 5.000000e-01 : f32
    %210 = vector.broadcast %cst_89 : f32 to vector<8x128xf32>
    %211 = arith.addf %209, %210 : vector<8x128xf32>
    %212 = vector.extract_strided_slice %203 {offsets = [0, 128], sizes = [8, 128], strides = [1, 1]} : vector<8x512xf32> to vector<8x128xf32>
    %cst_90 = arith.constant 5.000000e-01 : f32
    %213 = vector.broadcast %cst_90 : f32 to vector<8x128xf32>
    %214 = arith.mulf %213, %212 : vector<8x128xf32>
    %215 = math.tanh %214 : vector<8x128xf32>
    %cst_91 = arith.constant 5.000000e-01 : f32
    %216 = vector.broadcast %cst_91 : f32 to vector<8x128xf32>
    %217 = arith.mulf %216, %215 : vector<8x128xf32>
    %cst_92 = arith.constant 5.000000e-01 : f32
    %218 = vector.broadcast %cst_92 : f32 to vector<8x128xf32>
    %219 = arith.addf %217, %218 : vector<8x128xf32>
    %220 = vector.extract_strided_slice %203 {offsets = [0, 256], sizes = [8, 128], strides = [1, 1]} : vector<8x512xf32> to vector<8x128xf32>
    %221 = math.tanh %220 : vector<8x128xf32>
    %222 = vector.extract_strided_slice %203 {offsets = [0, 384], sizes = [8, 128], strides = [1, 1]} : vector<8x512xf32> to vector<8x128xf32>
    %cst_93 = arith.constant 5.000000e-01 : f32
    %223 = vector.broadcast %cst_93 : f32 to vector<8x128xf32>
    %224 = arith.mulf %223, %222 : vector<8x128xf32>
    %225 = math.tanh %224 : vector<8x128xf32>
    %cst_94 = arith.constant 5.000000e-01 : f32
    %226 = vector.broadcast %cst_94 : f32 to vector<8x128xf32>
    %227 = arith.mulf %226, %225 : vector<8x128xf32>
    %cst_95 = arith.constant 5.000000e-01 : f32
    %228 = vector.broadcast %cst_95 : f32 to vector<8x128xf32>
    %229 = arith.addf %227, %228 : vector<8x128xf32>
    %230 = arith.mulf %219, %161 : vector<8x128xf32>
    %231 = arith.mulf %211, %221 : vector<8x128xf32>
    %232 = arith.addf %230, %231 : vector<8x128xf32>
    %233 = math.tanh %232 : vector<8x128xf32>
    %234 = arith.mulf %229, %233 : vector<8x128xf32>
    %c3_i32 = arith.constant 3 : i32
    %235 = arith.index_cast %c3_i32 : i32 to index
    %c0_96 = arith.constant 0 : index
    %c0_97 = arith.constant 0 : index
    %236 = vector.load %arg12[%235, %c0_96, %c0_97] : memref<8x8x512xf32, #tpu.memory_space<vmem>>, vector<1x8x512xf32>
    %237 = vector.shape_cast %236 : vector<1x8x512xf32> to vector<8x512xf32>
    %cst_98 = arith.constant dense<0.000000e+00> : vector<8x512xf32>
    %238 = tpu.matmul %199, %3, %cst_98 {dimension_numbers = #tpu.dot_dimension_numbers<[1], [0], [0], [1], [0, 0, 1, 1], [], []>} : vector<8x128xf32>, vector<128x512xf32>, vector<8x512xf32> -> vector<8x512xf32>
    %239 = arith.addf %237, %238 : vector<8x512xf32>
    %240 = vector.extract_strided_slice %239 {offsets = [0, 0], sizes = [8, 128], strides = [1, 1]} : vector<8x512xf32> to vector<8x128xf32>
    %cst_99 = arith.constant 5.000000e-01 : f32
    %241 = vector.broadcast %cst_99 : f32 to vector<8x128xf32>
    %242 = arith.mulf %241, %240 : vector<8x128xf32>
    %243 = math.tanh %242 : vector<8x128xf32>
    %cst_100 = arith.constant 5.000000e-01 : f32
    %244 = vector.broadcast %cst_100 : f32 to vector<8x128xf32>
    %245 = arith.mulf %244, %243 : vector<8x128xf32>
    %cst_101 = arith.constant 5.000000e-01 : f32
    %246 = vector.broadcast %cst_101 : f32 to vector<8x128xf32>
    %247 = arith.addf %245, %246 : vector<8x128xf32>
    %248 = vector.extract_strided_slice %239 {offsets = [0, 128], sizes = [8, 128], strides = [1, 1]} : vector<8x512xf32> to vector<8x128xf32>
    %cst_102 = arith.constant 5.000000e-01 : f32
    %249 = vector.broadcast %cst_102 : f32 to vector<8x128xf32>
    %250 = arith.mulf %249, %248 : vector<8x128xf32>
    %251 = math.tanh %250 : vector<8x128xf32>
    %cst_103 = arith.constant 5.000000e-01 : f32
    %252 = vector.broadcast %cst_103 : f32 to vector<8x128xf32>
    %253 = arith.mulf %252, %251 : vector<8x128xf32>
    %cst_104 = arith.constant 5.000000e-01 : f32
    %254 = vector.broadcast %cst_104 : f32 to vector<8x128xf32>
    %255 = arith.addf %253, %254 : vector<8x128xf32>
    %256 = vector.extract_strided_slice %239 {offsets = [0, 256], sizes = [8, 128], strides = [1, 1]} : vector<8x512xf32> to vector<8x128xf32>
    %257 = math.tanh %256 : vector<8x128xf32>
    %258 = vector.extract_strided_slice %239 {offsets = [0, 384], sizes = [8, 128], strides = [1, 1]} : vector<8x512xf32> to vector<8x128xf32>
    %cst_105 = arith.constant 5.000000e-01 : f32
    %259 = vector.broadcast %cst_105 : f32 to vector<8x128xf32>
    %260 = arith.mulf %259, %258 : vector<8x128xf32>
    %261 = math.tanh %260 : vector<8x128xf32>
    %cst_106 = arith.constant 5.000000e-01 : f32
    %262 = vector.broadcast %cst_106 : f32 to vector<8x128xf32>
    %263 = arith.mulf %262, %261 : vector<8x128xf32>
    %cst_107 = arith.constant 5.000000e-01 : f32
    %264 = vector.broadcast %cst_107 : f32 to vector<8x128xf32>
    %265 = arith.addf %263, %264 : vector<8x128xf32>
    %266 = arith.mulf %255, %197 : vector<8x128xf32>
    %267 = arith.mulf %247, %257 : vector<8x128xf32>
    %268 = arith.addf %266, %267 : vector<8x128xf32>
    %269 = math.tanh %268 : vector<8x128xf32>
    %270 = arith.mulf %265, %269 : vector<8x128xf32>
    %cst_108 = arith.constant dense<0.000000e+00> : vector<8x512xf32>
    %271 = tpu.matmul %270, %4, %cst_108 {dimension_numbers = #tpu.dot_dimension_numbers<[1], [0], [0], [1], [0, 0, 1, 1], [], []>} : vector<8x128xf32>, vector<128x512xf32>, vector<8x512xf32> -> vector<8x512xf32>
    %cst_109 = arith.constant dense<0.000000e+00> : vector<8x512xf32>
    %272 = tpu.matmul %234, %5, %cst_109 {dimension_numbers = #tpu.dot_dimension_numbers<[1], [0], [0], [1], [0, 0, 1, 1], [], []>} : vector<8x128xf32>, vector<128x512xf32>, vector<8x512xf32> -> vector<8x512xf32>
    %273 = arith.addf %271, %272 : vector<8x512xf32>
    %274 = arith.addf %273, %8 : vector<8x512xf32>
    %275 = vector.extract_strided_slice %274 {offsets = [0, 0], sizes = [8, 128], strides = [1, 1]} : vector<8x512xf32> to vector<8x128xf32>
    %cst_110 = arith.constant 5.000000e-01 : f32
    %276 = vector.broadcast %cst_110 : f32 to vector<8x128xf32>
    %277 = arith.mulf %276, %275 : vector<8x128xf32>
    %278 = math.tanh %277 : vector<8x128xf32>
    %cst_111 = arith.constant 5.000000e-01 : f32
    %279 = vector.broadcast %cst_111 : f32 to vector<8x128xf32>
    %280 = arith.mulf %279, %278 : vector<8x128xf32>
    %cst_112 = arith.constant 5.000000e-01 : f32
    %281 = vector.broadcast %cst_112 : f32 to vector<8x128xf32>
    %282 = arith.addf %280, %281 : vector<8x128xf32>
    %283 = vector.extract_strided_slice %274 {offsets = [0, 128], sizes = [8, 128], strides = [1, 1]} : vector<8x512xf32> to vector<8x128xf32>
    %cst_113 = arith.constant 5.000000e-01 : f32
    %284 = vector.broadcast %cst_113 : f32 to vector<8x128xf32>
    %285 = arith.mulf %284, %283 : vector<8x128xf32>
    %286 = math.tanh %285 : vector<8x128xf32>
    %cst_114 = arith.constant 5.000000e-01 : f32
    %287 = vector.broadcast %cst_114 : f32 to vector<8x128xf32>
    %288 = arith.mulf %287, %286 : vector<8x128xf32>
    %cst_115 = arith.constant 5.000000e-01 : f32
    %289 = vector.broadcast %cst_115 : f32 to vector<8x128xf32>
    %290 = arith.addf %288, %289 : vector<8x128xf32>
    %291 = vector.extract_strided_slice %274 {offsets = [0, 256], sizes = [8, 128], strides = [1, 1]} : vector<8x512xf32> to vector<8x128xf32>
    %292 = math.tanh %291 : vector<8x128xf32>
    %293 = vector.extract_strided_slice %274 {offsets = [0, 384], sizes = [8, 128], strides = [1, 1]} : vector<8x512xf32> to vector<8x128xf32>
    %cst_116 = arith.constant 5.000000e-01 : f32
    %294 = vector.broadcast %cst_116 : f32 to vector<8x128xf32>
    %295 = arith.mulf %294, %293 : vector<8x128xf32>
    %296 = math.tanh %295 : vector<8x128xf32>
    %cst_117 = arith.constant 5.000000e-01 : f32
    %297 = vector.broadcast %cst_117 : f32 to vector<8x128xf32>
    %298 = arith.mulf %297, %296 : vector<8x128xf32>
    %cst_118 = arith.constant 5.000000e-01 : f32
    %299 = vector.broadcast %cst_118 : f32 to vector<8x128xf32>
    %300 = arith.addf %298, %299 : vector<8x128xf32>
    %301 = arith.mulf %290, %232 : vector<8x128xf32>
    %302 = arith.mulf %282, %292 : vector<8x128xf32>
    %303 = arith.addf %301, %302 : vector<8x128xf32>
    %304 = math.tanh %303 : vector<8x128xf32>
    %305 = arith.mulf %300, %304 : vector<8x128xf32>
    %c4_i32 = arith.constant 4 : i32
    %306 = arith.index_cast %c4_i32 : i32 to index
    %c0_119 = arith.constant 0 : index
    %c0_120 = arith.constant 0 : index
    %307 = vector.load %arg12[%306, %c0_119, %c0_120] : memref<8x8x512xf32, #tpu.memory_space<vmem>>, vector<1x8x512xf32>
    %308 = vector.shape_cast %307 : vector<1x8x512xf32> to vector<8x512xf32>
    %cst_121 = arith.constant dense<0.000000e+00> : vector<8x512xf32>
    %309 = tpu.matmul %270, %3, %cst_121 {dimension_numbers = #tpu.dot_dimension_numbers<[1], [0], [0], [1], [0, 0, 1, 1], [], []>} : vector<8x128xf32>, vector<128x512xf32>, vector<8x512xf32> -> vector<8x512xf32>
    %310 = arith.addf %308, %309 : vector<8x512xf32>
    %311 = vector.extract_strided_slice %310 {offsets = [0, 0], sizes = [8, 128], strides = [1, 1]} : vector<8x512xf32> to vector<8x128xf32>
    %cst_122 = arith.constant 5.000000e-01 : f32
    %312 = vector.broadcast %cst_122 : f32 to vector<8x128xf32>
    %313 = arith.mulf %312, %311 : vector<8x128xf32>
    %314 = math.tanh %313 : vector<8x128xf32>
    %cst_123 = arith.constant 5.000000e-01 : f32
    %315 = vector.broadcast %cst_123 : f32 to vector<8x128xf32>
    %316 = arith.mulf %315, %314 : vector<8x128xf32>
    %cst_124 = arith.constant 5.000000e-01 : f32
    %317 = vector.broadcast %cst_124 : f32 to vector<8x128xf32>
    %318 = arith.addf %316, %317 : vector<8x128xf32>
    %319 = vector.extract_strided_slice %310 {offsets = [0, 128], sizes = [8, 128], strides = [1, 1]} : vector<8x512xf32> to vector<8x128xf32>
    %cst_125 = arith.constant 5.000000e-01 : f32
    %320 = vector.broadcast %cst_125 : f32 to vector<8x128xf32>
    %321 = arith.mulf %320, %319 : vector<8x128xf32>
    %322 = math.tanh %321 : vector<8x128xf32>
    %cst_126 = arith.constant 5.000000e-01 : f32
    %323 = vector.broadcast %cst_126 : f32 to vector<8x128xf32>
    %324 = arith.mulf %323, %322 : vector<8x128xf32>
    %cst_127 = arith.constant 5.000000e-01 : f32
    %325 = vector.broadcast %cst_127 : f32 to vector<8x128xf32>
    %326 = arith.addf %324, %325 : vector<8x128xf32>
    %327 = vector.extract_strided_slice %310 {offsets = [0, 256], sizes = [8, 128], strides = [1, 1]} : vector<8x512xf32> to vector<8x128xf32>
    %328 = math.tanh %327 : vector<8x128xf32>
    %329 = vector.extract_strided_slice %310 {offsets = [0, 384], sizes = [8, 128], strides = [1, 1]} : vector<8x512xf32> to vector<8x128xf32>
    %cst_128 = arith.constant 5.000000e-01 : f32
    %330 = vector.broadcast %cst_128 : f32 to vector<8x128xf32>
    %331 = arith.mulf %330, %329 : vector<8x128xf32>
    %332 = math.tanh %331 : vector<8x128xf32>
    %cst_129 = arith.constant 5.000000e-01 : f32
    %333 = vector.broadcast %cst_129 : f32 to vector<8x128xf32>
    %334 = arith.mulf %333, %332 : vector<8x128xf32>
    %cst_130 = arith.constant 5.000000e-01 : f32
    %335 = vector.broadcast %cst_130 : f32 to vector<8x128xf32>
    %336 = arith.addf %334, %335 : vector<8x128xf32>
    %337 = arith.mulf %326, %268 : vector<8x128xf32>
    %338 = arith.mulf %318, %328 : vector<8x128xf32>
    %339 = arith.addf %337, %338 : vector<8x128xf32>
    %340 = math.tanh %339 : vector<8x128xf32>
    %341 = arith.mulf %336, %340 : vector<8x128xf32>
    %cst_131 = arith.constant dense<0.000000e+00> : vector<8x512xf32>
    %342 = tpu.matmul %341, %4, %cst_131 {dimension_numbers = #tpu.dot_dimension_numbers<[1], [0], [0], [1], [0, 0, 1, 1], [], []>} : vector<8x128xf32>, vector<128x512xf32>, vector<8x512xf32> -> vector<8x512xf32>
    %cst_132 = arith.constant dense<0.000000e+00> : vector<8x512xf32>
    %343 = tpu.matmul %305, %5, %cst_132 {dimension_numbers = #tpu.dot_dimension_numbers<[1], [0], [0], [1], [0, 0, 1, 1], [], []>} : vector<8x128xf32>, vector<128x512xf32>, vector<8x512xf32> -> vector<8x512xf32>
    %344 = arith.addf %342, %343 : vector<8x512xf32>
    %345 = arith.addf %344, %8 : vector<8x512xf32>
    %346 = vector.extract_strided_slice %345 {offsets = [0, 0], sizes = [8, 128], strides = [1, 1]} : vector<8x512xf32> to vector<8x128xf32>
    %cst_133 = arith.constant 5.000000e-01 : f32
    %347 = vector.broadcast %cst_133 : f32 to vector<8x128xf32>
    %348 = arith.mulf %347, %346 : vector<8x128xf32>
    %349 = math.tanh %348 : vector<8x128xf32>
    %cst_134 = arith.constant 5.000000e-01 : f32
    %350 = vector.broadcast %cst_134 : f32 to vector<8x128xf32>
    %351 = arith.mulf %350, %349 : vector<8x128xf32>
    %cst_135 = arith.constant 5.000000e-01 : f32
    %352 = vector.broadcast %cst_135 : f32 to vector<8x128xf32>
    %353 = arith.addf %351, %352 : vector<8x128xf32>
    %354 = vector.extract_strided_slice %345 {offsets = [0, 128], sizes = [8, 128], strides = [1, 1]} : vector<8x512xf32> to vector<8x128xf32>
    %cst_136 = arith.constant 5.000000e-01 : f32
    %355 = vector.broadcast %cst_136 : f32 to vector<8x128xf32>
    %356 = arith.mulf %355, %354 : vector<8x128xf32>
    %357 = math.tanh %356 : vector<8x128xf32>
    %cst_137 = arith.constant 5.000000e-01 : f32
    %358 = vector.broadcast %cst_137 : f32 to vector<8x128xf32>
    %359 = arith.mulf %358, %357 : vector<8x128xf32>
    %cst_138 = arith.constant 5.000000e-01 : f32
    %360 = vector.broadcast %cst_138 : f32 to vector<8x128xf32>
    %361 = arith.addf %359, %360 : vector<8x128xf32>
    %362 = vector.extract_strided_slice %345 {offsets = [0, 256], sizes = [8, 128], strides = [1, 1]} : vector<8x512xf32> to vector<8x128xf32>
    %363 = math.tanh %362 : vector<8x128xf32>
    %364 = vector.extract_strided_slice %345 {offsets = [0, 384], sizes = [8, 128], strides = [1, 1]} : vector<8x512xf32> to vector<8x128xf32>
    %cst_139 = arith.constant 5.000000e-01 : f32
    %365 = vector.broadcast %cst_139 : f32 to vector<8x128xf32>
    %366 = arith.mulf %365, %364 : vector<8x128xf32>
    %367 = math.tanh %366 : vector<8x128xf32>
    %cst_140 = arith.constant 5.000000e-01 : f32
    %368 = vector.broadcast %cst_140 : f32 to vector<8x128xf32>
    %369 = arith.mulf %368, %367 : vector<8x128xf32>
    %cst_141 = arith.constant 5.000000e-01 : f32
    %370 = vector.broadcast %cst_141 : f32 to vector<8x128xf32>
    %371 = arith.addf %369, %370 : vector<8x128xf32>
    %372 = arith.mulf %361, %303 : vector<8x128xf32>
    %373 = arith.mulf %353, %363 : vector<8x128xf32>
    %374 = arith.addf %372, %373 : vector<8x128xf32>
    %375 = math.tanh %374 : vector<8x128xf32>
    %376 = arith.mulf %371, %375 : vector<8x128xf32>
    %c5_i32 = arith.constant 5 : i32
    %377 = arith.index_cast %c5_i32 : i32 to index
    %c0_142 = arith.constant 0 : index
    %c0_143 = arith.constant 0 : index
    %378 = vector.load %arg12[%377, %c0_142, %c0_143] : memref<8x8x512xf32, #tpu.memory_space<vmem>>, vector<1x8x512xf32>
    %379 = vector.shape_cast %378 : vector<1x8x512xf32> to vector<8x512xf32>
    %cst_144 = arith.constant dense<0.000000e+00> : vector<8x512xf32>
    %380 = tpu.matmul %341, %3, %cst_144 {dimension_numbers = #tpu.dot_dimension_numbers<[1], [0], [0], [1], [0, 0, 1, 1], [], []>} : vector<8x128xf32>, vector<128x512xf32>, vector<8x512xf32> -> vector<8x512xf32>
    %381 = arith.addf %379, %380 : vector<8x512xf32>
    %382 = vector.extract_strided_slice %381 {offsets = [0, 0], sizes = [8, 128], strides = [1, 1]} : vector<8x512xf32> to vector<8x128xf32>
    %cst_145 = arith.constant 5.000000e-01 : f32
    %383 = vector.broadcast %cst_145 : f32 to vector<8x128xf32>
    %384 = arith.mulf %383, %382 : vector<8x128xf32>
    %385 = math.tanh %384 : vector<8x128xf32>
    %cst_146 = arith.constant 5.000000e-01 : f32
    %386 = vector.broadcast %cst_146 : f32 to vector<8x128xf32>
    %387 = arith.mulf %386, %385 : vector<8x128xf32>
    %cst_147 = arith.constant 5.000000e-01 : f32
    %388 = vector.broadcast %cst_147 : f32 to vector<8x128xf32>
    %389 = arith.addf %387, %388 : vector<8x128xf32>
    %390 = vector.extract_strided_slice %381 {offsets = [0, 128], sizes = [8, 128], strides = [1, 1]} : vector<8x512xf32> to vector<8x128xf32>
    %cst_148 = arith.constant 5.000000e-01 : f32
    %391 = vector.broadcast %cst_148 : f32 to vector<8x128xf32>
    %392 = arith.mulf %391, %390 : vector<8x128xf32>
    %393 = math.tanh %392 : vector<8x128xf32>
    %cst_149 = arith.constant 5.000000e-01 : f32
    %394 = vector.broadcast %cst_149 : f32 to vector<8x128xf32>
    %395 = arith.mulf %394, %393 : vector<8x128xf32>
    %cst_150 = arith.constant 5.000000e-01 : f32
    %396 = vector.broadcast %cst_150 : f32 to vector<8x128xf32>
    %397 = arith.addf %395, %396 : vector<8x128xf32>
    %398 = vector.extract_strided_slice %381 {offsets = [0, 256], sizes = [8, 128], strides = [1, 1]} : vector<8x512xf32> to vector<8x128xf32>
    %399 = math.tanh %398 : vector<8x128xf32>
    %400 = vector.extract_strided_slice %381 {offsets = [0, 384], sizes = [8, 128], strides = [1, 1]} : vector<8x512xf32> to vector<8x128xf32>
    %cst_151 = arith.constant 5.000000e-01 : f32
    %401 = vector.broadcast %cst_151 : f32 to vector<8x128xf32>
    %402 = arith.mulf %401, %400 : vector<8x128xf32>
    %403 = math.tanh %402 : vector<8x128xf32>
    %cst_152 = arith.constant 5.000000e-01 : f32
    %404 = vector.broadcast %cst_152 : f32 to vector<8x128xf32>
    %405 = arith.mulf %404, %403 : vector<8x128xf32>
    %cst_153 = arith.constant 5.000000e-01 : f32
    %406 = vector.broadcast %cst_153 : f32 to vector<8x128xf32>
    %407 = arith.addf %405, %406 : vector<8x128xf32>
    %408 = arith.mulf %397, %339 : vector<8x128xf32>
    %409 = arith.mulf %389, %399 : vector<8x128xf32>
    %410 = arith.addf %408, %409 : vector<8x128xf32>
    %411 = math.tanh %410 : vector<8x128xf32>
    %412 = arith.mulf %407, %411 : vector<8x128xf32>
    %cst_154 = arith.constant dense<0.000000e+00> : vector<8x512xf32>
    %413 = tpu.matmul %412, %4, %cst_154 {dimension_numbers = #tpu.dot_dimension_numbers<[1], [0], [0], [1], [0, 0, 1, 1], [], []>} : vector<8x128xf32>, vector<128x512xf32>, vector<8x512xf32> -> vector<8x512xf32>
    %cst_155 = arith.constant dense<0.000000e+00> : vector<8x512xf32>
    %414 = tpu.matmul %376, %5, %cst_155 {dimension_numbers = #tpu.dot_dimension_numbers<[1], [0], [0], [1], [0, 0, 1, 1], [], []>} : vector<8x128xf32>, vector<128x512xf32>, vector<8x512xf32> -> vector<8x512xf32>
    %415 = arith.addf %413, %414 : vector<8x512xf32>
    %416 = arith.addf %415, %8 : vector<8x512xf32>
    %417 = vector.extract_strided_slice %416 {offsets = [0, 0], sizes = [8, 128], strides = [1, 1]} : vector<8x512xf32> to vector<8x128xf32>
    %cst_156 = arith.constant 5.000000e-01 : f32
    %418 = vector.broadcast %cst_156 : f32 to vector<8x128xf32>
    %419 = arith.mulf %418, %417 : vector<8x128xf32>
    %420 = math.tanh %419 : vector<8x128xf32>
    %cst_157 = arith.constant 5.000000e-01 : f32
    %421 = vector.broadcast %cst_157 : f32 to vector<8x128xf32>
    %422 = arith.mulf %421, %420 : vector<8x128xf32>
    %cst_158 = arith.constant 5.000000e-01 : f32
    %423 = vector.broadcast %cst_158 : f32 to vector<8x128xf32>
    %424 = arith.addf %422, %423 : vector<8x128xf32>
    %425 = vector.extract_strided_slice %416 {offsets = [0, 128], sizes = [8, 128], strides = [1, 1]} : vector<8x512xf32> to vector<8x128xf32>
    %cst_159 = arith.constant 5.000000e-01 : f32
    %426 = vector.broadcast %cst_159 : f32 to vector<8x128xf32>
    %427 = arith.mulf %426, %425 : vector<8x128xf32>
    %428 = math.tanh %427 : vector<8x128xf32>
    %cst_160 = arith.constant 5.000000e-01 : f32
    %429 = vector.broadcast %cst_160 : f32 to vector<8x128xf32>
    %430 = arith.mulf %429, %428 : vector<8x128xf32>
    %cst_161 = arith.constant 5.000000e-01 : f32
    %431 = vector.broadcast %cst_161 : f32 to vector<8x128xf32>
    %432 = arith.addf %430, %431 : vector<8x128xf32>
    %433 = vector.extract_strided_slice %416 {offsets = [0, 256], sizes = [8, 128], strides = [1, 1]} : vector<8x512xf32> to vector<8x128xf32>
    %434 = math.tanh %433 : vector<8x128xf32>
    %435 = vector.extract_strided_slice %416 {offsets = [0, 384], sizes = [8, 128], strides = [1, 1]} : vector<8x512xf32> to vector<8x128xf32>
    %cst_162 = arith.constant 5.000000e-01 : f32
    %436 = vector.broadcast %cst_162 : f32 to vector<8x128xf32>
    %437 = arith.mulf %436, %435 : vector<8x128xf32>
    %438 = math.tanh %437 : vector<8x128xf32>
    %cst_163 = arith.constant 5.000000e-01 : f32
    %439 = vector.broadcast %cst_163 : f32 to vector<8x128xf32>
    %440 = arith.mulf %439, %438 : vector<8x128xf32>
    %cst_164 = arith.constant 5.000000e-01 : f32
    %441 = vector.broadcast %cst_164 : f32 to vector<8x128xf32>
    %442 = arith.addf %440, %441 : vector<8x128xf32>
    %443 = arith.mulf %432, %374 : vector<8x128xf32>
    %444 = arith.mulf %424, %434 : vector<8x128xf32>
    %445 = arith.addf %443, %444 : vector<8x128xf32>
    %446 = math.tanh %445 : vector<8x128xf32>
    %447 = arith.mulf %442, %446 : vector<8x128xf32>
    %c6_i32 = arith.constant 6 : i32
    %448 = arith.index_cast %c6_i32 : i32 to index
    %c0_165 = arith.constant 0 : index
    %c0_166 = arith.constant 0 : index
    %449 = vector.load %arg12[%448, %c0_165, %c0_166] : memref<8x8x512xf32, #tpu.memory_space<vmem>>, vector<1x8x512xf32>
    %450 = vector.shape_cast %449 : vector<1x8x512xf32> to vector<8x512xf32>
    %cst_167 = arith.constant dense<0.000000e+00> : vector<8x512xf32>
    %451 = tpu.matmul %412, %3, %cst_167 {dimension_numbers = #tpu.dot_dimension_numbers<[1], [0], [0], [1], [0, 0, 1, 1], [], []>} : vector<8x128xf32>, vector<128x512xf32>, vector<8x512xf32> -> vector<8x512xf32>
    %452 = arith.addf %450, %451 : vector<8x512xf32>
    %453 = vector.extract_strided_slice %452 {offsets = [0, 0], sizes = [8, 128], strides = [1, 1]} : vector<8x512xf32> to vector<8x128xf32>
    %cst_168 = arith.constant 5.000000e-01 : f32
    %454 = vector.broadcast %cst_168 : f32 to vector<8x128xf32>
    %455 = arith.mulf %454, %453 : vector<8x128xf32>
    %456 = math.tanh %455 : vector<8x128xf32>
    %cst_169 = arith.constant 5.000000e-01 : f32
    %457 = vector.broadcast %cst_169 : f32 to vector<8x128xf32>
    %458 = arith.mulf %457, %456 : vector<8x128xf32>
    %cst_170 = arith.constant 5.000000e-01 : f32
    %459 = vector.broadcast %cst_170 : f32 to vector<8x128xf32>
    %460 = arith.addf %458, %459 : vector<8x128xf32>
    %461 = vector.extract_strided_slice %452 {offsets = [0, 128], sizes = [8, 128], strides = [1, 1]} : vector<8x512xf32> to vector<8x128xf32>
    %cst_171 = arith.constant 5.000000e-01 : f32
    %462 = vector.broadcast %cst_171 : f32 to vector<8x128xf32>
    %463 = arith.mulf %462, %461 : vector<8x128xf32>
    %464 = math.tanh %463 : vector<8x128xf32>
    %cst_172 = arith.constant 5.000000e-01 : f32
    %465 = vector.broadcast %cst_172 : f32 to vector<8x128xf32>
    %466 = arith.mulf %465, %464 : vector<8x128xf32>
    %cst_173 = arith.constant 5.000000e-01 : f32
    %467 = vector.broadcast %cst_173 : f32 to vector<8x128xf32>
    %468 = arith.addf %466, %467 : vector<8x128xf32>
    %469 = vector.extract_strided_slice %452 {offsets = [0, 256], sizes = [8, 128], strides = [1, 1]} : vector<8x512xf32> to vector<8x128xf32>
    %470 = math.tanh %469 : vector<8x128xf32>
    %471 = vector.extract_strided_slice %452 {offsets = [0, 384], sizes = [8, 128], strides = [1, 1]} : vector<8x512xf32> to vector<8x128xf32>
    %cst_174 = arith.constant 5.000000e-01 : f32
    %472 = vector.broadcast %cst_174 : f32 to vector<8x128xf32>
    %473 = arith.mulf %472, %471 : vector<8x128xf32>
    %474 = math.tanh %473 : vector<8x128xf32>
    %cst_175 = arith.constant 5.000000e-01 : f32
    %475 = vector.broadcast %cst_175 : f32 to vector<8x128xf32>
    %476 = arith.mulf %475, %474 : vector<8x128xf32>
    %cst_176 = arith.constant 5.000000e-01 : f32
    %477 = vector.broadcast %cst_176 : f32 to vector<8x128xf32>
    %478 = arith.addf %476, %477 : vector<8x128xf32>
    %479 = arith.mulf %468, %410 : vector<8x128xf32>
    %480 = arith.mulf %460, %470 : vector<8x128xf32>
    %481 = arith.addf %479, %480 : vector<8x128xf32>
    %482 = math.tanh %481 : vector<8x128xf32>
    %483 = arith.mulf %478, %482 : vector<8x128xf32>
    %cst_177 = arith.constant dense<0.000000e+00> : vector<8x512xf32>
    %484 = tpu.matmul %483, %4, %cst_177 {dimension_numbers = #tpu.dot_dimension_numbers<[1], [0], [0], [1], [0, 0, 1, 1], [], []>} : vector<8x128xf32>, vector<128x512xf32>, vector<8x512xf32> -> vector<8x512xf32>
    %cst_178 = arith.constant dense<0.000000e+00> : vector<8x512xf32>
    %485 = tpu.matmul %447, %5, %cst_178 {dimension_numbers = #tpu.dot_dimension_numbers<[1], [0], [0], [1], [0, 0, 1, 1], [], []>} : vector<8x128xf32>, vector<128x512xf32>, vector<8x512xf32> -> vector<8x512xf32>
    %486 = arith.addf %484, %485 : vector<8x512xf32>
    %487 = arith.addf %486, %8 : vector<8x512xf32>
    %488 = vector.extract_strided_slice %487 {offsets = [0, 0], sizes = [8, 128], strides = [1, 1]} : vector<8x512xf32> to vector<8x128xf32>
    %cst_179 = arith.constant 5.000000e-01 : f32
    %489 = vector.broadcast %cst_179 : f32 to vector<8x128xf32>
    %490 = arith.mulf %489, %488 : vector<8x128xf32>
    %491 = math.tanh %490 : vector<8x128xf32>
    %cst_180 = arith.constant 5.000000e-01 : f32
    %492 = vector.broadcast %cst_180 : f32 to vector<8x128xf32>
    %493 = arith.mulf %492, %491 : vector<8x128xf32>
    %cst_181 = arith.constant 5.000000e-01 : f32
    %494 = vector.broadcast %cst_181 : f32 to vector<8x128xf32>
    %495 = arith.addf %493, %494 : vector<8x128xf32>
    %496 = vector.extract_strided_slice %487 {offsets = [0, 128], sizes = [8, 128], strides = [1, 1]} : vector<8x512xf32> to vector<8x128xf32>
    %cst_182 = arith.constant 5.000000e-01 : f32
    %497 = vector.broadcast %cst_182 : f32 to vector<8x128xf32>
    %498 = arith.mulf %497, %496 : vector<8x128xf32>
    %499 = math.tanh %498 : vector<8x128xf32>
    %cst_183 = arith.constant 5.000000e-01 : f32
    %500 = vector.broadcast %cst_183 : f32 to vector<8x128xf32>
    %501 = arith.mulf %500, %499 : vector<8x128xf32>
    %cst_184 = arith.constant 5.000000e-01 : f32
    %502 = vector.broadcast %cst_184 : f32 to vector<8x128xf32>
    %503 = arith.addf %501, %502 : vector<8x128xf32>
    %504 = vector.extract_strided_slice %487 {offsets = [0, 256], sizes = [8, 128], strides = [1, 1]} : vector<8x512xf32> to vector<8x128xf32>
    %505 = math.tanh %504 : vector<8x128xf32>
    %506 = vector.extract_strided_slice %487 {offsets = [0, 384], sizes = [8, 128], strides = [1, 1]} : vector<8x512xf32> to vector<8x128xf32>
    %cst_185 = arith.constant 5.000000e-01 : f32
    %507 = vector.broadcast %cst_185 : f32 to vector<8x128xf32>
    %508 = arith.mulf %507, %506 : vector<8x128xf32>
    %509 = math.tanh %508 : vector<8x128xf32>
    %cst_186 = arith.constant 5.000000e-01 : f32
    %510 = vector.broadcast %cst_186 : f32 to vector<8x128xf32>
    %511 = arith.mulf %510, %509 : vector<8x128xf32>
    %cst_187 = arith.constant 5.000000e-01 : f32
    %512 = vector.broadcast %cst_187 : f32 to vector<8x128xf32>
    %513 = arith.addf %511, %512 : vector<8x128xf32>
    %514 = arith.mulf %503, %445 : vector<8x128xf32>
    %515 = arith.mulf %495, %505 : vector<8x128xf32>
    %516 = arith.addf %514, %515 : vector<8x128xf32>
    %517 = math.tanh %516 : vector<8x128xf32>
    %518 = arith.mulf %513, %517 : vector<8x128xf32>
    %c7_i32 = arith.constant 7 : i32
    %519 = arith.index_cast %c7_i32 : i32 to index
    %c0_188 = arith.constant 0 : index
    %c0_189 = arith.constant 0 : index
    %520 = vector.load %arg12[%519, %c0_188, %c0_189] : memref<8x8x512xf32, #tpu.memory_space<vmem>>, vector<1x8x512xf32>
    %521 = vector.shape_cast %520 : vector<1x8x512xf32> to vector<8x512xf32>
    %cst_190 = arith.constant dense<0.000000e+00> : vector<8x512xf32>
    %522 = tpu.matmul %483, %3, %cst_190 {dimension_numbers = #tpu.dot_dimension_numbers<[1], [0], [0], [1], [0, 0, 1, 1], [], []>} : vector<8x128xf32>, vector<128x512xf32>, vector<8x512xf32> -> vector<8x512xf32>
    %523 = arith.addf %521, %522 : vector<8x512xf32>
    %524 = vector.extract_strided_slice %523 {offsets = [0, 0], sizes = [8, 128], strides = [1, 1]} : vector<8x512xf32> to vector<8x128xf32>
    %cst_191 = arith.constant 5.000000e-01 : f32
    %525 = vector.broadcast %cst_191 : f32 to vector<8x128xf32>
    %526 = arith.mulf %525, %524 : vector<8x128xf32>
    %527 = math.tanh %526 : vector<8x128xf32>
    %cst_192 = arith.constant 5.000000e-01 : f32
    %528 = vector.broadcast %cst_192 : f32 to vector<8x128xf32>
    %529 = arith.mulf %528, %527 : vector<8x128xf32>
    %cst_193 = arith.constant 5.000000e-01 : f32
    %530 = vector.broadcast %cst_193 : f32 to vector<8x128xf32>
    %531 = arith.addf %529, %530 : vector<8x128xf32>
    %532 = vector.extract_strided_slice %523 {offsets = [0, 128], sizes = [8, 128], strides = [1, 1]} : vector<8x512xf32> to vector<8x128xf32>
    %cst_194 = arith.constant 5.000000e-01 : f32
    %533 = vector.broadcast %cst_194 : f32 to vector<8x128xf32>
    %534 = arith.mulf %533, %532 : vector<8x128xf32>
    %535 = math.tanh %534 : vector<8x128xf32>
    %cst_195 = arith.constant 5.000000e-01 : f32
    %536 = vector.broadcast %cst_195 : f32 to vector<8x128xf32>
    %537 = arith.mulf %536, %535 : vector<8x128xf32>
    %cst_196 = arith.constant 5.000000e-01 : f32
    %538 = vector.broadcast %cst_196 : f32 to vector<8x128xf32>
    %539 = arith.addf %537, %538 : vector<8x128xf32>
    %540 = vector.extract_strided_slice %523 {offsets = [0, 256], sizes = [8, 128], strides = [1, 1]} : vector<8x512xf32> to vector<8x128xf32>
    %541 = math.tanh %540 : vector<8x128xf32>
    %542 = vector.extract_strided_slice %523 {offsets = [0, 384], sizes = [8, 128], strides = [1, 1]} : vector<8x512xf32> to vector<8x128xf32>
    %cst_197 = arith.constant 5.000000e-01 : f32
    %543 = vector.broadcast %cst_197 : f32 to vector<8x128xf32>
    %544 = arith.mulf %543, %542 : vector<8x128xf32>
    %545 = math.tanh %544 : vector<8x128xf32>
    %cst_198 = arith.constant 5.000000e-01 : f32
    %546 = vector.broadcast %cst_198 : f32 to vector<8x128xf32>
    %547 = arith.mulf %546, %545 : vector<8x128xf32>
    %cst_199 = arith.constant 5.000000e-01 : f32
    %548 = vector.broadcast %cst_199 : f32 to vector<8x128xf32>
    %549 = arith.addf %547, %548 : vector<8x128xf32>
    %550 = arith.mulf %539, %481 : vector<8x128xf32>
    %551 = arith.mulf %531, %541 : vector<8x128xf32>
    %552 = arith.addf %550, %551 : vector<8x128xf32>
    %553 = math.tanh %552 : vector<8x128xf32>
    %554 = arith.mulf %549, %553 : vector<8x128xf32>
    %cst_200 = arith.constant dense<0.000000e+00> : vector<8x512xf32>
    %555 = tpu.matmul %554, %4, %cst_200 {dimension_numbers = #tpu.dot_dimension_numbers<[1], [0], [0], [1], [0, 0, 1, 1], [], []>} : vector<8x128xf32>, vector<128x512xf32>, vector<8x512xf32> -> vector<8x512xf32>
    %cst_201 = arith.constant dense<0.000000e+00> : vector<8x512xf32>
    %556 = tpu.matmul %518, %5, %cst_201 {dimension_numbers = #tpu.dot_dimension_numbers<[1], [0], [0], [1], [0, 0, 1, 1], [], []>} : vector<8x128xf32>, vector<128x512xf32>, vector<8x512xf32> -> vector<8x512xf32>
    %557 = arith.addf %555, %556 : vector<8x512xf32>
    %558 = arith.addf %557, %8 : vector<8x512xf32>
    %559 = vector.extract_strided_slice %558 {offsets = [0, 0], sizes = [8, 128], strides = [1, 1]} : vector<8x512xf32> to vector<8x128xf32>
    %cst_202 = arith.constant 5.000000e-01 : f32
    %560 = vector.broadcast %cst_202 : f32 to vector<8x128xf32>
    %561 = arith.mulf %560, %559 : vector<8x128xf32>
    %562 = math.tanh %561 : vector<8x128xf32>
    %cst_203 = arith.constant 5.000000e-01 : f32
    %563 = vector.broadcast %cst_203 : f32 to vector<8x128xf32>
    %564 = arith.mulf %563, %562 : vector<8x128xf32>
    %cst_204 = arith.constant 5.000000e-01 : f32
    %565 = vector.broadcast %cst_204 : f32 to vector<8x128xf32>
    %566 = arith.addf %564, %565 : vector<8x128xf32>
    %567 = vector.extract_strided_slice %558 {offsets = [0, 128], sizes = [8, 128], strides = [1, 1]} : vector<8x512xf32> to vector<8x128xf32>
    %cst_205 = arith.constant 5.000000e-01 : f32
    %568 = vector.broadcast %cst_205 : f32 to vector<8x128xf32>
    %569 = arith.mulf %568, %567 : vector<8x128xf32>
    %570 = math.tanh %569 : vector<8x128xf32>
    %cst_206 = arith.constant 5.000000e-01 : f32
    %571 = vector.broadcast %cst_206 : f32 to vector<8x128xf32>
    %572 = arith.mulf %571, %570 : vector<8x128xf32>
    %cst_207 = arith.constant 5.000000e-01 : f32
    %573 = vector.broadcast %cst_207 : f32 to vector<8x128xf32>
    %574 = arith.addf %572, %573 : vector<8x128xf32>
    %575 = vector.extract_strided_slice %558 {offsets = [0, 256], sizes = [8, 128], strides = [1, 1]} : vector<8x512xf32> to vector<8x128xf32>
    %576 = math.tanh %575 : vector<8x128xf32>
    %577 = vector.extract_strided_slice %558 {offsets = [0, 384], sizes = [8, 128], strides = [1, 1]} : vector<8x512xf32> to vector<8x128xf32>
    %cst_208 = arith.constant 5.000000e-01 : f32
    %578 = vector.broadcast %cst_208 : f32 to vector<8x128xf32>
    %579 = arith.mulf %578, %577 : vector<8x128xf32>
    %580 = math.tanh %579 : vector<8x128xf32>
    %cst_209 = arith.constant 5.000000e-01 : f32
    %581 = vector.broadcast %cst_209 : f32 to vector<8x128xf32>
    %582 = arith.mulf %581, %580 : vector<8x128xf32>
    %cst_210 = arith.constant 5.000000e-01 : f32
    %583 = vector.broadcast %cst_210 : f32 to vector<8x128xf32>
    %584 = arith.addf %582, %583 : vector<8x128xf32>
    %585 = arith.mulf %574, %516 : vector<8x128xf32>
    %586 = arith.mulf %566, %576 : vector<8x128xf32>
    %587 = arith.addf %585, %586 : vector<8x128xf32>
    %588 = math.tanh %587 : vector<8x128xf32>
    %589 = arith.mulf %584, %588 : vector<8x128xf32>
    %c8_i32 = arith.constant 8 : i32
    %c0_211 = arith.constant 0 : index
    %c0_212 = arith.constant 0 : index
    %590 = vector.load %arg13[%c0_211, %c0_212] : memref<8x128xf32, #tpu.memory_space<vmem>>, vector<8x128xf32>
    tpu.vector_store %arg13[%c0_211, %c0_212], %554 {strides = array<i32>} : memref<8x128xf32, #tpu.memory_space<vmem>>, vector<8x128xf32>,
    %c0_213 = arith.constant 0 : index
    %c0_214 = arith.constant 0 : index
    %591 = vector.load %arg14[%c0_213, %c0_214] : memref<8x128xf32, #tpu.memory_space<vmem>>, vector<8x128xf32>
    tpu.vector_store %arg14[%c0_213, %c0_214], %552 {strides = array<i32>} : memref<8x128xf32, #tpu.memory_space<vmem>>, vector<8x128xf32>,
    %c0_215 = arith.constant 0 : index
    %c0_216 = arith.constant 0 : index
    %592 = vector.load %arg15[%c0_215, %c0_216] : memref<8x128xf32, #tpu.memory_space<vmem>>, vector<8x128xf32>
    tpu.vector_store %arg15[%c0_215, %c0_216], %589 {strides = array<i32>} : memref<8x128xf32, #tpu.memory_space<vmem>>, vector<8x128xf32>,
    %c0_217 = arith.constant 0 : index
    %c0_218 = arith.constant 0 : index
    %593 = vector.load %arg16[%c0_217, %c0_218] : memref<8x128xf32, #tpu.memory_space<vmem>>, vector<8x128xf32>
    tpu.vector_store %arg16[%c0_217, %c0_218], %587 {strides = array<i32>} : memref<8x128xf32, #tpu.memory_space<vmem>>, vector<8x128xf32>,
    %c0_i32_219 = arith.constant 0 : i32
    %594 = arith.cmpi eq, %arg1, %c0_i32_219 : i32
    %595 = arith.extui %594 : i1 to i32
    %c0_i32_220 = arith.constant 0 : i32
    %596 = arith.cmpi ne, %595, %c0_i32_220 : i32
    scf.if %596 {
      %c0_221 = arith.constant 0 : index
      %c0_222 = arith.constant 0 : index
      %597 = vector.load %arg9[%c0_221, %c0_222] : memref<128x1xf32, #tpu.memory_space<vmem>>, vector<128x1xf32>
      %cst_223 = arith.constant dense<0.000000e+00> : vector<8x1xf32>
      %598 = tpu.matmul %589, %597, %cst_223 {dimension_numbers = #tpu.dot_dimension_numbers<[1], [0], [0], [1], [0, 0, 1, 1], [], []>} : vector<8x128xf32>, vector<128x1xf32>, vector<8x1xf32> -> vector<8x1xf32>
      %c0_224 = arith.constant 0 : index
      %c0_225 = arith.constant 0 : index
      %599 = vector.load %arg10[%c0_224, %c0_225] : memref<1x1xf32, #tpu.memory_space<vmem>>, vector<1x1xf32>
      %600 = vector.broadcast %599 : vector<1x1xf32> to vector<8x1xf32>
      %601 = arith.addf %598, %600 : vector<8x1xf32>
      %c0_226 = arith.constant 0 : index
      %c0_227 = arith.constant 0 : index
      %602 = vector.load %arg11[%c0_226, %c0_227] : memref<8x1xf32, #tpu.memory_space<vmem>>, vector<8x1xf32>
      tpu.vector_store %arg11[%c0_226, %c0_227], %601 {strides = array<i32>} : memref<8x1xf32, #tpu.memory_space<vmem>>, vector<8x1xf32>,
    } else {
    }
    return
  }
  func.func @transform_0(%arg0: i32, %arg1: i32) -> (i32, i32, i32) {
    %c0_i32 = arith.constant 0 : i32
    %c0_i32_0 = arith.constant 0 : i32
    return %arg1, %arg0, %c0_i32 : i32, i32, i32
  }
  func.func @transform_1(%arg0: i32, %arg1: i32) -> (i32, i32) {
    %c0_i32 = arith.constant 0 : i32
    %c0_i32_0 = arith.constant 0 : i32
    %c0_i32_1 = arith.constant 0 : i32
    return %c0_i32, %c0_i32_0 : i32, i32
  }
  func.func @transform_2(%arg0: i32, %arg1: i32) -> (i32, i32) {
    %c0_i32 = arith.constant 0 : i32
    %c0_i32_0 = arith.constant 0 : i32
    %c0_i32_1 = arith.constant 0 : i32
    return %c0_i32, %c0_i32_0 : i32, i32
  }
  func.func @transform_3(%arg0: i32, %arg1: i32) -> (i32, i32) {
    %c0_i32 = arith.constant 0 : i32
    %c0_i32_0 = arith.constant 0 : i32
    %c0_i32_1 = arith.constant 0 : i32
    return %c0_i32, %c0_i32_0 : i32, i32
  }
  func.func @transform_4(%arg0: i32, %arg1: i32) -> (i32, i32) {
    %c0_i32 = arith.constant 0 : i32
    %c0_i32_0 = arith.constant 0 : i32
    %c0_i32_1 = arith.constant 0 : i32
    return %c0_i32, %c0_i32_0 : i32, i32
  }
  func.func @transform_5(%arg0: i32, %arg1: i32) -> (i32, i32) {
    %c0_i32 = arith.constant 0 : i32
    %c0_i32_0 = arith.constant 0 : i32
    %c0_i32_1 = arith.constant 0 : i32
    return %c0_i32, %c0_i32_0 : i32, i32
  }
  func.func @transform_6(%arg0: i32, %arg1: i32) -> (i32, i32) {
    %c0_i32 = arith.constant 0 : i32
    %c0_i32_0 = arith.constant 0 : i32
    %c0_i32_1 = arith.constant 0 : i32
    return %c0_i32, %c0_i32_0 : i32, i32
  }
  func.func @transform_7(%arg0: i32, %arg1: i32) -> (i32, i32) {
    %c0_i32 = arith.constant 0 : i32
    %c0_i32_0 = arith.constant 0 : i32
    %c0_i32_1 = arith.constant 0 : i32
    return %c0_i32, %c0_i32_0 : i32, i32
  }
  func.func @transform_8(%arg0: i32, %arg1: i32) -> (i32, i32) {
    %c0_i32 = arith.constant 0 : i32
    %c0_i32_0 = arith.constant 0 : i32
    %c0_i32_1 = arith.constant 0 : i32
    return %c0_i32, %c0_i32_0 : i32, i32
  }
  func.func @transform_9(%arg0: i32, %arg1: i32) -> (i32, i32) {
    %c0_i32 = arith.constant 0 : i32
    %c0_i32_0 = arith.constant 0 : i32
    return %arg0, %c0_i32 : i32, i32
  }
}

</mosaic_0001>

<llo_original>
// kernel: tpu_custom_call.1
$region0: #{tpu_custom_call.1}
  #allocation0 [shape = 'u32[]', space=smem, size = 0x4, offset = 0x4, fixed_abs, tag = 'smem constant byte address 0x4 - core index']
  #allocation1 [shape = 'u32[144,128]{1,0:T(1,128)}', space=vmem, size = 0x12000, scoped, tag = 'internal scratch']
  #allocation2 [shape = 'f32[8,8,512]{2,1,0:T(8,128)}', space=vmem, size = 0x20000, scoped, tag = 'scratch operand']
  #allocation3 [shape = 'f32[8,128]{1,0:T(8,128)}', space=vmem, size = 0x1000, scoped, tag = 'scratch operand']
  #allocation4 [shape = 'f32[8,128]{1,0:T(8,128)}', space=vmem, size = 0x1000, scoped, tag = 'scratch operand']
  #allocation5 [shape = 'f32[8,128]{1,0:T(8,128)}', space=vmem, size = 0x1000, scoped, tag = 'scratch operand']
  #allocation6 [shape = 'f32[8,128]{1,0:T(8,128)}', space=vmem, size = 0x1000, scoped, tag = 'scratch operand']
  #allocation7 [shape = 'f32[1,1]{1,0:T(1,128)S(1)}', space=vmem, size = 0x200, scoped, tag = 'scoped memory for tpu_custom_call.1']
  %s0 = inlined_call_operand.vmem [shape: f32[8,8,128], index: 0, kind: input, shape index: {}]
  %s1 = inlined_call_operand.hbm [shape: f32[128,512], index: 1, kind: input, shape index: {}]
  %s2 = inlined_call_operand.hbm [shape: f32[128,512], index: 2, kind: input, shape index: {}]
  %s3 = inlined_call_operand.vmem [shape: f32[1,512], index: 3, kind: input, shape index: {}]
  %s4 = inlined_call_operand.hbm [shape: f32[128,512], index: 4, kind: input, shape index: {}]
  %s5 = inlined_call_operand.hbm [shape: f32[128,512], index: 5, kind: input, shape index: {}]
  %s6 = inlined_call_operand.vmem [shape: f32[1,512], index: 6, kind: input, shape index: {}]
  %s7 = inlined_call_operand.vmem [shape: f32[128,1], index: 7, kind: input, shape index: {}]
  %s8 = inlined_call_operand.<no memory space> [shape: f32[1,1], index: 8, kind: input, shape index: {}]
  %s9 = inlined_call_operand.vmem [shape: f32[8,1], index: 9, kind: output, shape index: {}]
  %s10 = sld [smem:[#allocation0]]
  $region70: #{tpu_custom_call.1} parent=0
    _
  %s12 = ssub.s32 1, %s10
  %s13 = scalar_select 0, %s12, %s10
  %v14 = vstv %s8
  %15 = vst [vmem:[#allocation7] sm:$0x1] %v14
  $region1: #{tpu_custom_call.1} parent=0
    #allocation8 [shape = 'u8[262144]{0}', space=vmem, size = 0x40000, scoped, tag = 'input window, operand 1, single buffered']
    #allocation9 [shape = 's32[1]{0}', space=sflag, size = 0x4, scoped, tag = 'scoped memory for tpu_custom_call.1']
    #allocation10 [shape = 'u8[262144]{0}', space=vmem, size = 0x40000, scoped, tag = 'input window, operand 2, single buffered']
    #allocation11 [shape = 's32[1]{0}', space=sflag, size = 0x4, scoped, tag = 'scoped memory for tpu_custom_call.1']
    #allocation12 [shape = 'u8[262144]{0}', space=vmem, size = 0x40000, scoped, tag = 'input window, operand 4, single buffered']
    #allocation13 [shape = 'u8[262144]{0}', space=vmem, size = 0x40000, scoped, tag = 'input window, operand 5, single buffered']
    #allocation14 [shape = 's32[1]{0}', space=sflag, size = 0x4, scoped, tag = 'scoped memory for tpu_custom_call.1']
    %16 = vsyncpa [#allocation9], 0
    %17 = vsyncpa [#allocation11], 0
    %18 = vsyncpa [#allocation14], 0
    // Predicated region
    $region2: #{tpu_custom_call.1} parent=1 // pred_check
      _
    $region3: #{tpu_custom_call.1} parent=1 // pred_check_branch
      %20 = sbr.rel (0) target = $region5
    $region4: #{tpu_custom_call.1} parent=1 // pred_region
      _
    $region5: #{tpu_custom_call.1} parent=1 // pred_fallthru
      _
    // Predicated region
    $region6: #{tpu_custom_call.1} parent=1 // pred_check
      _
    $region7: #{tpu_custom_call.1} parent=1 // pred_check_branch
      %22 = sbr.rel (0) target = $region9
    $region8: #{tpu_custom_call.1} parent=1 // pred_region
      %s24 = ssub.s32 8192, 8192
      %25 = vsyncadd [#allocation9], %s24
      %s26 = sshll.u32 [#allocation8], 4
      %s27 = int_to_ptr.vmem [resolvable:$true] %s26
      %32 = dma.hbm_to_vmem [thread:$0]  %s1, 8192, %s27, [#allocation9], 512, 512, 32
    $region9: #{tpu_custom_call.1} parent=1 // pred_fallthru
      _
    // Predicated region
    $region10: #{tpu_custom_call.1} parent=1 // pred_check
      _
    $region11: #{tpu_custom_call.1} parent=1 // pred_check_branch
      %34 = sbr.rel (0) target = $region13
    $region12: #{tpu_custom_call.1} parent=1 // pred_region
      %s36 = ssub.s32 8192, 8192
      %37 = vsyncadd [#allocation11], %s36
      %s38 = sshll.u32 [#allocation10], 4
      %s39 = int_to_ptr.vmem [resolvable:$true] %s38
      %44 = dma.hbm_to_vmem [thread:$0]  %s2, 8192, %s39, [#allocation11], 512, 512, 32
    $region13: #{tpu_custom_call.1} parent=1 // pred_fallthru
      _
    // Predicated region
    $region14: #{tpu_custom_call.1} parent=1 // pred_check
      _
    $region15: #{tpu_custom_call.1} parent=1 // pred_check_branch
      %46 = sbr.rel (0) target = $region17
    $region16: #{tpu_custom_call.1} parent=1 // pred_region
      _
    $region17: #{tpu_custom_call.1} parent=1 // pred_fallthru
      _
    // Predicated region
    $region18: #{tpu_custom_call.1} parent=1 // pred_check
      _
    $region19: #{tpu_custom_call.1} parent=1 // pred_check_branch
      %48 = sbr.rel (0) target = $region21
    $region20: #{tpu_custom_call.1} parent=1 // pred_region
      %s50 = ssub.s32 8192, 8192
      %51 = vsyncadd [#allocation11], %s50
      %s52 = sshll.u32 [#allocation12], 4
      %s53 = int_to_ptr.vmem [resolvable:$true] %s52
      %58 = dma.hbm_to_vmem [thread:$0]  %s4, 8192, %s53, [#allocation11], 512, 512, 32
    $region21: #{tpu_custom_call.1} parent=1 // pred_fallthru
      _
    // Predicated region
    $region22: #{tpu_custom_call.1} parent=1 // pred_check
      _
    $region23: #{tpu_custom_call.1} parent=1 // pred_check_branch
      %60 = sbr.rel (0) target = $region25
    $region24: #{tpu_custom_call.1} parent=1 // pred_region
      %s62 = ssub.s32 8192, 8192
      %63 = vsyncadd [#allocation14], %s62
      %s64 = sshll.u32 [#allocation13], 4
      %s65 = int_to_ptr.vmem [resolvable:$true] %s64
      %70 = dma.hbm_to_vmem [thread:$0]  %s5, 8192, %s65, [#allocation14], 512, 512, 32
    $region25: #{tpu_custom_call.1} parent=1 // pred_fallthru
      _
    // Predicated region
    $region26: #{tpu_custom_call.1} parent=1 // pred_check
      _
    $region27: #{tpu_custom_call.1} parent=1 // pred_check_branch
      %72 = sbr.rel (0) target = $region29
    $region28: #{tpu_custom_call.1} parent=1 // pred_region
      _
    $region29: #{tpu_custom_call.1} parent=1 // pred_fallthru
      _
    // Predicated region
    $region30: #{tpu_custom_call.1} parent=1 // pred_check
      _
    $region31: #{tpu_custom_call.1} parent=1 // pred_check_branch
      %74 = sbr.rel (0) target = $region33
    $region32: #{tpu_custom_call.1} parent=1 // pred_region
      _
    $region33: #{tpu_custom_call.1} parent=1 // pred_fallthru
      _
    // Predicated region
    $region34: #{tpu_custom_call.1} parent=1 // pred_check
      _
    $region35: #{tpu_custom_call.1} parent=1 // pred_check_branch
      %76 = sbr.rel (0) target = $region37
    $region36: #{tpu_custom_call.1} parent=1 // pred_region
      _
    $region37: #{tpu_custom_call.1} parent=1 // pred_fallthru
      _
    // Predicated region
    $region38: #{tpu_custom_call.1} parent=1 // pred_check
      _
    $region39: #{tpu_custom_call.1} parent=1 // pred_check_branch
      %78 = sbr.rel (0) target = $region41
    $region40: #{tpu_custom_call.1} parent=1 // pred_region
      %79 = dma.done [#allocation9], 8192
    $region41: #{tpu_custom_call.1} parent=1 // pred_fallthru
      _
    // Predicated region
    $region42: #{tpu_custom_call.1} parent=1 // pred_check
      _
    $region43: #{tpu_custom_call.1} parent=1 // pred_check_branch
      %81 = sbr.rel (0) target = $region45
    $region44: #{tpu_custom_call.1} parent=1 // pred_region
      %82 = dma.done [#allocation11], 8192
    $region45: #{tpu_custom_call.1} parent=1 // pred_fallthru
      _
    // Predicated region
    $region46: #{tpu_custom_call.1} parent=1 // pred_check
      _
    $region47: #{tpu_custom_call.1} parent=1 // pred_check_branch
      %84 = sbr.rel (0) target = $region49
    $region48: #{tpu_custom_call.1} parent=1 // pred_region
      %85 = dma.done [#allocation11], 8192
    $region49: #{tpu_custom_call.1} parent=1 // pred_fallthru
      _
    // Predicated region
    $region50: #{tpu_custom_call.1} parent=1 // pred_check
      _
    $region51: #{tpu_custom_call.1} parent=1 // pred_check_branch
      %87 = sbr.rel (0) target = $region53
    $region52: #{tpu_custom_call.1} parent=1 // pred_region
      %88 = dma.done [#allocation14], 8192
    $region53: #{tpu_custom_call.1} parent=1 // pred_fallthru
      _
    %p89 = scmp.eq.s32.totalorder 0, 0
    // Predicated region
    $region54: #{tpu_custom_call.1} parent=1 // pred_check
      %p90 = pneg %p89
    $region55: #{tpu_custom_call.1} parent=1 // pred_check_branch
      %92 = sbr.rel (%p90) target = $region57
    $region56: #{tpu_custom_call.1} parent=1 // pred_region
      %93 = vst [vmem:[#allocation3] sm:$0xff] 0.0
      %94 = vst [vmem:[#allocation4] sm:$0xff] 0.0
      %95 = vst [vmem:[#allocation5] sm:$0xff] 0.0
      %96 = vst [vmem:[#allocation6] sm:$0xff] 0.0
    $region57: #{tpu_custom_call.1} parent=1 // pred_fallthru
      _
    %v97 = vld [vmem:[#allocation10] sm:$0xff]
    %v98 = vld [vmem:[#allocation10 + $0x8] sm:$0xff]
    %v99 = vld [vmem:[#allocation10 + $0x10] sm:$0xff]
    %v100 = vld [vmem:[#allocation10 + $0x18] sm:$0xff]
    %v101 = vld [vmem:[#allocation10 + $0x20] sm:$0xff]
    %v102 = vld [vmem:[#allocation10 + $0x28] sm:$0xff]
    %v103 = vld [vmem:[#allocation10 + $0x30] sm:$0xff]
    %v104 = vld [vmem:[#allocation10 + $0x38] sm:$0xff]
    %v105 = vld [vmem:[#allocation10 + $0x40] sm:$0xff]
    %v106 = vld [vmem:[#allocation10 + $0x48] sm:$0xff]
    %v107 = vld [vmem:[#allocation10 + $0x50] sm:$0xff]
    %v108 = vld [vmem:[#allocation10 + $0x58] sm:$0xff]
    %v109 = vld [vmem:[#allocation10 + $0x60] sm:$0xff]
    %v110 = vld [vmem:[#allocation10 + $0x68] sm:$0xff]
    %v111 = vld [vmem:[#allocation10 + $0x70] sm:$0xff]
    %v112 = vld [vmem:[#allocation10 + $0x78] sm:$0xff]
    %v113 = vld [vmem:[#allocation10 + $0x80] sm:$0xff]
    %v114 = vld [vmem:[#allocation10 + $0x88] sm:$0xff]
    %v115 = vld [vmem:[#allocation10 + $0x90] sm:$0xff]
    %v116 = vld [vmem:[#allocation10 + $0x98] sm:$0xff]
    %v117 = vld [vmem:[#allocation10 + $0xa0] sm:$0xff]
    %v118 = vld [vmem:[#allocation10 + $0xa8] sm:$0xff]
    %v119 = vld [vmem:[#allocation10 + $0xb0] sm:$0xff]
    %v120 = vld [vmem:[#allocation10 + $0xb8] sm:$0xff]
    %v121 = vld [vmem:[#allocation10 + $0xc0] sm:$0xff]
    %v122 = vld [vmem:[#allocation10 + $0xc8] sm:$0xff]
    %v123 = vld [vmem:[#allocation10 + $0xd0] sm:$0xff]
    %v124 = vld [vmem:[#allocation10 + $0xd8] sm:$0xff]
    %v125 = vld [vmem:[#allocation10 + $0xe0] sm:$0xff]
    %v126 = vld [vmem:[#allocation10 + $0xe8] sm:$0xff]
    %v127 = vld [vmem:[#allocation10 + $0xf0] sm:$0xff]
    %v128 = vld [vmem:[#allocation10 + $0xf8] sm:$0xff]
    %v129 = vld [vmem:[#allocation10 + $0x100] sm:$0xff]
    %v130 = vld [vmem:[#allocation10 + $0x108] sm:$0xff]
    %v131 = vld [vmem:[#allocation10 + $0x110] sm:$0xff]
    %v132 = vld [vmem:[#allocation10 + $0x118] sm:$0xff]
    %v133 = vld [vmem:[#allocation10 + $0x120] sm:$0xff]
    %v134 = vld [vmem:[#allocation10 + $0x128] sm:$0xff]
    %v135 = vld [vmem:[#allocation10 + $0x130] sm:$0xff]
    %v136 = vld [vmem:[#allocation10 + $0x138] sm:$0xff]
    %v137 = vld [vmem:[#allocation10 + $0x140] sm:$0xff]
    %v138 = vld [vmem:[#allocation10 + $0x148] sm:$0xff]
    %v139 = vld [vmem:[#allocation10 + $0x150] sm:$0xff]
    %v140 = vld [vmem:[#allocation10 + $0x158] sm:$0xff]
    %v141 = vld [vmem:[#allocation10 + $0x160] sm:$0xff]
    %v142 = vld [vmem:[#allocation10 + $0x168] sm:$0xff]
    %v143 = vld [vmem:[#allocation10 + $0x170] sm:$0xff]
    %v144 = vld [vmem:[#allocation10 + $0x178] sm:$0xff]
    %v145 = vld [vmem:[#allocation10 + $0x180] sm:$0xff]
    %v146 = vld [vmem:[#allocation10 + $0x188] sm:$0xff]
    %v147 = vld [vmem:[#allocation10 + $0x190] sm:$0xff]
    %v148 = vld [vmem:[#allocation10 + $0x198] sm:$0xff]
    %v149 = vld [vmem:[#allocation10 + $0x1a0] sm:$0xff]
    %v150 = vld [vmem:[#allocation10 + $0x1a8] sm:$0xff]
    %v151 = vld [vmem:[#allocation10 + $0x1b0] sm:$0xff]
    %v152 = vld [vmem:[#allocation10 + $0x1b8] sm:$0xff]
    %v153 = vld [vmem:[#allocation10 + $0x1c0] sm:$0xff]
    %v154 = vld [vmem:[#allocation10 + $0x1c8] sm:$0xff]
    %v155 = vld [vmem:[#allocation10 + $0x1d0] sm:$0xff]
    %v156 = vld [vmem:[#allocation10 + $0x1d8] sm:$0xff]
    %v157 = vld [vmem:[#allocation10 + $0x1e0] sm:$0xff]
    %v158 = vld [vmem:[#allocation10 + $0x1e8] sm:$0xff]
    %v159 = vld [vmem:[#allocation10 + $0x1f0] sm:$0xff]
    %v160 = vld [vmem:[#allocation10 + $0x1f8] sm:$0xff]
    %v161 = vld [vmem:[#allocation12] sm:$0xff]
    %v162 = vld [vmem:[#allocation12 + $0x8] sm:$0xff]
    %v163 = vld [vmem:[#allocation12 + $0x10] sm:$0xff]
    %v164 = vld [vmem:[#allocation12 + $0x18] sm:$0xff]
    %v165 = vld [vmem:[#allocation12 + $0x20] sm:$0xff]
    %v166 = vld [vmem:[#allocation12 + $0x28] sm:$0xff]
    %v167 = vld [vmem:[#allocation12 + $0x30] sm:$0xff]
    %v168 = vld [vmem:[#allocation12 + $0x38] sm:$0xff]
    %v169 = vld [vmem:[#allocation12 + $0x40] sm:$0xff]
    %v170 = vld [vmem:[#allocation12 + $0x48] sm:$0xff]
    %v171 = vld [vmem:[#allocation12 + $0x50] sm:$0xff]
    %v172 = vld [vmem:[#allocation12 + $0x58] sm:$0xff]
    %v173 = vld [vmem:[#allocation12 + $0x60] sm:$0xff]
    %v174 = vld [vmem:[#allocation12 + $0x68] sm:$0xff]
    %v175 = vld [vmem:[#allocation12 + $0x70] sm:$0xff]
    %v176 = vld [vmem:[#allocation12 + $0x78] sm:$0xff]
    %v177 = vld [vmem:[#allocation12 + $0x80] sm:$0xff]
    %v178 = vld [vmem:[#allocation12 + $0x88] sm:$0xff]
    %v179 = vld [vmem:[#allocation12 + $0x90] sm:$0xff]
    %v180 = vld [vmem:[#allocation12 + $0x98] sm:$0xff]
    %v181 = vld [vmem:[#allocation12 + $0xa0] sm:$0xff]
    %v182 = vld [vmem:[#allocation12 + $0xa8] sm:$0xff]
    %v183 = vld [vmem:[#allocation12 + $0xb0] sm:$0xff]
    %v184 = vld [vmem:[#allocation12 + $0xb8] sm:$0xff]
    %v185 = vld [vmem:[#allocation12 + $0xc0] sm:$0xff]
    %v186 = vld [vmem:[#allocation12 + $0xc8] sm:$0xff]
    %v187 = vld [vmem:[#allocation12 + $0xd0] sm:$0xff]
    %v188 = vld [vmem:[#allocation12 + $0xd8] sm:$0xff]
    %v189 = vld [vmem:[#allocation12 + $0xe0] sm:$0xff]
    %v190 = vld [vmem:[#allocation12 + $0xe8] sm:$0xff]
    %v191 = vld [vmem:[#allocation12 + $0xf0] sm:$0xff]
    %v192 = vld [vmem:[#allocation12 + $0xf8] sm:$0xff]
    %v193 = vld [vmem:[#allocation12 + $0x100] sm:$0xff]
    %v194 = vld [vmem:[#allocation12 + $0x108] sm:$0xff]
    %v195 = vld [vmem:[#allocation12 + $0x110] sm:$0xff]
    %v196 = vld [vmem:[#allocation12 + $0x118] sm:$0xff]
    %v197 = vld [vmem:[#allocation12 + $0x120] sm:$0xff]
    %v198 = vld [vmem:[#allocation12 + $0x128] sm:$0xff]
    %v199 = vld [vmem:[#allocation12 + $0x130] sm:$0xff]
    %v200 = vld [vmem:[#allocation12 + $0x138] sm:$0xff]
    %v201 = vld [vmem:[#allocation12 + $0x140] sm:$0xff]
    %v202 = vld [vmem:[#allocation12 + $0x148] sm:$0xff]
    %v203 = vld [vmem:[#allocation12 + $0x150] sm:$0xff]
    %v204 = vld [vmem:[#allocation12 + $0x158] sm:$0xff]
    %v205 = vld [vmem:[#allocation12 + $0x160] sm:$0xff]
    %v206 = vld [vmem:[#allocation12 + $0x168] sm:$0xff]
    %v207 = vld [vmem:[#allocation12 + $0x170] sm:$0xff]
    %v208 = vld [vmem:[#allocation12 + $0x178] sm:$0xff]
    %v209 = vld [vmem:[#allocation12 + $0x180] sm:$0xff]
    %v210 = vld [vmem:[#allocation12 + $0x188] sm:$0xff]
    %v211 = vld [vmem:[#allocation12 + $0x190] sm:$0xff]
    %v212 = vld [vmem:[#allocation12 + $0x198] sm:$0xff]
    %v213 = vld [vmem:[#allocation12 + $0x1a0] sm:$0xff]
    %v214 = vld [vmem:[#allocation12 + $0x1a8] sm:$0xff]
    %v215 = vld [vmem:[#allocation12 + $0x1b0] sm:$0xff]
    %v216 = vld [vmem:[#allocation12 + $0x1b8] sm:$0xff]
    %v217 = vld [vmem:[#allocation12 + $0x1c0] sm:$0xff]
    %v218 = vld [vmem:[#allocation12 + $0x1c8] sm:$0xff]
    %v219 = vld [vmem:[#allocation12 + $0x1d0] sm:$0xff]
    %v220 = vld [vmem:[#allocation12 + $0x1d8] sm:$0xff]
    %v221 = vld [vmem:[#allocation12 + $0x1e0] sm:$0xff]
    %v222 = vld [vmem:[#allocation12 + $0x1e8] sm:$0xff]
    %v223 = vld [vmem:[#allocation12 + $0x1f0] sm:$0xff]
    %v224 = vld [vmem:[#allocation12 + $0x1f8] sm:$0xff]
    %v225 = vld [vmem:[#allocation13] sm:$0xff]
    %v226 = vld [vmem:[#allocation13 + $0x8] sm:$0xff]
    %v227 = vld [vmem:[#allocation13 + $0x10] sm:$0xff]
    %v228 = vld [vmem:[#allocation13 + $0x18] sm:$0xff]
    %v229 = vld [vmem:[#allocation13 + $0x20] sm:$0xff]
    %v230 = vld [vmem:[#allocation13 + $0x28] sm:$0xff]
    %v231 = vld [vmem:[#allocation13 + $0x30] sm:$0xff]
    %v232 = vld [vmem:[#allocation13 + $0x38] sm:$0xff]
    %v233 = vld [vmem:[#allocation13 + $0x40] sm:$0xff]
    %v234 = vld [vmem:[#allocation13 + $0x48] sm:$0xff]
    %v235 = vld [vmem:[#allocation13 + $0x50] sm:$0xff]
    %v236 = vld [vmem:[#allocation13 + $0x58] sm:$0xff]
    %v237 = vld [vmem:[#allocation13 + $0x60] sm:$0xff]
    %v238 = vld [vmem:[#allocation13 + $0x68] sm:$0xff]
    %v239 = vld [vmem:[#allocation13 + $0x70] sm:$0xff]
    %v240 = vld [vmem:[#allocation13 + $0x78] sm:$0xff]
    %v241 = vld [vmem:[#allocation13 + $0x80] sm:$0xff]
    %v242 = vld [vmem:[#allocation13 + $0x88] sm:$0xff]
    %v243 = vld [vmem:[#allocation13 + $0x90] sm:$0xff]
    %v244 = vld [vmem:[#allocation13 + $0x98] sm:$0xff]
    %v245 = vld [vmem:[#allocation13 + $0xa0] sm:$0xff]
    %v246 = vld [vmem:[#allocation13 + $0xa8] sm:$0xff]
    %v247 = vld [vmem:[#allocation13 + $0xb0] sm:$0xff]
    %v248 = vld [vmem:[#allocation13 + $0xb8] sm:$0xff]
    %v249 = vld [vmem:[#allocation13 + $0xc0] sm:$0xff]
    %v250 = vld [vmem:[#allocation13 + $0xc8] sm:$0xff]
    %v251 = vld [vmem:[#allocation13 + $0xd0] sm:$0xff]
    %v252 = vld [vmem:[#allocation13 + $0xd8] sm:$0xff]
    %v253 = vld [vmem:[#allocation13 + $0xe0] sm:$0xff]
    %v254 = vld [vmem:[#allocation13 + $0xe8] sm:$0xff]
    %v255 = vld [vmem:[#allocation13 + $0xf0] sm:$0xff]
    %v256 = vld [vmem:[#allocation13 + $0xf8] sm:$0xff]
    %v257 = vld [vmem:[#allocation13 + $0x100] sm:$0xff]
    %v258 = vld [vmem:[#allocation13 + $0x108] sm:$0xff]
    %v259 = vld [vmem:[#allocation13 + $0x110] sm:$0xff]
    %v260 = vld [vmem:[#allocation13 + $0x118] sm:$0xff]
    %v261 = vld [vmem:[#allocation13 + $0x120] sm:$0xff]
    %v262 = vld [vmem:[#allocation13 + $0x128] sm:$0xff]
    %v263 = vld [vmem:[#allocation13 + $0x130] sm:$0xff]
    %v264 = vld [vmem:[#allocation13 + $0x138] sm:$0xff]
    %v265 = vld [vmem:[#allocation13 + $0x140] sm:$0xff]
    %v266 = vld [vmem:[#allocation13 + $0x148] sm:$0xff]
    %v267 = vld [vmem:[#allocation13 + $0x150] sm:$0xff]
    %v268 = vld [vmem:[#allocation13 + $0x158] sm:$0xff]
    %v269 = vld [vmem:[#allocation13 + $0x160] sm:$0xff]
    %v270 = vld [vmem:[#allocation13 + $0x168] sm:$0xff]
    %v271 = vld [vmem:[#allocation13 + $0x170] sm:$0xff]
    %v272 = vld [vmem:[#allocation13 + $0x178] sm:$0xff]
    %v273 = vld [vmem:[#allocation13 + $0x180] sm:$0xff]
    %v274 = vld [vmem:[#allocation13 + $0x188] sm:$0xff]
    %v275 = vld [vmem:[#allocation13 + $0x190] sm:$0xff]
    %v276 = vld [vmem:[#allocation13 + $0x198] sm:$0xff]
    %v277 = vld [vmem:[#allocation13 + $0x1a0] sm:$0xff]
    %v278 = vld [vmem:[#allocation13 + $0x1a8] sm:$0xff]
    %v279 = vld [vmem:[#allocation13 + $0x1b0] sm:$0xff]
    %v280 = vld [vmem:[#allocation13 + $0x1b8] sm:$0xff]
    %v281 = vld [vmem:[#allocation13 + $0x1c0] sm:$0xff]
    %v282 = vld [vmem:[#allocation13 + $0x1c8] sm:$0xff]
    %v283 = vld [vmem:[#allocation13 + $0x1d0] sm:$0xff]
    %v284 = vld [vmem:[#allocation13 + $0x1d8] sm:$0xff]
    %v285 = vld [vmem:[#allocation13 + $0x1e0] sm:$0xff]
    %v286 = vld [vmem:[#allocation13 + $0x1e8] sm:$0xff]
    %v287 = vld [vmem:[#allocation13 + $0x1f0] sm:$0xff]
    %v288 = vld [vmem:[#allocation13 + $0x1f8] sm:$0xff]
    %v289 = vld [vmem:[%s6] sm:$0xf]
    %v291 = vlaneseq
    %v292 = vshrl.u32 %v291, 7
    %v293 = vsub.s32 0, %v292
    %v294 = vrot.slane %v289, %v293
    %v295 = vlaneseq
    %v296 = vshrl.u32 %v295, 7
    %v297 = vsub.s32 1, %v296
    %v298 = vrot.slane %v289, %v297
    %v299 = vlaneseq
    %v300 = vshrl.u32 %v299, 7
    %v301 = vsub.s32 2, %v300
    %v302 = vrot.slane %v289, %v301
    %v303 = vlaneseq
    %v304 = vshrl.u32 %v303, 7
    %v305 = vsub.s32 3, %v304
    %v306 = vrot.slane %v289, %v305
    %v311 = vld [vmem:[%s0] sm:$0xff]
    %v312 = vld [vmem:[%s0 + $0x8] sm:$0xff]
    %v313 = vld [vmem:[%s0 + $0x10] sm:$0xff]
    %v314 = vld [vmem:[%s0 + $0x18] sm:$0xff]
    %v315 = vld [vmem:[%s0 + $0x20] sm:$0xff]
    %v316 = vld [vmem:[%s0 + $0x28] sm:$0xff]
    %v317 = vld [vmem:[%s0 + $0x30] sm:$0xff]
    %v318 = vld [vmem:[%s0 + $0x38] sm:$0xff]
    %v319 = vld [vmem:[#allocation8] sm:$0xff]
    %v320 = vld [vmem:[#allocation8 + $0x8] sm:$0xff]
    %v321 = vld [vmem:[#allocation8 + $0x10] sm:$0xff]
    %v322 = vld [vmem:[#allocation8 + $0x18] sm:$0xff]
    %v323 = vld [vmem:[#allocation8 + $0x20] sm:$0xff]
    %v324 = vld [vmem:[#allocation8 + $0x28] sm:$0xff]
    %v325 = vld [vmem:[#allocation8 + $0x30] sm:$0xff]
    %v326 = vld [vmem:[#allocation8 + $0x38] sm:$0xff]
    %v327 = vld [vmem:[#allocation8 + $0x40] sm:$0xff]
    %v328 = vld [vmem:[#allocation8 + $0x48] sm:$0xff]
    %v329 = vld [vmem:[#allocation8 + $0x50] sm:$0xff]
    %v330 = vld [vmem:[#allocation8 + $0x58] sm:$0xff]
    %v331 = vld [vmem:[#allocation8 + $0x60] sm:$0xff]
    %v332 = vld [vmem:[#allocation8 + $0x68] sm:$0xff]
    %v333 = vld [vmem:[#allocation8 + $0x70] sm:$0xff]
    %v334 = vld [vmem:[#allocation8 + $0x78] sm:$0xff]
    %v335 = vld [vmem:[#allocation8 + $0x80] sm:$0xff]
    %v336 = vld [vmem:[#allocation8 + $0x88] sm:$0xff]
    %v337 = vld [vmem:[#allocation8 + $0x90] sm:$0xff]
    %v338 = vld [vmem:[#allocation8 + $0x98] sm:$0xff]
    %v339 = vld [vmem:[#allocation8 + $0xa0] sm:$0xff]
    %v340 = vld [vmem:[#allocation8 + $0xa8] sm:$0xff]
    %v341 = vld [vmem:[#allocation8 + $0xb0] sm:$0xff]
    %v342 = vld [vmem:[#allocation8 + $0xb8] sm:$0xff]
    %v343 = vld [vmem:[#allocation8 + $0xc0] sm:$0xff]
    %v344 = vld [vmem:[#allocation8 + $0xc8] sm:$0xff]
    %v345 = vld [vmem:[#allocation8 + $0xd0] sm:$0xff]
    %v346 = vld [vmem:[#allocation8 + $0xd8] sm:$0xff]
    %v347 = vld [vmem:[#allocation8 + $0xe0] sm:$0xff]
    %v348 = vld [vmem:[#allocation8 + $0xe8] sm:$0xff]
    %v349 = vld [vmem:[#allocation8 + $0xf0] sm:$0xff]
    %v350 = vld [vmem:[#allocation8 + $0xf8] sm:$0xff]
    %v351 = vld [vmem:[#allocation8 + $0x100] sm:$0xff]
    %v352 = vld [vmem:[#allocation8 + $0x108] sm:$0xff]
    %v353 = vld [vmem:[#allocation8 + $0x110] sm:$0xff]
    %v354 = vld [vmem:[#allocation8 + $0x118] sm:$0xff]
    %v355 = vld [vmem:[#allocation8 + $0x120] sm:$0xff]
    %v356 = vld [vmem:[#allocation8 + $0x128] sm:$0xff]
    %v357 = vld [vmem:[#allocation8 + $0x130] sm:$0xff]
    %v358 = vld [vmem:[#allocation8 + $0x138] sm:$0xff]
    %v359 = vld [vmem:[#allocation8 + $0x140] sm:$0xff]
    %v360 = vld [vmem:[#allocation8 + $0x148] sm:$0xff]
    %v361 = vld [vmem:[#allocation8 + $0x150] sm:$0xff]
    %v362 = vld [vmem:[#allocation8 + $0x158] sm:$0xff]
    %v363 = vld [vmem:[#allocation8 + $0x160] sm:$0xff]
    %v364 = vld [vmem:[#allocation8 + $0x168] sm:$0xff]
    %v365 = vld [vmem:[#allocation8 + $0x170] sm:$0xff]
    %v366 = vld [vmem:[#allocation8 + $0x178] sm:$0xff]
    %v367 = vld [vmem:[#allocation8 + $0x180] sm:$0xff]
    %v368 = vld [vmem:[#allocation8 + $0x188] sm:$0xff]
    %v369 = vld [vmem:[#allocation8 + $0x190] sm:$0xff]
    %v370 = vld [vmem:[#allocation8 + $0x198] sm:$0xff]
    %v371 = vld [vmem:[#allocation8 + $0x1a0] sm:$0xff]
    %v372 = vld [vmem:[#allocation8 + $0x1a8] sm:$0xff]
    %v373 = vld [vmem:[#allocation8 + $0x1b0] sm:$0xff]
    %v374 = vld [vmem:[#allocation8 + $0x1b8] sm:$0xff]
    %v375 = vld [vmem:[#allocation8 + $0x1c0] sm:$0xff]
    %v376 = vld [vmem:[#allocation8 + $0x1c8] sm:$0xff]
    %v377 = vld [vmem:[#allocation8 + $0x1d0] sm:$0xff]
    %v378 = vld [vmem:[#allocation8 + $0x1d8] sm:$0xff]
    %v379 = vld [vmem:[#allocation8 + $0x1e0] sm:$0xff]
    %v380 = vld [vmem:[#allocation8 + $0x1e8] sm:$0xff]
    %v381 = vld [vmem:[#allocation8 + $0x1f0] sm:$0xff]
    %v382 = vld [vmem:[#allocation8 + $0x1f8] sm:$0xff]
    %v383 = vld [vmem:[%s3] sm:$0xf]
    %v385 = vlaneseq
    %v386 = vshrl.u32 %v385, 7
    %v387 = vsub.s32 0, %v386
    %v388 = vrot.slane %v383, %v387
    %v389 = vlaneseq
    %v390 = vshrl.u32 %v389, 7
    %v391 = vsub.s32 1, %v390
    %v392 = vrot.slane %v383, %v391
    %v393 = vlaneseq
    %v394 = vshrl.u32 %v393, 7
    %v395 = vsub.s32 2, %v394
    %v396 = vrot.slane %v383, %v395
    %v397 = vlaneseq
    %v398 = vshrl.u32 %v397, 7
    %v399 = vsub.s32 3, %v398
    %v400 = vrot.slane %v383, %v399
    %405 = vmatprep.subr.mxu0 %v320
    %406 = vmatpush1.msra.mxu0 %v319
    %407 = vmatprep.subr.mxu0 %v324
    %408 = vmatpush1.msra.mxu0 %v323
    %409 = vmatprep.subr.mxu0 %v328
    %410 = vmatpush1.msra.mxu0 %v327
    %411 = vmatprep.subr.mxu0 %v332
    %412 = vmatpush1.msra.mxu0 %v331
    %413 = vmatprep.subr.mxu0 %v336
    %414 = vmatpush1.msra.mxu0 %v335
    %415 = vmatprep.subr.mxu0 %v340
    %416 = vmatpush1.msra.mxu0 %v339
    %417 = vmatprep.subr.mxu0 %v344
    %418 = vmatpush1.msra.mxu0 %v343
    %419 = vmatprep.subr.mxu0 %v348
    %420 = vmatpush1.msra.mxu0 %v347
    %421 = vmatprep.subr.mxu0 %v352
    %422 = vmatpush1.msra.mxu0 %v351
    %423 = vmatprep.subr.mxu0 %v356
    %424 = vmatpush1.msra.mxu0 %v355
    %425 = vmatprep.subr.mxu0 %v360
    %426 = vmatpush1.msra.mxu0 %v359
    %427 = vmatprep.subr.mxu0 %v364
    %428 = vmatpush1.msra.mxu0 %v363
    %429 = vmatprep.subr.mxu0 %v368
    %430 = vmatpush1.msra.mxu0 %v367
    %431 = vmatprep.subr.mxu0 %v372
    %432 = vmatpush1.msra.mxu0 %v371
    %433 = vmatprep.subr.mxu0 %v376
    %434 = vmatpush1.msra.mxu0 %v375
    %435 = vmatprep.subr.mxu0 %v380
    %436 = vmatpush1.msra.mxu0 %v379
    %437 = vmatprep.subr.mxu0 0.0
    %438 = vmatpush1.msra.mxu0 0.0
    %439 = vmatprep.subr.mxu0 0.0
    %440 = vmatpush1.msra.mxu0 0.0
    %441 = vmatprep.subr.mxu0 0.0
    %442 = vmatpush1.msra.mxu0 0.0
    %443 = vmatprep.subr.mxu0 0.0
    %444 = vmatpush1.msra.mxu0 0.0
    %445 = vmatprep.subr.mxu0 0.0
    %446 = vmatpush1.msra.mxu0 0.0
    %447 = vmatprep.subr.mxu0 0.0
    %448 = vmatpush1.msra.mxu0 0.0
    %449 = vmatprep.subr.mxu0 0.0
    %450 = vmatpush1.msra.mxu0 0.0
    %451 = vmatprep.subr.mxu0 0.0
    %452 = vmatpush1.msra.mxu0 0.0
    %453 = vmatprep.subr.mxu0 0.0
    %454 = vmatpush1.msra.mxu0 0.0
    %455 = vmatprep.subr.mxu0 0.0
    %456 = vmatpush1.msra.mxu0 0.0
    %457 = vmatprep.subr.mxu0 0.0
    %458 = vmatpush1.msra.mxu0 0.0
    %459 = vmatprep.subr.mxu0 0.0
    %460 = vmatpush1.msra.mxu0 0.0
    %461 = vmatprep.subr.mxu0 0.0
    %462 = vmatpush1.msra.mxu0 0.0
    %463 = vmatprep.subr.mxu0 0.0
    %464 = vmatpush1.msra.mxu0 0.0
    %465 = vmatprep.subr.mxu0 0.0
    %466 = vmatpush1.msra.mxu0 0.0
    %467 = vmatprep.subr.mxu0 0.0
    %468 = vmatpush1.msra.mxu0 0.0
    %469 = vmatprep.mubr.f32.mxu0 0.0
    %470 = vmatmul.mubr.f32.gmra.mrb[0].mxu0 %v311
    %v471 = vpop.f32.mrb[0].mxu0
    %v472 = vadd.f32 %v388, %v471
    %v473 = vpop.f32.mrb[0].mxu0
    %v474 = vadd.f32 %v392, %v473
    %475 = vmatprep.mubr.f32.mxu0 0.0
    %476 = vmatmul.mubr.f32.gmra.mrb[0].mxu0 %v312
    %v477 = vpop.f32.mrb[0].mxu0
    %v478 = vadd.f32 %v388, %v477
    %v479 = vpop.f32.mrb[0].mxu0
    %v480 = vadd.f32 %v392, %v479
    %481 = vmatprep.mubr.f32.mxu0 0.0
    %482 = vmatmul.mubr.f32.gmra.mrb[0].mxu0 %v313
    %v483 = vpop.f32.mrb[0].mxu0
    %v484 = vadd.f32 %v388, %v483
    %v485 = vpop.f32.mrb[0].mxu0
    %v486 = vadd.f32 %v392, %v485
    %487 = vmatprep.mubr.f32.mxu0 0.0
    %488 = vmatmul.mubr.f32.gmra.mrb[0].mxu0 %v314
    %v489 = vpop.f32.mrb[0].mxu0
    %v490 = vadd.f32 %v388, %v489
    %v491 = vpop.f32.mrb[0].mxu0
    %v492 = vadd.f32 %v392, %v491
    %493 = vmatprep.mubr.f32.mxu0 0.0
    %494 = vmatmul.mubr.f32.gmra.mrb[0].mxu0 %v315
    %v495 = vpop.f32.mrb[0].mxu0
    %v496 = vadd.f32 %v388, %v495
    %v497 = vpop.f32.mrb[0].mxu0
    %v498 = vadd.f32 %v392, %v497
    %499 = vmatprep.mubr.f32.mxu0 0.0
    %500 = vmatmul.mubr.f32.gmra.mrb[0].mxu0 %v316
    %v501 = vpop.f32.mrb[0].mxu0
    %v502 = vadd.f32 %v388, %v501
    %v503 = vpop.f32.mrb[0].mxu0
    %v504 = vadd.f32 %v392, %v503
    %505 = vmatprep.mubr.f32.mxu0 0.0
    %506 = vmatmul.mubr.f32.gmra.mrb[0].mxu0 %v317
    %v507 = vpop.f32.mrb[0].mxu0
    %v508 = vadd.f32 %v388, %v507
    %v509 = vpop.f32.mrb[0].mxu0
    %v510 = vadd.f32 %v392, %v509
    %511 = vmatprep.mubr.f32.mxu0 0.0
    %512 = vmatmul.mubr.f32.gmra.mrb[0].mxu0 %v318
    %v513 = vpop.f32.mrb[0].mxu0
    %v514 = vadd.f32 %v388, %v513
    %v515 = vpop.f32.mrb[0].mxu0
    %v516 = vadd.f32 %v392, %v515
    %517 = vdwg.mxu0
    %518 = vmatprep.subr.mxu0 %v322
    %519 = vmatpush1.msra.mxu0 %v321
    %520 = vmatprep.subr.mxu0 %v326
    %521 = vmatpush1.msra.mxu0 %v325
    %522 = vmatprep.subr.mxu0 %v330
    %523 = vmatpush1.msra.mxu0 %v329
    %524 = vmatprep.subr.mxu0 %v334
    %525 = vmatpush1.msra.mxu0 %v333
    %526 = vmatprep.subr.mxu0 %v338
    %527 = vmatpush1.msra.mxu0 %v337
    %528 = vmatprep.subr.mxu0 %v342
    %529 = vmatpush1.msra.mxu0 %v341
    %530 = vmatprep.subr.mxu0 %v346
    %531 = vmatpush1.msra.mxu0 %v345
    %532 = vmatprep.subr.mxu0 %v350
    %533 = vmatpush1.msra.mxu0 %v349
    %534 = vmatprep.subr.mxu0 %v354
    %535 = vmatpush1.msra.mxu0 %v353
    %536 = vmatprep.subr.mxu0 %v358
    %537 = vmatpush1.msra.mxu0 %v357
    %538 = vmatprep.subr.mxu0 %v362
    %539 = vmatpush1.msra.mxu0 %v361
    %540 = vmatprep.subr.mxu0 %v366
    %541 = vmatpush1.msra.mxu0 %v365
    %542 = vmatprep.subr.mxu0 %v370
    %543 = vmatpush1.msra.mxu0 %v369
    %544 = vmatprep.subr.mxu0 %v374
    %545 = vmatpush1.msra.mxu0 %v373
    %546 = vmatprep.subr.mxu0 %v378
    %547 = vmatpush1.msra.mxu0 %v377
    %548 = vmatprep.subr.mxu0 %v382
    %549 = vmatpush1.msra.mxu0 %v381
    %550 = vmatprep.subr.mxu0 0.0
    %551 = vmatpush1.msra.mxu0 0.0
    %552 = vmatprep.subr.mxu0 0.0
    %553 = vmatpush1.msra.mxu0 0.0
    %554 = vmatprep.subr.mxu0 0.0
    %555 = vmatpush1.msra.mxu0 0.0
    %556 = vmatprep.subr.mxu0 0.0
    %557 = vmatpush1.msra.mxu0 0.0
    %558 = vmatprep.subr.mxu0 0.0
    %559 = vmatpush1.msra.mxu0 0.0
    %560 = vmatprep.subr.mxu0 0.0
    %561 = vmatpush1.msra.mxu0 0.0
    %562 = vmatprep.subr.mxu0 0.0
    %563 = vmatpush1.msra.mxu0 0.0
    %564 = vmatprep.subr.mxu0 0.0
    %565 = vmatpush1.msra.mxu0 0.0
    %566 = vmatprep.subr.mxu0 0.0
    %567 = vmatpush1.msra.mxu0 0.0
    %568 = vmatprep.subr.mxu0 0.0
    %569 = vmatpush1.msra.mxu0 0.0
    %570 = vmatprep.subr.mxu0 0.0
    %571 = vmatpush1.msra.mxu0 0.0
    %572 = vmatprep.subr.mxu0 0.0
    %573 = vmatpush1.msra.mxu0 0.0
    %574 = vmatprep.subr.mxu0 0.0
    %575 = vmatpush1.msra.mxu0 0.0
    %576 = vmatprep.subr.mxu0 0.0
    %577 = vmatpush1.msra.mxu0 0.0
    %578 = vmatprep.subr.mxu0 0.0
    %579 = vmatpush1.msra.mxu0 0.0
    %580 = vmatprep.subr.mxu0 0.0
    %581 = vmatpush1.msra.mxu0 0.0
    %582 = vmatprep.mubr.f32.mxu0 0.0
    %583 = vmatmul.mubr.f32.gmra.mrb[0].mxu0 %v311
    %v584 = vpop.f32.mrb[0].mxu0
    %v585 = vadd.f32 %v396, %v584
    %v586 = vpop.f32.mrb[0].mxu0
    %v587 = vadd.f32 %v400, %v586
    %588 = vmatprep.mubr.f32.mxu0 0.0
    %589 = vmatmul.mubr.f32.gmra.mrb[0].mxu0 %v312
    %v590 = vpop.f32.mrb[0].mxu0
    %v591 = vadd.f32 %v396, %v590
    %v592 = vpop.f32.mrb[0].mxu0
    %v593 = vadd.f32 %v400, %v592
    %594 = vmatprep.mubr.f32.mxu0 0.0
    %595 = vmatmul.mubr.f32.gmra.mrb[0].mxu0 %v313
    %v596 = vpop.f32.mrb[0].mxu0
    %v597 = vadd.f32 %v396, %v596
    %v598 = vpop.f32.mrb[0].mxu0
    %v599 = vadd.f32 %v400, %v598
    %600 = vmatprep.mubr.f32.mxu0 0.0
    %601 = vmatmul.mubr.f32.gmra.mrb[0].mxu0 %v314
    %v602 = vpop.f32.mrb[0].mxu0
    %v603 = vadd.f32 %v396, %v602
    %v604 = vpop.f32.mrb[0].mxu0
    %v605 = vadd.f32 %v400, %v604
    %606 = vmatprep.mubr.f32.mxu0 0.0
    %607 = vmatmul.mubr.f32.gmra.mrb[0].mxu0 %v315
    %v608 = vpop.f32.mrb[0].mxu0
    %v609 = vadd.f32 %v396, %v608
    %v610 = vpop.f32.mrb[0].mxu0
    %v611 = vadd.f32 %v400, %v610
    %612 = vmatprep.mubr.f32.mxu0 0.0
    %613 = vmatmul.mubr.f32.gmra.mrb[0].mxu0 %v316
    %v614 = vpop.f32.mrb[0].mxu0
    %v615 = vadd.f32 %v396, %v614
    %v616 = vpop.f32.mrb[0].mxu0
    %v617 = vadd.f32 %v400, %v616
    %618 = vmatprep.mubr.f32.mxu0 0.0
    %619 = vmatmul.mubr.f32.gmra.mrb[0].mxu0 %v317
    %v620 = vpop.f32.mrb[0].mxu0
    %v621 = vadd.f32 %v396, %v620
    %v622 = vpop.f32.mrb[0].mxu0
    %v623 = vadd.f32 %v400, %v622
    %624 = vmatprep.mubr.f32.mxu0 0.0
    %625 = vmatmul.mubr.f32.gmra.mrb[0].mxu0 %v318
    %v626 = vpop.f32.mrb[0].mxu0
    %v627 = vadd.f32 %v396, %v626
    %v628 = vpop.f32.mrb[0].mxu0
    %v629 = vadd.f32 %v400, %v628
    %630 = vdwg.mxu0
    %631 = vst [vmem:[#allocation2] sm:$0xff] %v472
    %632 = vst [vmem:[#allocation2 + $0x8] sm:$0xff] %v474
    %633 = vst [vmem:[#allocation2 + $0x10] sm:$0xff] %v585
    %634 = vst [vmem:[#allocation2 + $0x18] sm:$0xff] %v587
    %635 = vst [vmem:[#allocation2 + $0x20] sm:$0xff] %v478
    %636 = vst [vmem:[#allocation2 + $0x28] sm:$0xff] %v480
    %637 = vst [vmem:[#allocation2 + $0x30] sm:$0xff] %v591
    %638 = vst [vmem:[#allocation2 + $0x38] sm:$0xff] %v593
    %639 = vst [vmem:[#allocation2 + $0x40] sm:$0xff] %v484
    %640 = vst [vmem:[#allocation2 + $0x48] sm:$0xff] %v486
    %641 = vst [vmem:[#allocation2 + $0x50] sm:$0xff] %v597
    %642 = vst [vmem:[#allocation2 + $0x58] sm:$0xff] %v599
    %643 = vst [vmem:[#allocation2 + $0x60] sm:$0xff] %v490
    %644 = vst [vmem:[#allocation2 + $0x68] sm:$0xff] %v492
    %645 = vst [vmem:[#allocation2 + $0x70] sm:$0xff] %v603
    %646 = vst [vmem:[#allocation2 + $0x78] sm:$0xff] %v605
    %647 = vst [vmem:[#allocation2 + $0x80] sm:$0xff] %v496
    %648 = vst [vmem:[#allocation2 + $0x88] sm:$0xff] %v498
    %649 = vst [vmem:[#allocation2 + $0x90] sm:$0xff] %v609
    %650 = vst [vmem:[#allocation2 + $0x98] sm:$0xff] %v611
    %651 = vst [vmem:[#allocation2 + $0xa0] sm:$0xff] %v502
    %652 = vst [vmem:[#allocation2 + $0xa8] sm:$0xff] %v504
    %653 = vst [vmem:[#allocation2 + $0xb0] sm:$0xff] %v615
    %654 = vst [vmem:[#allocation2 + $0xb8] sm:$0xff] %v617
    %655 = vst [vmem:[#allocation2 + $0xc0] sm:$0xff] %v508
    %656 = vst [vmem:[#allocation2 + $0xc8] sm:$0xff] %v510
    %657 = vst [vmem:[#allocation2 + $0xd0] sm:$0xff] %v621
    %658 = vst [vmem:[#allocation2 + $0xd8] sm:$0xff] %v623
    %659 = vst [vmem:[#allocation2 + $0xe0] sm:$0xff] %v514
    %660 = vst [vmem:[#allocation2 + $0xe8] sm:$0xff] %v516
    %661 = vst [vmem:[#allocation2 + $0xf0] sm:$0xff] %v627
    %662 = vst [vmem:[#allocation2 + $0xf8] sm:$0xff] %v629
    %v663 = vld [vmem:[#allocation3] sm:$0xff]
    %v664 = vld [vmem:[#allocation4] sm:$0xff]
    %v665 = vld [vmem:[#allocation5] sm:$0xff]
    %v666 = vld [vmem:[#allocation6] sm:$0xff]
    %v667 = vld [vmem:[#allocation2] sm:$0xff]
    %v668 = vld [vmem:[#allocation2 + $0x8] sm:$0xff]
    %v669 = vld [vmem:[#allocation2 + $0x10] sm:$0xff]
    %v670 = vld [vmem:[#allocation2 + $0x18] sm:$0xff]
    %671 = vmatprep.subr.mxu0 %v98
    %672 = vmatpush1.msra.mxu0 %v97
    %673 = vmatprep.subr.mxu0 %v102
    %674 = vmatpush1.msra.mxu0 %v101
    %675 = vmatprep.subr.mxu0 %v106
    %676 = vmatpush1.msra.mxu0 %v105
    %677 = vmatprep.subr.mxu0 %v110
    %678 = vmatpush1.msra.mxu0 %v109
    %679 = vmatprep.subr.mxu0 %v114
    %680 = vmatpush1.msra.mxu0 %v113
    %681 = vmatprep.subr.mxu0 %v118
    %682 = vmatpush1.msra.mxu0 %v117
    %683 = vmatprep.subr.mxu0 %v122
    %684 = vmatpush1.msra.mxu0 %v121
    %685 = vmatprep.subr.mxu0 %v126
    %686 = vmatpush1.msra.mxu0 %v125
    %687 = vmatprep.subr.mxu0 %v130
    %688 = vmatpush1.msra.mxu0 %v129
    %689 = vmatprep.subr.mxu0 %v134
    %690 = vmatpush1.msra.mxu0 %v133
    %691 = vmatprep.subr.mxu0 %v138
    %692 = vmatpush1.msra.mxu0 %v137
    %693 = vmatprep.subr.mxu0 %v142
    %694 = vmatpush1.msra.mxu0 %v141
    %695 = vmatprep.subr.mxu0 %v146
    %696 = vmatpush1.msra.mxu0 %v145
    %697 = vmatprep.subr.mxu0 %v150
    %698 = vmatpush1.msra.mxu0 %v149
    %699 = vmatprep.subr.mxu0 %v154
    %700 = vmatpush1.msra.mxu0 %v153
    %701 = vmatprep.subr.mxu0 %v158
    %702 = vmatpush1.msra.mxu0 %v157
    %703 = vmatprep.subr.mxu0 0.0
    %704 = vmatpush1.msra.mxu0 0.0
    %705 = vmatprep.subr.mxu0 0.0
    %706 = vmatpush1.msra.mxu0 0.0
    %707 = vmatprep.subr.mxu0 0.0
    %708 = vmatpush1.msra.mxu0 0.0
    %709 = vmatprep.subr.mxu0 0.0
    %710 = vmatpush1.msra.mxu0 0.0
    %711 = vmatprep.subr.mxu0 0.0
    %712 = vmatpush1.msra.mxu0 0.0
    %713 = vmatprep.subr.mxu0 0.0
    %714 = vmatpush1.msra.mxu0 0.0
    %715 = vmatprep.subr.mxu0 0.0
    %716 = vmatpush1.msra.mxu0 0.0
    %717 = vmatprep.subr.mxu0 0.0
    %718 = vmatpush1.msra.mxu0 0.0
    %719 = vmatprep.subr.mxu0 0.0
    %720 = vmatpush1.msra.mxu0 0.0
    %721 = vmatprep.subr.mxu0 0.0
    %722 = vmatpush1.msra.mxu0 0.0
    %723 = vmatprep.subr.mxu0 0.0
    %724 = vmatpush1.msra.mxu0 0.0
    %725 = vmatprep.subr.mxu0 0.0
    %726 = vmatpush1.msra.mxu0 0.0
    %727 = vmatprep.subr.mxu0 0.0
    %728 = vmatpush1.msra.mxu0 0.0
    %729 = vmatprep.subr.mxu0 0.0
    %730 = vmatpush1.msra.mxu0 0.0
    %731 = vmatprep.subr.mxu0 0.0
    %732 = vmatpush1.msra.mxu0 0.0
    %733 = vmatprep.subr.mxu0 0.0
    %734 = vmatpush1.msra.mxu0 0.0
    %735 = vmatprep.mubr.f32.mxu0 0.0
    %736 = vmatmul.mubr.f32.gmra.mrb[0].mxu0 %v663
    %v737 = vpop.f32.mrb[0].mxu0
    %v738 = vadd.f32 0.0, %v737
    %v739 = vpop.f32.mrb[0].mxu0
    %v740 = vadd.f32 0.0, %v739
    %741 = vdwg.mxu0
    %742 = vmatprep.subr.mxu0 %v100
    %743 = vmatpush1.msra.mxu0 %v99
    %744 = vmatprep.subr.mxu0 %v104
    %745 = vmatpush1.msra.mxu0 %v103
    %746 = vmatprep.subr.mxu0 %v108
    %747 = vmatpush1.msra.mxu0 %v107
    %748 = vmatprep.subr.mxu0 %v112
    %749 = vmatpush1.msra.mxu0 %v111
    %750 = vmatprep.subr.mxu0 %v116
    %751 = vmatpush1.msra.mxu0 %v115
    %752 = vmatprep.subr.mxu0 %v120
    %753 = vmatpush1.msra.mxu0 %v119
    %754 = vmatprep.subr.mxu0 %v124
    %755 = vmatpush1.msra.mxu0 %v123
    %756 = vmatprep.subr.mxu0 %v128
    %757 = vmatpush1.msra.mxu0 %v127
    %758 = vmatprep.subr.mxu0 %v132
    %759 = vmatpush1.msra.mxu0 %v131
    %760 = vmatprep.subr.mxu0 %v136
    %761 = vmatpush1.msra.mxu0 %v135
    %762 = vmatprep.subr.mxu0 %v140
    %763 = vmatpush1.msra.mxu0 %v139
    %764 = vmatprep.subr.mxu0 %v144
    %765 = vmatpush1.msra.mxu0 %v143
    %766 = vmatprep.subr.mxu0 %v148
    %767 = vmatpush1.msra.mxu0 %v147
    %768 = vmatprep.subr.mxu0 %v152
    %769 = vmatpush1.msra.mxu0 %v151
    %770 = vmatprep.subr.mxu0 %v156
    %771 = vmatpush1.msra.mxu0 %v155
    %772 = vmatprep.subr.mxu0 %v160
    %773 = vmatpush1.msra.mxu0 %v159
    %774 = vmatprep.subr.mxu0 0.0
    %775 = vmatpush1.msra.mxu0 0.0
    %776 = vmatprep.subr.mxu0 0.0
    %777 = vmatpush1.msra.mxu0 0.0
    %778 = vmatprep.subr.mxu0 0.0
    %779 = vmatpush1.msra.mxu0 0.0
    %780 = vmatprep.subr.mxu0 0.0
    %781 = vmatpush1.msra.mxu0 0.0
    %782 = vmatprep.subr.mxu0 0.0
    %783 = vmatpush1.msra.mxu0 0.0
    %784 = vmatprep.subr.mxu0 0.0
    %785 = vmatpush1.msra.mxu0 0.0
    %786 = vmatprep.subr.mxu0 0.0
    %787 = vmatpush1.msra.mxu0 0.0
    %788 = vmatprep.subr.mxu0 0.0
    %789 = vmatpush1.msra.mxu0 0.0
    %790 = vmatprep.subr.mxu0 0.0
    %791 = vmatpush1.msra.mxu0 0.0
    %792 = vmatprep.subr.mxu0 0.0
    %793 = vmatpush1.msra.mxu0 0.0
    %794 = vmatprep.subr.mxu0 0.0
    %795 = vmatpush1.msra.mxu0 0.0
    %796 = vmatprep.subr.mxu0 0.0
    %797 = vmatpush1.msra.mxu0 0.0
    %798 = vmatprep.subr.mxu0 0.0
    %799 = vmatpush1.msra.mxu0 0.0
    %800 = vmatprep.subr.mxu0 0.0
    %801 = vmatpush1.msra.mxu0 0.0
    %802 = vmatprep.subr.mxu0 0.0
    %803 = vmatpush1.msra.mxu0 0.0
    %804 = vmatprep.subr.mxu0 0.0
    %805 = vmatpush1.msra.mxu0 0.0
    %806 = vmatprep.mubr.f32.mxu0 0.0
    %807 = vmatmul.mubr.f32.gmra.mrb[0].mxu0 %v663
    %v808 = vpop.f32.mrb[0].mxu0
    %v809 = vadd.f32 0.0, %v808
    %v810 = vpop.f32.mrb[0].mxu0
    %v811 = vadd.f32 0.0, %v810
    %812 = vdwg.mxu0
    %v813 = vadd.f32 %v667, %v738
    %v814 = vadd.f32 %v668, %v740
    %v815 = vadd.f32 %v669, %v809
    %v816 = vadd.f32 %v670, %v811
    %v817 = vmul.f32 %v813, 0.5
    %v818 = vtanh.pop %v817
    %v819 = vmul.f32 %v818, 0.5
    %v820 = vadd.f32 %v819, 0.5
    %v821 = vmul.f32 %v814, 0.5
    %v822 = vtanh.pop %v821
    %v823 = vmul.f32 %v822, 0.5
    %v824 = vadd.f32 %v823, 0.5
    %v825 = vtanh.pop %v815
    %v826 = vmul.f32 %v816, 0.5
    %v827 = vtanh.pop %v826
    %v828 = vmul.f32 %v827, 0.5
    %v829 = vadd.f32 %v828, 0.5
    %v830 = vmul.f32 %v824, %v664
    %v831 = vmul.f32 %v820, %v825
    %v832 = vadd.f32 %v830, %v831
    %v833 = vtanh.pop %v832
    %v834 = vmul.f32 %v829, %v833
    %835 = vmatprep.subr.mxu0 %v226
    %836 = vmatpush1.msra.mxu0 %v225
    %837 = vmatprep.subr.mxu0 %v230
    %838 = vmatpush1.msra.mxu0 %v229
    %839 = vmatprep.subr.mxu0 %v234
    %840 = vmatpush1.msra.mxu0 %v233
    %841 = vmatprep.subr.mxu0 %v238
    %842 = vmatpush1.msra.mxu0 %v237
    %843 = vmatprep.subr.mxu0 %v242
    %844 = vmatpush1.msra.mxu0 %v241
    %845 = vmatprep.subr.mxu0 %v246
    %846 = vmatpush1.msra.mxu0 %v245
    %847 = vmatprep.subr.mxu0 %v250
    %848 = vmatpush1.msra.mxu0 %v249
    %849 = vmatprep.subr.mxu0 %v254
    %850 = vmatpush1.msra.mxu0 %v253
    %851 = vmatprep.subr.mxu0 %v258
    %852 = vmatpush1.msra.mxu0 %v257
    %853 = vmatprep.subr.mxu0 %v262
    %854 = vmatpush1.msra.mxu0 %v261
    %855 = vmatprep.subr.mxu0 %v266
    %856 = vmatpush1.msra.mxu0 %v265
    %857 = vmatprep.subr.mxu0 %v270
    %858 = vmatpush1.msra.mxu0 %v269
    %859 = vmatprep.subr.mxu0 %v274
    %860 = vmatpush1.msra.mxu0 %v273
    %861 = vmatprep.subr.mxu0 %v278
    %862 = vmatpush1.msra.mxu0 %v277
    %863 = vmatprep.subr.mxu0 %v282
    %864 = vmatpush1.msra.mxu0 %v281
    %865 = vmatprep.subr.mxu0 %v286
    %866 = vmatpush1.msra.mxu0 %v285
    %867 = vmatprep.subr.mxu0 0.0
    %868 = vmatpush1.msra.mxu0 0.0
    %869 = vmatprep.subr.mxu0 0.0
    %870 = vmatpush1.msra.mxu0 0.0
    %871 = vmatprep.subr.mxu0 0.0
    %872 = vmatpush1.msra.mxu0 0.0
    %873 = vmatprep.subr.mxu0 0.0
    %874 = vmatpush1.msra.mxu0 0.0
    %875 = vmatprep.subr.mxu0 0.0
    %876 = vmatpush1.msra.mxu0 0.0
    %877 = vmatprep.subr.mxu0 0.0
    %878 = vmatpush1.msra.mxu0 0.0
    %879 = vmatprep.subr.mxu0 0.0
    %880 = vmatpush1.msra.mxu0 0.0
    %881 = vmatprep.subr.mxu0 0.0
    %882 = vmatpush1.msra.mxu0 0.0
    %883 = vmatprep.subr.mxu0 0.0
    %884 = vmatpush1.msra.mxu0 0.0
    %885 = vmatprep.subr.mxu0 0.0
    %886 = vmatpush1.msra.mxu0 0.0
    %887 = vmatprep.subr.mxu0 0.0
    %888 = vmatpush1.msra.mxu0 0.0
    %889 = vmatprep.subr.mxu0 0.0
    %890 = vmatpush1.msra.mxu0 0.0
    %891 = vmatprep.subr.mxu0 0.0
    %892 = vmatpush1.msra.mxu0 0.0
    %893 = vmatprep.subr.mxu0 0.0
    %894 = vmatpush1.msra.mxu0 0.0
    %895 = vmatprep.subr.mxu0 0.0
    %896 = vmatpush1.msra.mxu0 0.0
    %897 = vmatprep.subr.mxu0 0.0
    %898 = vmatpush1.msra.mxu0 0.0
    %899 = vmatprep.mubr.f32.mxu0 0.0
    %900 = vmatmul.mubr.f32.gmra.mrb[0].mxu0 %v665
    %v901 = vpop.f32.mrb[0].mxu0
    %v902 = vadd.f32 0.0, %v901
    %v903 = vpop.f32.mrb[0].mxu0
    %v904 = vadd.f32 0.0, %v903
    %905 = vdwg.mxu0
    %906 = vmatprep.subr.mxu0 %v228
    %907 = vmatpush1.msra.mxu0 %v227
    %908 = vmatprep.subr.mxu0 %v232
    %909 = vmatpush1.msra.mxu0 %v231
    %910 = vmatprep.subr.mxu0 %v236
    %911 = vmatpush1.msra.mxu0 %v235
    %912 = vmatprep.subr.mxu0 %v240
    %913 = vmatpush1.msra.mxu0 %v239
    %914 = vmatprep.subr.mxu0 %v244
    %915 = vmatpush1.msra.mxu0 %v243
    %916 = vmatprep.subr.mxu0 %v248
    %917 = vmatpush1.msra.mxu0 %v247
    %918 = vmatprep.subr.mxu0 %v252
    %919 = vmatpush1.msra.mxu0 %v251
    %920 = vmatprep.subr.mxu0 %v256
    %921 = vmatpush1.msra.mxu0 %v255
    %922 = vmatprep.subr.mxu0 %v260
    %923 = vmatpush1.msra.mxu0 %v259
    %924 = vmatprep.subr.mxu0 %v264
    %925 = vmatpush1.msra.mxu0 %v263
    %926 = vmatprep.subr.mxu0 %v268
    %927 = vmatpush1.msra.mxu0 %v267
    %928 = vmatprep.subr.mxu0 %v272
    %929 = vmatpush1.msra.mxu0 %v271
    %930 = vmatprep.subr.mxu0 %v276
    %931 = vmatpush1.msra.mxu0 %v275
    %932 = vmatprep.subr.mxu0 %v280
    %933 = vmatpush1.msra.mxu0 %v279
    %934 = vmatprep.subr.mxu0 %v284
    %935 = vmatpush1.msra.mxu0 %v283
    %936 = vmatprep.subr.mxu0 %v288
    %937 = vmatpush1.msra.mxu0 %v287
    %938 = vmatprep.subr.mxu0 0.0
    %939 = vmatpush1.msra.mxu0 0.0
    %940 = vmatprep.subr.mxu0 0.0
    %941 = vmatpush1.msra.mxu0 0.0
    %942 = vmatprep.subr.mxu0 0.0
    %943 = vmatpush1.msra.mxu0 0.0
    %944 = vmatprep.subr.mxu0 0.0
    %945 = vmatpush1.msra.mxu0 0.0
    %946 = vmatprep.subr.mxu0 0.0
    %947 = vmatpush1.msra.mxu0 0.0
    %948 = vmatprep.subr.mxu0 0.0
    %949 = vmatpush1.msra.mxu0 0.0
    %950 = vmatprep.subr.mxu0 0.0
    %951 = vmatpush1.msra.mxu0 0.0
    %952 = vmatprep.subr.mxu0 0.0
    %953 = vmatpush1.msra.mxu0 0.0
    %954 = vmatprep.subr.mxu0 0.0
    %955 = vmatpush1.msra.mxu0 0.0
    %956 = vmatprep.subr.mxu0 0.0
    %957 = vmatpush1.msra.mxu0 0.0
    %958 = vmatprep.subr.mxu0 0.0
    %959 = vmatpush1.msra.mxu0 0.0
    %960 = vmatprep.subr.mxu0 0.0
    %961 = vmatpush1.msra.mxu0 0.0
    %962 = vmatprep.subr.mxu0 0.0
    %963 = vmatpush1.msra.mxu0 0.0
    %964 = vmatprep.subr.mxu0 0.0
    %965 = vmatpush1.msra.mxu0 0.0
    %966 = vmatprep.subr.mxu0 0.0
    %967 = vmatpush1.msra.mxu0 0.0
    %968 = vmatprep.subr.mxu0 0.0
    %969 = vmatpush1.msra.mxu0 0.0
    %970 = vmatprep.mubr.f32.mxu0 0.0
    %971 = vmatmul.mubr.f32.gmra.mrb[0].mxu0 %v665
    %v972 = vpop.f32.mrb[0].mxu0
    %v973 = vadd.f32 0.0, %v972
    %v974 = vpop.f32.mrb[0].mxu0
    %v975 = vadd.f32 0.0, %v974
    %976 = vdwg.mxu0
    %977 = vmatprep.subr.mxu0 %v162
    %978 = vmatpush1.msra.mxu0 %v161
    %979 = vmatprep.subr.mxu0 %v166
    %980 = vmatpush1.msra.mxu0 %v165
    %981 = vmatprep.subr.mxu0 %v170
    %982 = vmatpush1.msra.mxu0 %v169
    %983 = vmatprep.subr.mxu0 %v174
    %984 = vmatpush1.msra.mxu0 %v173
    %985 = vmatprep.subr.mxu0 %v178
    %986 = vmatpush1.msra.mxu0 %v177
    %987 = vmatprep.subr.mxu0 %v182
    %988 = vmatpush1.msra.mxu0 %v181
    %989 = vmatprep.subr.mxu0 %v186
    %990 = vmatpush1.msra.mxu0 %v185
    %991 = vmatprep.subr.mxu0 %v190
    %992 = vmatpush1.msra.mxu0 %v189
    %993 = vmatprep.subr.mxu0 %v194
    %994 = vmatpush1.msra.mxu0 %v193
    %995 = vmatprep.subr.mxu0 %v198
    %996 = vmatpush1.msra.mxu0 %v197
    %997 = vmatprep.subr.mxu0 %v202
    %998 = vmatpush1.msra.mxu0 %v201
    %999 = vmatprep.subr.mxu0 %v206
    %1000 = vmatpush1.msra.mxu0 %v205
    %1001 = vmatprep.subr.mxu0 %v210
    %1002 = vmatpush1.msra.mxu0 %v209
    %1003 = vmatprep.subr.mxu0 %v214
    %1004 = vmatpush1.msra.mxu0 %v213
    %1005 = vmatprep.subr.mxu0 %v218
    %1006 = vmatpush1.msra.mxu0 %v217
    %1007 = vmatprep.subr.mxu0 %v222
    %1008 = vmatpush1.msra.mxu0 %v221
    %1009 = vmatprep.subr.mxu0 0.0
    %1010 = vmatpush1.msra.mxu0 0.0
    %1011 = vmatprep.subr.mxu0 0.0
    %1012 = vmatpush1.msra.mxu0 0.0
    %1013 = vmatprep.subr.mxu0 0.0
    %1014 = vmatpush1.msra.mxu0 0.0
    %1015 = vmatprep.subr.mxu0 0.0
    %1016 = vmatpush1.msra.mxu0 0.0
    %1017 = vmatprep.subr.mxu0 0.0
    %1018 = vmatpush1.msra.mxu0 0.0
    %1019 = vmatprep.subr.mxu0 0.0
    %1020 = vmatpush1.msra.mxu0 0.0
    %1021 = vmatprep.subr.mxu0 0.0
    %1022 = vmatpush1.msra.mxu0 0.0
    %1023 = vmatprep.subr.mxu0 0.0
    %1024 = vmatpush1.msra.mxu0 0.0
    %1025 = vmatprep.subr.mxu0 0.0
    %1026 = vmatpush1.msra.mxu0 0.0
    %1027 = vmatprep.subr.mxu0 0.0
    %1028 = vmatpush1.msra.mxu0 0.0
    %1029 = vmatprep.subr.mxu0 0.0
    %1030 = vmatpush1.msra.mxu0 0.0
    %1031 = vmatprep.subr.mxu0 0.0
    %1032 = vmatpush1.msra.mxu0 0.0
    %1033 = vmatprep.subr.mxu0 0.0
    %1034 = vmatpush1.msra.mxu0 0.0
    %1035 = vmatprep.subr.mxu0 0.0
    %1036 = vmatpush1.msra.mxu0 0.0
    %1037 = vmatprep.subr.mxu0 0.0
    %1038 = vmatpush1.msra.mxu0 0.0
    %1039 = vmatprep.subr.mxu0 0.0
    %1040 = vmatpush1.msra.mxu0 0.0
    %1041 = vmatprep.mubr.f32.mxu0 0.0
    %1042 = vmatmul.mubr.f32.gmra.mrb[0].mxu0 %v834
    %v1043 = vpop.f32.mrb[0].mxu0
    %v1044 = vadd.f32 %v902, %v1043
    %v1045 = vpop.f32.mrb[0].mxu0
    %v1046 = vadd.f32 %v904, %v1045
    %1047 = vdwg.mxu0
    %1048 = vmatprep.subr.mxu0 %v164
    %1049 = vmatpush1.msra.mxu0 %v163
    %1050 = vmatprep.subr.mxu0 %v168
    %1051 = vmatpush1.msra.mxu0 %v167
    %1052 = vmatprep.subr.mxu0 %v172
    %1053 = vmatpush1.msra.mxu0 %v171
    %1054 = vmatprep.subr.mxu0 %v176
    %1055 = vmatpush1.msra.mxu0 %v175
    %1056 = vmatprep.subr.mxu0 %v180
    %1057 = vmatpush1.msra.mxu0 %v179
    %1058 = vmatprep.subr.mxu0 %v184
    %1059 = vmatpush1.msra.mxu0 %v183
    %1060 = vmatprep.subr.mxu0 %v188
    %1061 = vmatpush1.msra.mxu0 %v187
    %1062 = vmatprep.subr.mxu0 %v192
    %1063 = vmatpush1.msra.mxu0 %v191
    %1064 = vmatprep.subr.mxu0 %v196
    %1065 = vmatpush1.msra.mxu0 %v195
    %1066 = vmatprep.subr.mxu0 %v200
    %1067 = vmatpush1.msra.mxu0 %v199
    %1068 = vmatprep.subr.mxu0 %v204
    %1069 = vmatpush1.msra.mxu0 %v203
    %1070 = vmatprep.subr.mxu0 %v208
    %1071 = vmatpush1.msra.mxu0 %v207
    %1072 = vmatprep.subr.mxu0 %v212
    %1073 = vmatpush1.msra.mxu0 %v211
    %1074 = vmatprep.subr.mxu0 %v216
    %1075 = vmatpush1.msra.mxu0 %v215
    %1076 = vmatprep.subr.mxu0 %v220
    %1077 = vmatpush1.msra.mxu0 %v219
    %1078 = vmatprep.subr.mxu0 %v224
    %1079 = vmatpush1.msra.mxu0 %v223
    %1080 = vmatprep.subr.mxu0 0.0
    %1081 = vmatpush1.msra.mxu0 0.0
    %1082 = vmatprep.subr.mxu0 0.0
    %1083 = vmatpush1.msra.mxu0 0.0
    %1084 = vmatprep.subr.mxu0 0.0
    %1085 = vmatpush1.msra.mxu0 0.0
    %1086 = vmatprep.subr.mxu0 0.0
    %1087 = vmatpush1.msra.mxu0 0.0
    %1088 = vmatprep.subr.mxu0 0.0
    %1089 = vmatpush1.msra.mxu0 0.0
    %1090 = vmatprep.subr.mxu0 0.0
    %1091 = vmatpush1.msra.mxu0 0.0
    %1092 = vmatprep.subr.mxu0 0.0
    %1093 = vmatpush1.msra.mxu0 0.0
    %1094 = vmatprep.subr.mxu0 0.0
    %1095 = vmatpush1.msra.mxu0 0.0
    %1096 = vmatprep.subr.mxu0 0.0
    %1097 = vmatpush1.msra.mxu0 0.0
    %1098 = vmatprep.subr.mxu0 0.0
    %1099 = vmatpush1.msra.mxu0 0.0
    %1100 = vmatprep.subr.mxu0 0.0
    %1101 = vmatpush1.msra.mxu0 0.0
    %1102 = vmatprep.subr.mxu0 0.0
    %1103 = vmatpush1.msra.mxu0 0.0
    %1104 = vmatprep.subr.mxu0 0.0
    %1105 = vmatpush1.msra.mxu0 0.0
    %1106 = vmatprep.subr.mxu0 0.0
    %1107 = vmatpush1.msra.mxu0 0.0
    %1108 = vmatprep.subr.mxu0 0.0
    %1109 = vmatpush1.msra.mxu0 0.0
    %1110 = vmatprep.subr.mxu0 0.0
    %1111 = vmatpush1.msra.mxu0 0.0
    %1112 = vmatprep.mubr.f32.mxu0 0.0
    %1113 = vmatmul.mubr.f32.gmra.mrb[0].mxu0 %v834
    %v1114 = vpop.f32.mrb[0].mxu0
    %v1115 = vadd.f32 %v973, %v1114
    %v1116 = vpop.f32.mrb[0].mxu0
    %v1117 = vadd.f32 %v975, %v1116
    %1118 = vdwg.mxu0
    %v1119 = vadd.f32 %v1044, %v294
    %v1120 = vadd.f32 %v1046, %v298
    %v1121 = vadd.f32 %v1115, %v302
    %v1122 = vadd.f32 %v1117, %v306
    %v1123 = vmul.f32 %v1119, 0.5
    %v1124 = vtanh.pop %v1123
    %v1125 = vmul.f32 %v1124, 0.5
    %v1126 = vadd.f32 %v1125, 0.5
    %v1127 = vmul.f32 %v1120, 0.5
    %v1128 = vtanh.pop %v1127
    %v1129 = vmul.f32 %v1128, 0.5
    %v1130 = vadd.f32 %v1129, 0.5
    %v1131 = vtanh.pop %v1121
    %v1132 = vmul.f32 %v1122, 0.5
    %v1133 = vtanh.pop %v1132
    %v1134 = vmul.f32 %v1133, 0.5
    %v1135 = vadd.f32 %v1134, 0.5
    %v1136 = vmul.f32 %v1130, %v666
    %v1137 = vmul.f32 %v1126, %v1131
    %v1138 = vadd.f32 %v1136, %v1137
    %v1139 = vtanh.pop %v1138
    %v1140 = vmul.f32 %v1135, %v1139
    %s1141 = scalar_lea.vmem [#allocation2], 32
    %v1142 = vld [vmem:[%s1141] sm:$0xff]
    %v1143 = vld [vmem:[%s1141 + $0x8] sm:$0xff]
    %v1144 = vld [vmem:[%s1141 + $0x10] sm:$0xff]
    %v1145 = vld [vmem:[%s1141 + $0x18] sm:$0xff]
    %1146 = vmatprep.subr.mxu0 %v98
    %1147 = vmatpush1.msra.mxu0 %v97
    %1148 = vmatprep.subr.mxu0 %v102
    %1149 = vmatpush1.msra.mxu0 %v101
    %1150 = vmatprep.subr.mxu0 %v106
    %1151 = vmatpush1.msra.mxu0 %v105
    %1152 = vmatprep.subr.mxu0 %v110
    %1153 = vmatpush1.msra.mxu0 %v109
    %1154 = vmatprep.subr.mxu0 %v114
    %1155 = vmatpush1.msra.mxu0 %v113
    %1156 = vmatprep.subr.mxu0 %v118
    %1157 = vmatpush1.msra.mxu0 %v117
    %1158 = vmatprep.subr.mxu0 %v122
    %1159 = vmatpush1.msra.mxu0 %v121
    %1160 = vmatprep.subr.mxu0 %v126
    %1161 = vmatpush1.msra.mxu0 %v125
    %1162 = vmatprep.subr.mxu0 %v130
    %1163 = vmatpush1.msra.mxu0 %v129
    %1164 = vmatprep.subr.mxu0 %v134
    %1165 = vmatpush1.msra.mxu0 %v133
    %1166 = vmatprep.subr.mxu0 %v138
    %1167 = vmatpush1.msra.mxu0 %v137
    %1168 = vmatprep.subr.mxu0 %v142
    %1169 = vmatpush1.msra.mxu0 %v141
    %1170 = vmatprep.subr.mxu0 %v146
    %1171 = vmatpush1.msra.mxu0 %v145
    %1172 = vmatprep.subr.mxu0 %v150
    %1173 = vmatpush1.msra.mxu0 %v149
    %1174 = vmatprep.subr.mxu0 %v154
    %1175 = vmatpush1.msra.mxu0 %v153
    %1176 = vmatprep.subr.mxu0 %v158
    %1177 = vmatpush1.msra.mxu0 %v157
    %1178 = vmatprep.subr.mxu0 0.0
    %1179 = vmatpush1.msra.mxu0 0.0
    %1180 = vmatprep.subr.mxu0 0.0
    %1181 = vmatpush1.msra.mxu0 0.0
    %1182 = vmatprep.subr.mxu0 0.0
    %1183 = vmatpush1.msra.mxu0 0.0
    %1184 = vmatprep.subr.mxu0 0.0
    %1185 = vmatpush1.msra.mxu0 0.0
    %1186 = vmatprep.subr.mxu0 0.0
    %1187 = vmatpush1.msra.mxu0 0.0
    %1188 = vmatprep.subr.mxu0 0.0
    %1189 = vmatpush1.msra.mxu0 0.0
    %1190 = vmatprep.subr.mxu0 0.0
    %1191 = vmatpush1.msra.mxu0 0.0
    %1192 = vmatprep.subr.mxu0 0.0
    %1193 = vmatpush1.msra.mxu0 0.0
    %1194 = vmatprep.subr.mxu0 0.0
    %1195 = vmatpush1.msra.mxu0 0.0
    %1196 = vmatprep.subr.mxu0 0.0
    %1197 = vmatpush1.msra.mxu0 0.0
    %1198 = vmatprep.subr.mxu0 0.0
    %1199 = vmatpush1.msra.mxu0 0.0
    %1200 = vmatprep.subr.mxu0 0.0
    %1201 = vmatpush1.msra.mxu0 0.0
    %1202 = vmatprep.subr.mxu0 0.0
    %1203 = vmatpush1.msra.mxu0 0.0
    %1204 = vmatprep.subr.mxu0 0.0
    %1205 = vmatpush1.msra.mxu0 0.0
    %1206 = vmatprep.subr.mxu0 0.0
    %1207 = vmatpush1.msra.mxu0 0.0
    %1208 = vmatprep.subr.mxu0 0.0
    %1209 = vmatpush1.msra.mxu0 0.0
    %1210 = vmatprep.mubr.f32.mxu0 0.0
    %1211 = vmatmul.mubr.f32.gmra.mrb[0].mxu0 %v834
    %v1212 = vpop.f32.mrb[0].mxu0
    %v1213 = vadd.f32 0.0, %v1212
    %v1214 = vpop.f32.mrb[0].mxu0
    %v1215 = vadd.f32 0.0, %v1214
    %1216 = vdwg.mxu0
    %1217 = vmatprep.subr.mxu0 %v100
    %1218 = vmatpush1.msra.mxu0 %v99
    %1219 = vmatprep.subr.mxu0 %v104
    %1220 = vmatpush1.msra.mxu0 %v103
    %1221 = vmatprep.subr.mxu0 %v108
    %1222 = vmatpush1.msra.mxu0 %v107
    %1223 = vmatprep.subr.mxu0 %v112
    %1224 = vmatpush1.msra.mxu0 %v111
    %1225 = vmatprep.subr.mxu0 %v116
    %1226 = vmatpush1.msra.mxu0 %v115
    %1227 = vmatprep.subr.mxu0 %v120
    %1228 = vmatpush1.msra.mxu0 %v119
    %1229 = vmatprep.subr.mxu0 %v124
    %1230 = vmatpush1.msra.mxu0 %v123
    %1231 = vmatprep.subr.mxu0 %v128
    %1232 = vmatpush1.msra.mxu0 %v127
    %1233 = vmatprep.subr.mxu0 %v132
    %1234 = vmatpush1.msra.mxu0 %v131
    %1235 = vmatprep.subr.mxu0 %v136
    %1236 = vmatpush1.msra.mxu0 %v135
    %1237 = vmatprep.subr.mxu0 %v140
    %1238 = vmatpush1.msra.mxu0 %v139
    %1239 = vmatprep.subr.mxu0 %v144
    %1240 = vmatpush1.msra.mxu0 %v143
    %1241 = vmatprep.subr.mxu0 %v148
    %1242 = vmatpush1.msra.mxu0 %v147
    %1243 = vmatprep.subr.mxu0 %v152
    %1244 = vmatpush1.msra.mxu0 %v151
    %1245 = vmatprep.subr.mxu0 %v156
    %1246 = vmatpush1.msra.mxu0 %v155
    %1247 = vmatprep.subr.mxu0 %v160
    %1248 = vmatpush1.msra.mxu0 %v159
    %1249 = vmatprep.subr.mxu0 0.0
    %1250 = vmatpush1.msra.mxu0 0.0
    %1251 = vmatprep.subr.mxu0 0.0
    %1252 = vmatpush1.msra.mxu0 0.0
    %1253 = vmatprep.subr.mxu0 0.0
    %1254 = vmatpush1.msra.mxu0 0.0
    %1255 = vmatprep.subr.mxu0 0.0
    %1256 = vmatpush1.msra.mxu0 0.0
    %1257 = vmatprep.subr.mxu0 0.0
    %1258 = vmatpush1.msra.mxu0 0.0
    %1259 = vmatprep.subr.mxu0 0.0
    %1260 = vmatpush1.msra.mxu0 0.0
    %1261 = vmatprep.subr.mxu0 0.0
    %1262 = vmatpush1.msra.mxu0 0.0
    %1263 = vmatprep.subr.mxu0 0.0
    %1264 = vmatpush1.msra.mxu0 0.0
    %1265 = vmatprep.subr.mxu0 0.0
    %1266 = vmatpush1.msra.mxu0 0.0
    %1267 = vmatprep.subr.mxu0 0.0
    %1268 = vmatpush1.msra.mxu0 0.0
    %1269 = vmatprep.subr.mxu0 0.0
    %1270 = vmatpush1.msra.mxu0 0.0
    %1271 = vmatprep.subr.mxu0 0.0
    %1272 = vmatpush1.msra.mxu0 0.0
    %1273 = vmatprep.subr.mxu0 0.0
    %1274 = vmatpush1.msra.mxu0 0.0
    %1275 = vmatprep.subr.mxu0 0.0
    %1276 = vmatpush1.msra.mxu0 0.0
    %1277 = vmatprep.subr.mxu0 0.0
    %1278 = vmatpush1.msra.mxu0 0.0
    %1279 = vmatprep.subr.mxu0 0.0
    %1280 = vmatpush1.msra.mxu0 0.0
    %1281 = vmatprep.mubr.f32.mxu0 0.0
    %1282 = vmatmul.mubr.f32.gmra.mrb[0].mxu0 %v834
    %v1283 = vpop.f32.mrb[0].mxu0
    %v1284 = vadd.f32 0.0, %v1283
    %v1285 = vpop.f32.mrb[0].mxu0
    %v1286 = vadd.f32 0.0, %v1285
    %1287 = vdwg.mxu0
    %v1288 = vadd.f32 %v1142, %v1213
    %v1289 = vadd.f32 %v1143, %v1215
    %v1290 = vadd.f32 %v1144, %v1284
    %v1291 = vadd.f32 %v1145, %v1286
    %v1292 = vmul.f32 %v1288, 0.5
    %v1293 = vtanh.pop %v1292
    %v1294 = vmul.f32 %v1293, 0.5
    %v1295 = vadd.f32 %v1294, 0.5
    %v1296 = vmul.f32 %v1289, 0.5
    %v1297 = vtanh.pop %v1296
    %v1298 = vmul.f32 %v1297, 0.5
    %v1299 = vadd.f32 %v1298, 0.5
    %v1300 = vtanh.pop %v1290
    %v1301 = vmul.f32 %v1291, 0.5
    %v1302 = vtanh.pop %v1301
    %v1303 = vmul.f32 %v1302, 0.5
    %v1304 = vadd.f32 %v1303, 0.5
    %v1305 = vmul.f32 %v1299, %v832
    %v1306 = vmul.f32 %v1295, %v1300
    %v1307 = vadd.f32 %v1305, %v1306
    %v1308 = vtanh.pop %v1307
    %v1309 = vmul.f32 %v1304, %v1308
    %1310 = vmatprep.subr.mxu0 %v226
    %1311 = vmatpush1.msra.mxu0 %v225
    %1312 = vmatprep.subr.mxu0 %v230
    %1313 = vmatpush1.msra.mxu0 %v229
    %1314 = vmatprep.subr.mxu0 %v234
    %1315 = vmatpush1.msra.mxu0 %v233
    %1316 = vmatprep.subr.mxu0 %v238
    %1317 = vmatpush1.msra.mxu0 %v237
    %1318 = vmatprep.subr.mxu0 %v242
    %1319 = vmatpush1.msra.mxu0 %v241
    %1320 = vmatprep.subr.mxu0 %v246
    %1321 = vmatpush1.msra.mxu0 %v245
    %1322 = vmatprep.subr.mxu0 %v250
    %1323 = vmatpush1.msra.mxu0 %v249
    %1324 = vmatprep.subr.mxu0 %v254
    %1325 = vmatpush1.msra.mxu0 %v253
    %1326 = vmatprep.subr.mxu0 %v258
    %1327 = vmatpush1.msra.mxu0 %v257
    %1328 = vmatprep.subr.mxu0 %v262
    %1329 = vmatpush1.msra.mxu0 %v261
    %1330 = vmatprep.subr.mxu0 %v266
    %1331 = vmatpush1.msra.mxu0 %v265
    %1332 = vmatprep.subr.mxu0 %v270
    %1333 = vmatpush1.msra.mxu0 %v269
    %1334 = vmatprep.subr.mxu0 %v274
    %1335 = vmatpush1.msra.mxu0 %v273
    %1336 = vmatprep.subr.mxu0 %v278
    %1337 = vmatpush1.msra.mxu0 %v277
    %1338 = vmatprep.subr.mxu0 %v282
    %1339 = vmatpush1.msra.mxu0 %v281
    %1340 = vmatprep.subr.mxu0 %v286
    %1341 = vmatpush1.msra.mxu0 %v285
    %1342 = vmatprep.subr.mxu0 0.0
    %1343 = vmatpush1.msra.mxu0 0.0
    %1344 = vmatprep.subr.mxu0 0.0
    %1345 = vmatpush1.msra.mxu0 0.0
    %1346 = vmatprep.subr.mxu0 0.0
    %1347 = vmatpush1.msra.mxu0 0.0
    %1348 = vmatprep.subr.mxu0 0.0
    %1349 = vmatpush1.msra.mxu0 0.0
    %1350 = vmatprep.subr.mxu0 0.0
    %1351 = vmatpush1.msra.mxu0 0.0
    %1352 = vmatprep.subr.mxu0 0.0
    %1353 = vmatpush1.msra.mxu0 0.0
    %1354 = vmatprep.subr.mxu0 0.0
    %1355 = vmatpush1.msra.mxu0 0.0
    %1356 = vmatprep.subr.mxu0 0.0
    %1357 = vmatpush1.msra.mxu0 0.0
    %1358 = vmatprep.subr.mxu0 0.0
    %1359 = vmatpush1.msra.mxu0 0.0
    %1360 = vmatprep.subr.mxu0 0.0
    %1361 = vmatpush1.msra.mxu0 0.0
    %1362 = vmatprep.subr.mxu0 0.0
    %1363 = vmatpush1.msra.mxu0 0.0
    %1364 = vmatprep.subr.mxu0 0.0
    %1365 = vmatpush1.msra.mxu0 0.0
    %1366 = vmatprep.subr.mxu0 0.0
    %1367 = vmatpush1.msra.mxu0 0.0
    %1368 = vmatprep.subr.mxu0 0.0
    %1369 = vmatpush1.msra.mxu0 0.0
    %1370 = vmatprep.subr.mxu0 0.0
    %1371 = vmatpush1.msra.mxu0 0.0
    %1372 = vmatprep.subr.mxu0 0.0
    %1373 = vmatpush1.msra.mxu0 0.0
    %1374 = vmatprep.mubr.f32.mxu0 0.0
    %1375 = vmatmul.mubr.f32.gmra.mrb[0].mxu0 %v1140
    %v1376 = vpop.f32.mrb[0].mxu0
    %v1377 = vadd.f32 0.0, %v1376
    %v1378 = vpop.f32.mrb[0].mxu0
    %v1379 = vadd.f32 0.0, %v1378
    %1380 = vdwg.mxu0
    %1381 = vmatprep.subr.mxu0 %v228
    %1382 = vmatpush1.msra.mxu0 %v227
    %1383 = vmatprep.subr.mxu0 %v232
    %1384 = vmatpush1.msra.mxu0 %v231
    %1385 = vmatprep.subr.mxu0 %v236
    %1386 = vmatpush1.msra.mxu0 %v235
    %1387 = vmatprep.subr.mxu0 %v240
    %1388 = vmatpush1.msra.mxu0 %v239
    %1389 = vmatprep.subr.mxu0 %v244
    %1390 = vmatpush1.msra.mxu0 %v243
    %1391 = vmatprep.subr.mxu0 %v248
    %1392 = vmatpush1.msra.mxu0 %v247
    %1393 = vmatprep.subr.mxu0 %v252
    %1394 = vmatpush1.msra.mxu0 %v251
    %1395 = vmatprep.subr.mxu0 %v256
    %1396 = vmatpush1.msra.mxu0 %v255
    %1397 = vmatprep.subr.mxu0 %v260
    %1398 = vmatpush1.msra.mxu0 %v259
    %1399 = vmatprep.subr.mxu0 %v264
    %1400 = vmatpush1.msra.mxu0 %v263
    %1401 = vmatprep.subr.mxu0 %v268
    %1402 = vmatpush1.msra.mxu0 %v267
    %1403 = vmatprep.subr.mxu0 %v272
    %1404 = vmatpush1.msra.mxu0 %v271
    %1405 = vmatprep.subr.mxu0 %v276
    %1406 = vmatpush1.msra.mxu0 %v275
    %1407 = vmatprep.subr.mxu0 %v280
    %1408 = vmatpush1.msra.mxu0 %v279
    %1409 = vmatprep.subr.mxu0 %v284
    %1410 = vmatpush1.msra.mxu0 %v283
    %1411 = vmatprep.subr.mxu0 %v288
    %1412 = vmatpush1.msra.mxu0 %v287
    %1413 = vmatprep.subr.mxu0 0.0
    %1414 = vmatpush1.msra.mxu0 0.0
    %1415 = vmatprep.subr.mxu0 0.0
    %1416 = vmatpush1.msra.mxu0 0.0
    %1417 = vmatprep.subr.mxu0 0.0
    %1418 = vmatpush1.msra.mxu0 0.0
    %1419 = vmatprep.subr.mxu0 0.0
    %1420 = vmatpush1.msra.mxu0 0.0
    %1421 = vmatprep.subr.mxu0 0.0
    %1422 = vmatpush1.msra.mxu0 0.0
    %1423 = vmatprep.subr.mxu0 0.0
    %1424 = vmatpush1.msra.mxu0 0.0
    %1425 = vmatprep.subr.mxu0 0.0
    %1426 = vmatpush1.msra.mxu0 0.0
    %1427 = vmatprep.subr.mxu0 0.0
    %1428 = vmatpush1.msra.mxu0 0.0
    %1429 = vmatprep.subr.mxu0 0.0
    %1430 = vmatpush1.msra.mxu0 0.0
    %1431 = vmatprep.subr.mxu0 0.0
    %1432 = vmatpush1.msra.mxu0 0.0
    %1433 = vmatprep.subr.mxu0 0.0
    %1434 = vmatpush1.msra.mxu0 0.0
    %1435 = vmatprep.subr.mxu0 0.0
    %1436 = vmatpush1.msra.mxu0 0.0
    %1437 = vmatprep.subr.mxu0 0.0
    %1438 = vmatpush1.msra.mxu0 0.0
    %1439 = vmatprep.subr.mxu0 0.0
    %1440 = vmatpush1.msra.mxu0 0.0
    %1441 = vmatprep.subr.mxu0 0.0
    %1442 = vmatpush1.msra.mxu0 0.0
    %1443 = vmatprep.subr.mxu0 0.0
    %1444 = vmatpush1.msra.mxu0 0.0
    %1445 = vmatprep.mubr.f32.mxu0 0.0
    %1446 = vmatmul.mubr.f32.gmra.mrb[0].mxu0 %v1140
    %v1447 = vpop.f32.mrb[0].mxu0
    %v1448 = vadd.f32 0.0, %v1447
    %v1449 = vpop.f32.mrb[0].mxu0
    %v1450 = vadd.f32 0.0, %v1449
    %1451 = vdwg.mxu0
    %1452 = vmatprep.subr.mxu0 %v162
    %1453 = vmatpush1.msra.mxu0 %v161
    %1454 = vmatprep.subr.mxu0 %v166
    %1455 = vmatpush1.msra.mxu0 %v165
    %1456 = vmatprep.subr.mxu0 %v170
    %1457 = vmatpush1.msra.mxu0 %v169
    %1458 = vmatprep.subr.mxu0 %v174
    %1459 = vmatpush1.msra.mxu0 %v173
    %1460 = vmatprep.subr.mxu0 %v178
    %1461 = vmatpush1.msra.mxu0 %v177
    %1462 = vmatprep.subr.mxu0 %v182
    %1463 = vmatpush1.msra.mxu0 %v181
    %1464 = vmatprep.subr.mxu0 %v186
    %1465 = vmatpush1.msra.mxu0 %v185
    %1466 = vmatprep.subr.mxu0 %v190
    %1467 = vmatpush1.msra.mxu0 %v189
    %1468 = vmatprep.subr.mxu0 %v194
    %1469 = vmatpush1.msra.mxu0 %v193
    %1470 = vmatprep.subr.mxu0 %v198
    %1471 = vmatpush1.msra.mxu0 %v197
    %1472 = vmatprep.subr.mxu0 %v202
    %1473 = vmatpush1.msra.mxu0 %v201
    %1474 = vmatprep.subr.mxu0 %v206
    %1475 = vmatpush1.msra.mxu0 %v205
    %1476 = vmatprep.subr.mxu0 %v210
    %1477 = vmatpush1.msra.mxu0 %v209
    %1478 = vmatprep.subr.mxu0 %v214
    %1479 = vmatpush1.msra.mxu0 %v213
    %1480 = vmatprep.subr.mxu0 %v218
    %1481 = vmatpush1.msra.mxu0 %v217
    %1482 = vmatprep.subr.mxu0 %v222
    %1483 = vmatpush1.msra.mxu0 %v221
    %1484 = vmatprep.subr.mxu0 0.0
    %1485 = vmatpush1.msra.mxu0 0.0
    %1486 = vmatprep.subr.mxu0 0.0
    %1487 = vmatpush1.msra.mxu0 0.0
    %1488 = vmatprep.subr.mxu0 0.0
    %1489 = vmatpush1.msra.mxu0 0.0
    %1490 = vmatprep.subr.mxu0 0.0
    %1491 = vmatpush1.msra.mxu0 0.0
    %1492 = vmatprep.subr.mxu0 0.0
    %1493 = vmatpush1.msra.mxu0 0.0
    %1494 = vmatprep.subr.mxu0 0.0
    %1495 = vmatpush1.msra.mxu0 0.0
    %1496 = vmatprep.subr.mxu0 0.0
    %1497 = vmatpush1.msra.mxu0 0.0
    %1498 = vmatprep.subr.mxu0 0.0
    %1499 = vmatpush1.msra.mxu0 0.0
    %1500 = vmatprep.subr.mxu0 0.0
    %1501 = vmatpush1.msra.mxu0 0.0
    %1502 = vmatprep.subr.mxu0 0.0
    %1503 = vmatpush1.msra.mxu0 0.0
    %1504 = vmatprep.subr.mxu0 0.0
    %1505 = vmatpush1.msra.mxu0 0.0
    %1506 = vmatprep.subr.mxu0 0.0
    %1507 = vmatpush1.msra.mxu0 0.0
    %1508 = vmatprep.subr.mxu0 0.0
    %1509 = vmatpush1.msra.mxu0 0.0
    %1510 = vmatprep.subr.mxu0 0.0
    %1511 = vmatpush1.msra.mxu0 0.0
    %1512 = vmatprep.subr.mxu0 0.0
    %1513 = vmatpush1.msra.mxu0 0.0
    %1514 = vmatprep.subr.mxu0 0.0
    %1515 = vmatpush1.msra.mxu0 0.0
    %1516 = vmatprep.mubr.f32.mxu0 0.0
    %1517 = vmatmul.mubr.f32.gmra.mrb[0].mxu0 %v1309
    %v1518 = vpop.f32.mrb[0].mxu0
    %v1519 = vadd.f32 %v1377, %v1518
    %v1520 = vpop.f32.mrb[0].mxu0
    %v1521 = vadd.f32 %v1379, %v1520
    %1522 = vdwg.mxu0
    %1523 = vmatprep.subr.mxu0 %v164
    %1524 = vmatpush1.msra.mxu0 %v163
    %1525 = vmatprep.subr.mxu0 %v168
    %1526 = vmatpush1.msra.mxu0 %v167
    %1527 = vmatprep.subr.mxu0 %v172
    %1528 = vmatpush1.msra.mxu0 %v171
    %1529 = vmatprep.subr.mxu0 %v176
    %1530 = vmatpush1.msra.mxu0 %v175
    %1531 = vmatprep.subr.mxu0 %v180
    %1532 = vmatpush1.msra.mxu0 %v179
    %1533 = vmatprep.subr.mxu0 %v184
    %1534 = vmatpush1.msra.mxu0 %v183
    %1535 = vmatprep.subr.mxu0 %v188
    %1536 = vmatpush1.msra.mxu0 %v187
    %1537 = vmatprep.subr.mxu0 %v192
    %1538 = vmatpush1.msra.mxu0 %v191
    %1539 = vmatprep.subr.mxu0 %v196
    %1540 = vmatpush1.msra.mxu0 %v195
    %1541 = vmatprep.subr.mxu0 %v200
    %1542 = vmatpush1.msra.mxu0 %v199
    %1543 = vmatprep.subr.mxu0 %v204
    %1544 = vmatpush1.msra.mxu0 %v203
    %1545 = vmatprep.subr.mxu0 %v208
    %1546 = vmatpush1.msra.mxu0 %v207
    %1547 = vmatprep.subr.mxu0 %v212
    %1548 = vmatpush1.msra.mxu0 %v211
    %1549 = vmatprep.subr.mxu0 %v216
    %1550 = vmatpush1.msra.mxu0 %v215
    %1551 = vmatprep.subr.mxu0 %v220
    %1552 = vmatpush1.msra.mxu0 %v219
    %1553 = vmatprep.subr.mxu0 %v224
    %1554 = vmatpush1.msra.mxu0 %v223
    %1555 = vmatprep.subr.mxu0 0.0
    %1556 = vmatpush1.msra.mxu0 0.0
    %1557 = vmatprep.subr.mxu0 0.0
    %1558 = vmatpush1.msra.mxu0 0.0
    %1559 = vmatprep.subr.mxu0 0.0
    %1560 = vmatpush1.msra.mxu0 0.0
    %1561 = vmatprep.subr.mxu0 0.0
    %1562 = vmatpush1.msra.mxu0 0.0
    %1563 = vmatprep.subr.mxu0 0.0
    %1564 = vmatpush1.msra.mxu0 0.0
    %1565 = vmatprep.subr.mxu0 0.0
    %1566 = vmatpush1.msra.mxu0 0.0
    %1567 = vmatprep.subr.mxu0 0.0
    %1568 = vmatpush1.msra.mxu0 0.0
    %1569 = vmatprep.subr.mxu0 0.0
    %1570 = vmatpush1.msra.mxu0 0.0
    %1571 = vmatprep.subr.mxu0 0.0
    %1572 = vmatpush1.msra.mxu0 0.0
    %1573 = vmatprep.subr.mxu0 0.0
    %1574 = vmatpush1.msra.mxu0 0.0
    %1575 = vmatprep.subr.mxu0 0.0
    %1576 = vmatpush1.msra.mxu0 0.0
    %1577 = vmatprep.subr.mxu0 0.0
    %1578 = vmatpush1.msra.mxu0 0.0
    %1579 = vmatprep.subr.mxu0 0.0
    %1580 = vmatpush1.msra.mxu0 0.0
    %1581 = vmatprep.subr.mxu0 0.0
    %1582 = vmatpush1.msra.mxu0 0.0
    %1583 = vmatprep.subr.mxu0 0.0
    %1584 = vmatpush1.msra.mxu0 0.0
    %1585 = vmatprep.subr.mxu0 0.0
    %1586 = vmatpush1.msra.mxu0 0.0
    %1587 = vmatprep.mubr.f32.mxu0 0.0
    %1588 = vmatmul.mubr.f32.gmra.mrb[0].mxu0 %v1309
    %v1589 = vpop.f32.mrb[0].mxu0
    %v1590 = vadd.f32 %v1448, %v1589
    %v1591 = vpop.f32.mrb[0].mxu0
    %v1592 = vadd.f32 %v1450, %v1591
    %1593 = vdwg.mxu0
    %v1594 = vadd.f32 %v1519, %v294
    %v1595 = vadd.f32 %v1521, %v298
    %v1596 = vadd.f32 %v1590, %v302
    %v1597 = vadd.f32 %v1592, %v306
    %v1598 = vmul.f32 %v1594, 0.5
    %v1599 = vtanh.pop %v1598
    %v1600 = vmul.f32 %v1599, 0.5
    %v1601 = vadd.f32 %v1600, 0.5
    %v1602 = vmul.f32 %v1595, 0.5
    %v1603 = vtanh.pop %v1602
    %v1604 = vmul.f32 %v1603, 0.5
    %v1605 = vadd.f32 %v1604, 0.5
    %v1606 = vtanh.pop %v1596
    %v1607 = vmul.f32 %v1597, 0.5
    %v1608 = vtanh.pop %v1607
    %v1609 = vmul.f32 %v1608, 0.5
    %v1610 = vadd.f32 %v1609, 0.5
    %v1611 = vmul.f32 %v1605, %v1138
    %v1612 = vmul.f32 %v1601, %v1606
    %v1613 = vadd.f32 %v1611, %v1612
    %v1614 = vtanh.pop %v1613
    %v1615 = vmul.f32 %v1610, %v1614
    %s1616 = scalar_lea.vmem [#allocation2], 64
    %v1617 = vld [vmem:[%s1616] sm:$0xff]
    %v1618 = vld [vmem:[%s1616 + $0x8] sm:$0xff]
    %v1619 = vld [vmem:[%s1616 + $0x10] sm:$0xff]
    %v1620 = vld [vmem:[%s1616 + $0x18] sm:$0xff]
    %1621 = vmatprep.subr.mxu0 %v98
    %1622 = vmatpush1.msra.mxu0 %v97
    %1623 = vmatprep.subr.mxu0 %v102
    %1624 = vmatpush1.msra.mxu0 %v101
    %1625 = vmatprep.subr.mxu0 %v106
    %1626 = vmatpush1.msra.mxu0 %v105
    %1627 = vmatprep.subr.mxu0 %v110
    %1628 = vmatpush1.msra.mxu0 %v109
    %1629 = vmatprep.subr.mxu0 %v114
    %1630 = vmatpush1.msra.mxu0 %v113
    %1631 = vmatprep.subr.mxu0 %v118
    %1632 = vmatpush1.msra.mxu0 %v117
    %1633 = vmatprep.subr.mxu0 %v122
    %1634 = vmatpush1.msra.mxu0 %v121
    %1635 = vmatprep.subr.mxu0 %v126
    %1636 = vmatpush1.msra.mxu0 %v125
    %1637 = vmatprep.subr.mxu0 %v130
    %1638 = vmatpush1.msra.mxu0 %v129
    %1639 = vmatprep.subr.mxu0 %v134
    %1640 = vmatpush1.msra.mxu0 %v133
    %1641 = vmatprep.subr.mxu0 %v138
    %1642 = vmatpush1.msra.mxu0 %v137
    %1643 = vmatprep.subr.mxu0 %v142
    %1644 = vmatpush1.msra.mxu0 %v141
    %1645 = vmatprep.subr.mxu0 %v146
    %1646 = vmatpush1.msra.mxu0 %v145
    %1647 = vmatprep.subr.mxu0 %v150
    %1648 = vmatpush1.msra.mxu0 %v149
    %1649 = vmatprep.subr.mxu0 %v154
    %1650 = vmatpush1.msra.mxu0 %v153
    %1651 = vmatprep.subr.mxu0 %v158
    %1652 = vmatpush1.msra.mxu0 %v157
    %1653 = vmatprep.subr.mxu0 0.0
    %1654 = vmatpush1.msra.mxu0 0.0
    %1655 = vmatprep.subr.mxu0 0.0
    %1656 = vmatpush1.msra.mxu0 0.0
    %1657 = vmatprep.subr.mxu0 0.0
    %1658 = vmatpush1.msra.mxu0 0.0
    %1659 = vmatprep.subr.mxu0 0.0
    %1660 = vmatpush1.msra.mxu0 0.0
    %1661 = vmatprep.subr.mxu0 0.0
    %1662 = vmatpush1.msra.mxu0 0.0
    %1663 = vmatprep.subr.mxu0 0.0
    %1664 = vmatpush1.msra.mxu0 0.0
    %1665 = vmatprep.subr.mxu0 0.0
    %1666 = vmatpush1.msra.mxu0 0.0
    %1667 = vmatprep.subr.mxu0 0.0
    %1668 = vmatpush1.msra.mxu0 0.0
    %1669 = vmatprep.subr.mxu0 0.0
    %1670 = vmatpush1.msra.mxu0 0.0
    %1671 = vmatprep.subr.mxu0 0.0
    %1672 = vmatpush1.msra.mxu0 0.0
    %1673 = vmatprep.subr.mxu0 0.0
    %1674 = vmatpush1.msra.mxu0 0.0
    %1675 = vmatprep.subr.mxu0 0.0
    %1676 = vmatpush1.msra.mxu0 0.0
    %1677 = vmatprep.subr.mxu0 0.0
    %1678 = vmatpush1.msra.mxu0 0.0
    %1679 = vmatprep.subr.mxu0 0.0
    %1680 = vmatpush1.msra.mxu0 0.0
    %1681 = vmatprep.subr.mxu0 0.0
    %1682 = vmatpush1.msra.mxu0 0.0
    %1683 = vmatprep.subr.mxu0 0.0
    %1684 = vmatpush1.msra.mxu0 0.0
    %1685 = vmatprep.mubr.f32.mxu0 0.0
    %1686 = vmatmul.mubr.f32.gmra.mrb[0].mxu0 %v1309
    %v1687 = vpop.f32.mrb[0].mxu0
    %v1688 = vadd.f32 0.0, %v1687
    %v1689 = vpop.f32.mrb[0].mxu0
    %v1690 = vadd.f32 0.0, %v1689
    %1691 = vdwg.mxu0
    %1692 = vmatprep.subr.mxu0 %v100
    %1693 = vmatpush1.msra.mxu0 %v99
    %1694 = vmatprep.subr.mxu0 %v104
    %1695 = vmatpush1.msra.mxu0 %v103
    %1696 = vmatprep.subr.mxu0 %v108
    %1697 = vmatpush1.msra.mxu0 %v107
    %1698 = vmatprep.subr.mxu0 %v112
    %1699 = vmatpush1.msra.mxu0 %v111
    %1700 = vmatprep.subr.mxu0 %v116
    %1701 = vmatpush1.msra.mxu0 %v115
    %1702 = vmatprep.subr.mxu0 %v120
    %1703 = vmatpush1.msra.mxu0 %v119
    %1704 = vmatprep.subr.mxu0 %v124
    %1705 = vmatpush1.msra.mxu0 %v123
    %1706 = vmatprep.subr.mxu0 %v128
    %1707 = vmatpush1.msra.mxu0 %v127
    %1708 = vmatprep.subr.mxu0 %v132
    %1709 = vmatpush1.msra.mxu0 %v131
    %1710 = vmatprep.subr.mxu0 %v136
    %1711 = vmatpush1.msra.mxu0 %v135
    %1712 = vmatprep.subr.mxu0 %v140
    %1713 = vmatpush1.msra.mxu0 %v139
    %1714 = vmatprep.subr.mxu0 %v144
    %1715 = vmatpush1.msra.mxu0 %v143
    %1716 = vmatprep.subr.mxu0 %v148
    %1717 = vmatpush1.msra.mxu0 %v147
    %1718 = vmatprep.subr.mxu0 %v152
    %1719 = vmatpush1.msra.mxu0 %v151
    %1720 = vmatprep.subr.mxu0 %v156
    %1721 = vmatpush1.msra.mxu0 %v155
    %1722 = vmatprep.subr.mxu0 %v160
    %1723 = vmatpush1.msra.mxu0 %v159
    %1724 = vmatprep.subr.mxu0 0.0
    %1725 = vmatpush1.msra.mxu0 0.0
    %1726 = vmatprep.subr.mxu0 0.0
    %1727 = vmatpush1.msra.mxu0 0.0
    %1728 = vmatprep.subr.mxu0 0.0
    %1729 = vmatpush1.msra.mxu0 0.0
    %1730 = vmatprep.subr.mxu0 0.0
    %1731 = vmatpush1.msra.mxu0 0.0
    %1732 = vmatprep.subr.mxu0 0.0
    %1733 = vmatpush1.msra.mxu0 0.0
    %1734 = vmatprep.subr.mxu0 0.0
    %1735 = vmatpush1.msra.mxu0 0.0
    %1736 = vmatprep.subr.mxu0 0.0
    %1737 = vmatpush1.msra.mxu0 0.0
    %1738 = vmatprep.subr.mxu0 0.0
    %1739 = vmatpush1.msra.mxu0 0.0
    %1740 = vmatprep.subr.mxu0 0.0
    %1741 = vmatpush1.msra.mxu0 0.0
    %1742 = vmatprep.subr.mxu0 0.0
    %1743 = vmatpush1.msra.mxu0 0.0
    %1744 = vmatprep.subr.mxu0 0.0
    %1745 = vmatpush1.msra.mxu0 0.0
    %1746 = vmatprep.subr.mxu0 0.0
    %1747 = vmatpush1.msra.mxu0 0.0
    %1748 = vmatprep.subr.mxu0 0.0
    %1749 = vmatpush1.msra.mxu0 0.0
    %1750 = vmatprep.subr.mxu0 0.0
    %1751 = vmatpush1.msra.mxu0 0.0
    %1752 = vmatprep.subr.mxu0 0.0
    %1753 = vmatpush1.msra.mxu0 0.0
    %1754 = vmatprep.subr.mxu0 0.0
    %1755 = vmatpush1.msra.mxu0 0.0
    %1756 = vmatprep.mubr.f32.mxu0 0.0
    %1757 = vmatmul.mubr.f32.gmra.mrb[0].mxu0 %v1309
    %v1758 = vpop.f32.mrb[0].mxu0
    %v1759 = vadd.f32 0.0, %v1758
    %v1760 = vpop.f32.mrb[0].mxu0
    %v1761 = vadd.f32 0.0, %v1760
    %1762 = vdwg.mxu0
    %v1763 = vadd.f32 %v1617, %v1688
    %v1764 = vadd.f32 %v1618, %v1690
    %v1765 = vadd.f32 %v1619, %v1759
    %v1766 = vadd.f32 %v1620, %v1761
    %v1767 = vmul.f32 %v1763, 0.5
    %v1768 = vtanh.pop %v1767
    %v1769 = vmul.f32 %v1768, 0.5
    %v1770 = vadd.f32 %v1769, 0.5
    %v1771 = vmul.f32 %v1764, 0.5
    %v1772 = vtanh.pop %v1771
    %v1773 = vmul.f32 %v1772, 0.5
    %v1774 = vadd.f32 %v1773, 0.5
    %v1775 = vtanh.pop %v1765
    %v1776 = vmul.f32 %v1766, 0.5
    %v1777 = vtanh.pop %v1776
    %v1778 = vmul.f32 %v1777, 0.5
    %v1779 = vadd.f32 %v1778, 0.5
    %v1780 = vmul.f32 %v1774, %v1307
    %v1781 = vmul.f32 %v1770, %v1775
    %v1782 = vadd.f32 %v1780, %v1781
    %v1783 = vtanh.pop %v1782
    %v1784 = vmul.f32 %v1779, %v1783
    %1785 = vmatprep.subr.mxu0 %v226
    %1786 = vmatpush1.msra.mxu0 %v225
    %1787 = vmatprep.subr.mxu0 %v230
    %1788 = vmatpush1.msra.mxu0 %v229
    %1789 = vmatprep.subr.mxu0 %v234
    %1790 = vmatpush1.msra.mxu0 %v233
    %1791 = vmatprep.subr.mxu0 %v238
    %1792 = vmatpush1.msra.mxu0 %v237
    %1793 = vmatprep.subr.mxu0 %v242
    %1794 = vmatpush1.msra.mxu0 %v241
    %1795 = vmatprep.subr.mxu0 %v246
    %1796 = vmatpush1.msra.mxu0 %v245
    %1797 = vmatprep.subr.mxu0 %v250
    %1798 = vmatpush1.msra.mxu0 %v249
    %1799 = vmatprep.subr.mxu0 %v254
    %1800 = vmatpush1.msra.mxu0 %v253
    %1801 = vmatprep.subr.mxu0 %v258
    %1802 = vmatpush1.msra.mxu0 %v257
    %1803 = vmatprep.subr.mxu0 %v262
    %1804 = vmatpush1.msra.mxu0 %v261
    %1805 = vmatprep.subr.mxu0 %v266
    %1806 = vmatpush1.msra.mxu0 %v265
    %1807 = vmatprep.subr.mxu0 %v270
    %1808 = vmatpush1.msra.mxu0 %v269
    %1809 = vmatprep.subr.mxu0 %v274
    %1810 = vmatpush1.msra.mxu0 %v273
    %1811 = vmatprep.subr.mxu0 %v278
    %1812 = vmatpush1.msra.mxu0 %v277
    %1813 = vmatprep.subr.mxu0 %v282
    %1814 = vmatpush1.msra.mxu0 %v281
    %1815 = vmatprep.subr.mxu0 %v286
    %1816 = vmatpush1.msra.mxu0 %v285
    %1817 = vmatprep.subr.mxu0 0.0
    %1818 = vmatpush1.msra.mxu0 0.0
    %1819 = vmatprep.subr.mxu0 0.0
    %1820 = vmatpush1.msra.mxu0 0.0
    %1821 = vmatprep.subr.mxu0 0.0
    %1822 = vmatpush1.msra.mxu0 0.0
    %1823 = vmatprep.subr.mxu0 0.0
    %1824 = vmatpush1.msra.mxu0 0.0
    %1825 = vmatprep.subr.mxu0 0.0
    %1826 = vmatpush1.msra.mxu0 0.0
    %1827 = vmatprep.subr.mxu0 0.0
    %1828 = vmatpush1.msra.mxu0 0.0
    %1829 = vmatprep.subr.mxu0 0.0
    %1830 = vmatpush1.msra.mxu0 0.0
    %1831 = vmatprep.subr.mxu0 0.0
    %1832 = vmatpush1.msra.mxu0 0.0
    %1833 = vmatprep.subr.mxu0 0.0
    %1834 = vmatpush1.msra.mxu0 0.0
    %1835 = vmatprep.subr.mxu0 0.0
    %1836 = vmatpush1.msra.mxu0 0.0
    %1837 = vmatprep.subr.mxu0 0.0
    %1838 = vmatpush1.msra.mxu0 0.0
    %1839 = vmatprep.subr.mxu0 0.0
    %1840 = vmatpush1.msra.mxu0 0.0
    %1841 = vmatprep.subr.mxu0 0.0
    %1842 = vmatpush1.msra.mxu0 0.0
    %1843 = vmatprep.subr.mxu0 0.0
    %1844 = vmatpush1.msra.mxu0 0.0
    %1845 = vmatprep.subr.mxu0 0.0
    %1846 = vmatpush1.msra.mxu0 0.0
    %1847 = vmatprep.subr.mxu0 0.0
    %1848 = vmatpush1.msra.mxu0 0.0
    %1849 = vmatprep.mubr.f32.mxu0 0.0
    %1850 = vmatmul.mubr.f32.gmra.mrb[0].mxu0 %v1615
    %v1851 = vpop.f32.mrb[0].mxu0
    %v1852 = vadd.f32 0.0, %v1851
    %v1853 = vpop.f32.mrb[0].mxu0
    %v1854 = vadd.f32 0.0, %v1853
    %1855 = vdwg.mxu0
    %1856 = vmatprep.subr.mxu0 %v228
    %1857 = vmatpush1.msra.mxu0 %v227
    %1858 = vmatprep.subr.mxu0 %v232
    %1859 = vmatpush1.msra.mxu0 %v231
    %1860 = vmatprep.subr.mxu0 %v236
    %1861 = vmatpush1.msra.mxu0 %v235
    %1862 = vmatprep.subr.mxu0 %v240
    %1863 = vmatpush1.msra.mxu0 %v239
    %1864 = vmatprep.subr.mxu0 %v244
    %1865 = vmatpush1.msra.mxu0 %v243
    %1866 = vmatprep.subr.mxu0 %v248
    %1867 = vmatpush1.msra.mxu0 %v247
    %1868 = vmatprep.subr.mxu0 %v252
    %1869 = vmatpush1.msra.mxu0 %v251
    %1870 = vmatprep.subr.mxu0 %v256
    %1871 = vmatpush1.msra.mxu0 %v255
    %1872 = vmatprep.subr.mxu0 %v260
    %1873 = vmatpush1.msra.mxu0 %v259
    %1874 = vmatprep.subr.mxu0 %v264
    %1875 = vmatpush1.msra.mxu0 %v263
    %1876 = vmatprep.subr.mxu0 %v268
    %1877 = vmatpush1.msra.mxu0 %v267
    %1878 = vmatprep.subr.mxu0 %v272
    %1879 = vmatpush1.msra.mxu0 %v271
    %1880 = vmatprep.subr.mxu0 %v276
    %1881 = vmatpush1.msra.mxu0 %v275
    %1882 = vmatprep.subr.mxu0 %v280
    %1883 = vmatpush1.msra.mxu0 %v279
    %1884 = vmatprep.subr.mxu0 %v284
    %1885 = vmatpush1.msra.mxu0 %v283
    %1886 = vmatprep.subr.mxu0 %v288
    %1887 = vmatpush1.msra.mxu0 %v287
    %1888 = vmatprep.subr.mxu0 0.0
    %1889 = vmatpush1.msra.mxu0 0.0
    %1890 = vmatprep.subr.mxu0 0.0
    %1891 = vmatpush1.msra.mxu0 0.0
    %1892 = vmatprep.subr.mxu0 0.0
    %1893 = vmatpush1.msra.mxu0 0.0
    %1894 = vmatprep.subr.mxu0 0.0
    %1895 = vmatpush1.msra.mxu0 0.0
    %1896 = vmatprep.subr.mxu0 0.0
    %1897 = vmatpush1.msra.mxu0 0.0
    %1898 = vmatprep.subr.mxu0 0.0
    %1899 = vmatpush1.msra.mxu0 0.0
    %1900 = vmatprep.subr.mxu0 0.0
    %1901 = vmatpush1.msra.mxu0 0.0
    %1902 = vmatprep.subr.mxu0 0.0
    %1903 = vmatpush1.msra.mxu0 0.0
    %1904 = vmatprep.subr.mxu0 0.0
    %1905 = vmatpush1.msra.mxu0 0.0
    %1906 = vmatprep.subr.mxu0 0.0
    %1907 = vmatpush1.msra.mxu0 0.0
    %1908 = vmatprep.subr.mxu0 0.0
    %1909 = vmatpush1.msra.mxu0 0.0
    %1910 = vmatprep.subr.mxu0 0.0
    %1911 = vmatpush1.msra.mxu0 0.0
    %1912 = vmatprep.subr.mxu0 0.0
    %1913 = vmatpush1.msra.mxu0 0.0
    %1914 = vmatprep.subr.mxu0 0.0
    %1915 = vmatpush1.msra.mxu0 0.0
    %1916 = vmatprep.subr.mxu0 0.0
    %1917 = vmatpush1.msra.mxu0 0.0
    %1918 = vmatprep.subr.mxu0 0.0
    %1919 = vmatpush1.msra.mxu0 0.0
    %1920 = vmatprep.mubr.f32.mxu0 0.0
    %1921 = vmatmul.mubr.f32.gmra.mrb[0].mxu0 %v1615
    %v1922 = vpop.f32.mrb[0].mxu0
    %v1923 = vadd.f32 0.0, %v1922
    %v1924 = vpop.f32.mrb[0].mxu0
    %v1925 = vadd.f32 0.0, %v1924
    %1926 = vdwg.mxu0
    %1927 = vmatprep.subr.mxu0 %v162
    %1928 = vmatpush1.msra.mxu0 %v161
    %1929 = vmatprep.subr.mxu0 %v166
    %1930 = vmatpush1.msra.mxu0 %v165
    %1931 = vmatprep.subr.mxu0 %v170
    %1932 = vmatpush1.msra.mxu0 %v169
    %1933 = vmatprep.subr.mxu0 %v174
    %1934 = vmatpush1.msra.mxu0 %v173
    %1935 = vmatprep.subr.mxu0 %v178
    %1936 = vmatpush1.msra.mxu0 %v177
    %1937 = vmatprep.subr.mxu0 %v182
    %1938 = vmatpush1.msra.mxu0 %v181
    %1939 = vmatprep.subr.mxu0 %v186
    %1940 = vmatpush1.msra.mxu0 %v185
    %1941 = vmatprep.subr.mxu0 %v190
    %1942 = vmatpush1.msra.mxu0 %v189
    %1943 = vmatprep.subr.mxu0 %v194
    %1944 = vmatpush1.msra.mxu0 %v193
    %1945 = vmatprep.subr.mxu0 %v198
    %1946 = vmatpush1.msra.mxu0 %v197
    %1947 = vmatprep.subr.mxu0 %v202
    %1948 = vmatpush1.msra.mxu0 %v201
    %1949 = vmatprep.subr.mxu0 %v206
    %1950 = vmatpush1.msra.mxu0 %v205
    %1951 = vmatprep.subr.mxu0 %v210
    %1952 = vmatpush1.msra.mxu0 %v209
    %1953 = vmatprep.subr.mxu0 %v214
    %1954 = vmatpush1.msra.mxu0 %v213
    %1955 = vmatprep.subr.mxu0 %v218
    %1956 = vmatpush1.msra.mxu0 %v217
    %1957 = vmatprep.subr.mxu0 %v222
    %1958 = vmatpush1.msra.mxu0 %v221
    %1959 = vmatprep.subr.mxu0 0.0
    %1960 = vmatpush1.msra.mxu0 0.0
    %1961 = vmatprep.subr.mxu0 0.0
    %1962 = vmatpush1.msra.mxu0 0.0
    %1963 = vmatprep.subr.mxu0 0.0
    %1964 = vmatpush1.msra.mxu0 0.0
    %1965 = vmatprep.subr.mxu0 0.0
    %1966 = vmatpush1.msra.mxu0 0.0
    %1967 = vmatprep.subr.mxu0 0.0
    %1968 = vmatpush1.msra.mxu0 0.0
    %1969 = vmatprep.subr.mxu0 0.0
    %1970 = vmatpush1.msra.mxu0 0.0
    %1971 = vmatprep.subr.mxu0 0.0
    %1972 = vmatpush1.msra.mxu0 0.0
    %1973 = vmatprep.subr.mxu0 0.0
    %1974 = vmatpush1.msra.mxu0 0.0
    %1975 = vmatprep.subr.mxu0 0.0
    %1976 = vmatpush1.msra.mxu0 0.0
    %1977 = vmatprep.subr.mxu0 0.0
    %1978 = vmatpush1.msra.mxu0 0.0
    %1979 = vmatprep.subr.mxu0 0.0
    %1980 = vmatpush1.msra.mxu0 0.0
    %1981 = vmatprep.subr.mxu0 0.0
    %1982 = vmatpush1.msra.mxu0 0.0
    %1983 = vmatprep.subr.mxu0 0.0
    %1984 = vmatpush1.msra.mxu0 0.0
    %1985 = vmatprep.subr.mxu0 0.0
    %1986 = vmatpush1.msra.mxu0 0.0
    %1987 = vmatprep.subr.mxu0 0.0
    %1988 = vmatpush1.msra.mxu0 0.0
    %1989 = vmatprep.subr.mxu0 0.0
    %1990 = vmatpush1.msra.mxu0 0.0
    %1991 = vmatprep.mubr.f32.mxu0 0.0
    %1992 = vmatmul.mubr.f32.gmra.mrb[0].mxu0 %v1784
    %v1993 = vpop.f32.mrb[0].mxu0
    %v1994 = vadd.f32 %v1852, %v1993
    %v1995 = vpop.f32.mrb[0].mxu0
    %v1996 = vadd.f32 %v1854, %v1995
    %1997 = vdwg.mxu0
    %1998 = vmatprep.subr.mxu0 %v164
    %1999 = vmatpush1.msra.mxu0 %v163
    %2000 = vmatprep.subr.mxu0 %v168
    %2001 = vmatpush1.msra.mxu0 %v167
    %2002 = vmatprep.subr.mxu0 %v172
    %2003 = vmatpush1.msra.mxu0 %v171
    %2004 = vmatprep.subr.mxu0 %v176
    %2005 = vmatpush1.msra.mxu0 %v175
    %2006 = vmatprep.subr.mxu0 %v180
    %2007 = vmatpush1.msra.mxu0 %v179
    %2008 = vmatprep.subr.mxu0 %v184
    %2009 = vmatpush1.msra.mxu0 %v183
    %2010 = vmatprep.subr.mxu0 %v188
    %2011 = vmatpush1.msra.mxu0 %v187
    %2012 = vmatprep.subr.mxu0 %v192
    %2013 = vmatpush1.msra.mxu0 %v191
    %2014 = vmatprep.subr.mxu0 %v196
    %2015 = vmatpush1.msra.mxu0 %v195
    %2016 = vmatprep.subr.mxu0 %v200
    %2017 = vmatpush1.msra.mxu0 %v199
    %2018 = vmatprep.subr.mxu0 %v204
    %2019 = vmatpush1.msra.mxu0 %v203
    %2020 = vmatprep.subr.mxu0 %v208
    %2021 = vmatpush1.msra.mxu0 %v207
    %2022 = vmatprep.subr.mxu0 %v212
    %2023 = vmatpush1.msra.mxu0 %v211
    %2024 = vmatprep.subr.mxu0 %v216
    %2025 = vmatpush1.msra.mxu0 %v215
    %2026 = vmatprep.subr.mxu0 %v220
    %2027 = vmatpush1.msra.mxu0 %v219
    %2028 = vmatprep.subr.mxu0 %v224
    %2029 = vmatpush1.msra.mxu0 %v223
    %2030 = vmatprep.subr.mxu0 0.0
    %2031 = vmatpush1.msra.mxu0 0.0
    %2032 = vmatprep.subr.mxu0 0.0
    %2033 = vmatpush1.msra.mxu0 0.0
    %2034 = vmatprep.subr.mxu0 0.0
    %2035 = vmatpush1.msra.mxu0 0.0
    %2036 = vmatprep.subr.mxu0 0.0
    %2037 = vmatpush1.msra.mxu0 0.0
    %2038 = vmatprep.subr.mxu0 0.0
    %2039 = vmatpush1.msra.mxu0 0.0
    %2040 = vmatprep.subr.mxu0 0.0
    %2041 = vmatpush1.msra.mxu0 0.0
    %2042 = vmatprep.subr.mxu0 0.0
    %2043 = vmatpush1.msra.mxu0 0.0
    %2044 = vmatprep.subr.mxu0 0.0
    %2045 = vmatpush1.msra.mxu0 0.0
    %2046 = vmatprep.subr.mxu0 0.0
    %2047 = vmatpush1.msra.mxu0 0.0
    %2048 = vmatprep.subr.mxu0 0.0
    %2049 = vmatpush1.msra.mxu0 0.0
    %2050 = vmatprep.subr.mxu0 0.0
    %2051 = vmatpush1.msra.mxu0 0.0
    %2052 = vmatprep.subr.mxu0 0.0
    %2053 = vmatpush1.msra.mxu0 0.0
    %2054 = vmatprep.subr.mxu0 0.0
    %2055 = vmatpush1.msra.mxu0 0.0
    %2056 = vmatprep.subr.mxu0 0.0
    %2057 = vmatpush1.msra.mxu0 0.0
    %2058 = vmatprep.subr.mxu0 0.0
    %2059 = vmatpush1.msra.mxu0 0.0
    %2060 = vmatprep.subr.mxu0 0.0
    %2061 = vmatpush1.msra.mxu0 0.0
    %2062 = vmatprep.mubr.f32.mxu0 0.0
    %2063 = vmatmul.mubr.f32.gmra.mrb[0].mxu0 %v1784
    %v2064 = vpop.f32.mrb[0].mxu0
    %v2065 = vadd.f32 %v1923, %v2064
    %v2066 = vpop.f32.mrb[0].mxu0
    %v2067 = vadd.f32 %v1925, %v2066
    %2068 = vdwg.mxu0
    %v2069 = vadd.f32 %v1994, %v294
    %v2070 = vadd.f32 %v1996, %v298
    %v2071 = vadd.f32 %v2065, %v302
    %v2072 = vadd.f32 %v2067, %v306
    %v2073 = vmul.f32 %v2069, 0.5
    %v2074 = vtanh.pop %v2073
    %v2075 = vmul.f32 %v2074, 0.5
    %v2076 = vadd.f32 %v2075, 0.5
    %v2077 = vmul.f32 %v2070, 0.5
    %v2078 = vtanh.pop %v2077
    %v2079 = vmul.f32 %v2078, 0.5
    %v2080 = vadd.f32 %v2079, 0.5
    %v2081 = vtanh.pop %v2071
    %v2082 = vmul.f32 %v2072, 0.5
    %v2083 = vtanh.pop %v2082
    %v2084 = vmul.f32 %v2083, 0.5
    %v2085 = vadd.f32 %v2084, 0.5
    %v2086 = vmul.f32 %v2080, %v1613
    %v2087 = vmul.f32 %v2076, %v2081
    %v2088 = vadd.f32 %v2086, %v2087
    %v2089 = vtanh.pop %v2088
    %v2090 = vmul.f32 %v2085, %v2089
    %s2091 = scalar_lea.vmem [#allocation2], 96
    %v2092 = vld [vmem:[%s2091] sm:$0xff]
    %v2093 = vld [vmem:[%s2091 + $0x8] sm:$0xff]
    %v2094 = vld [vmem:[%s2091 + $0x10] sm:$0xff]
    %v2095 = vld [vmem:[%s2091 + $0x18] sm:$0xff]
    %2096 = vmatprep.subr.mxu0 %v98
    %2097 = vmatpush1.msra.mxu0 %v97
    %2098 = vmatprep.subr.mxu0 %v102
    %2099 = vmatpush1.msra.mxu0 %v101
    %2100 = vmatprep.subr.mxu0 %v106
    %2101 = vmatpush1.msra.mxu0 %v105
    %2102 = vmatprep.subr.mxu0 %v110
    %2103 = vmatpush1.msra.mxu0 %v109
    %2104 = vmatprep.subr.mxu0 %v114
    %2105 = vmatpush1.msra.mxu0 %v113
    %2106 = vmatprep.subr.mxu0 %v118
    %2107 = vmatpush1.msra.mxu0 %v117
    %2108 = vmatprep.subr.mxu0 %v122
    %2109 = vmatpush1.msra.mxu0 %v121
    %2110 = vmatprep.subr.mxu0 %v126
    %2111 = vmatpush1.msra.mxu0 %v125
    %2112 = vmatprep.subr.mxu0 %v130
    %2113 = vmatpush1.msra.mxu0 %v129
    %2114 = vmatprep.subr.mxu0 %v134
    %2115 = vmatpush1.msra.mxu0 %v133
    %2116 = vmatprep.subr.mxu0 %v138
    %2117 = vmatpush1.msra.mxu0 %v137
    %2118 = vmatprep.subr.mxu0 %v142
    %2119 = vmatpush1.msra.mxu0 %v141
    %2120 = vmatprep.subr.mxu0 %v146
    %2121 = vmatpush1.msra.mxu0 %v145
    %2122 = vmatprep.subr.mxu0 %v150
    %2123 = vmatpush1.msra.mxu0 %v149
    %2124 = vmatprep.subr.mxu0 %v154
    %2125 = vmatpush1.msra.mxu0 %v153
    %2126 = vmatprep.subr.mxu0 %v158
    %2127 = vmatpush1.msra.mxu0 %v157
    %2128 = vmatprep.subr.mxu0 0.0
    %2129 = vmatpush1.msra.mxu0 0.0
    %2130 = vmatprep.subr.mxu0 0.0
    %2131 = vmatpush1.msra.mxu0 0.0
    %2132 = vmatprep.subr.mxu0 0.0
    %2133 = vmatpush1.msra.mxu0 0.0
    %2134 = vmatprep.subr.mxu0 0.0
    %2135 = vmatpush1.msra.mxu0 0.0
    %2136 = vmatprep.subr.mxu0 0.0
    %2137 = vmatpush1.msra.mxu0 0.0
    %2138 = vmatprep.subr.mxu0 0.0
    %2139 = vmatpush1.msra.mxu0 0.0
    %2140 = vmatprep.subr.mxu0 0.0
    %2141 = vmatpush1.msra.mxu0 0.0
    %2142 = vmatprep.subr.mxu0 0.0
    %2143 = vmatpush1.msra.mxu0 0.0
    %2144 = vmatprep.subr.mxu0 0.0
    %2145 = vmatpush1.msra.mxu0 0.0
    %2146 = vmatprep.subr.mxu0 0.0
    %2147 = vmatpush1.msra.mxu0 0.0
    %2148 = vmatprep.subr.mxu0 0.0
    %2149 = vmatpush1.msra.mxu0 0.0
    %2150 = vmatprep.subr.mxu0 0.0
    %2151 = vmatpush1.msra.mxu0 0.0
    %2152 = vmatprep.subr.mxu0 0.0
    %2153 = vmatpush1.msra.mxu0 0.0
    %2154 = vmatprep.subr.mxu0 0.0
    %2155 = vmatpush1.msra.mxu0 0.0
    %2156 = vmatprep.subr.mxu0 0.0
    %2157 = vmatpush1.msra.mxu0 0.0
    %2158 = vmatprep.subr.mxu0 0.0
    %2159 = vmatpush1.msra.mxu0 0.0
    %2160 = vmatprep.mubr.f32.mxu0 0.0
    %2161 = vmatmul.mubr.f32.gmra.mrb[0].mxu0 %v1784
    %v2162 = vpop.f32.mrb[0].mxu0
    %v2163 = vadd.f32 0.0, %v2162
    %v2164 = vpop.f32.mrb[0].mxu0
    %v2165 = vadd.f32 0.0, %v2164
    %2166 = vdwg.mxu0
    %2167 = vmatprep.subr.mxu0 %v100
    %2168 = vmatpush1.msra.mxu0 %v99
    %2169 = vmatprep.subr.mxu0 %v104
    %2170 = vmatpush1.msra.mxu0 %v103
    %2171 = vmatprep.subr.mxu0 %v108
    %2172 = vmatpush1.msra.mxu0 %v107
    %2173 = vmatprep.subr.mxu0 %v112
    %2174 = vmatpush1.msra.mxu0 %v111
    %2175 = vmatprep.subr.mxu0 %v116
    %2176 = vmatpush1.msra.mxu0 %v115
    %2177 = vmatprep.subr.mxu0 %v120
    %2178 = vmatpush1.msra.mxu0 %v119
    %2179 = vmatprep.subr.mxu0 %v124
    %2180 = vmatpush1.msra.mxu0 %v123
    %2181 = vmatprep.subr.mxu0 %v128
    %2182 = vmatpush1.msra.mxu0 %v127
    %2183 = vmatprep.subr.mxu0 %v132
    %2184 = vmatpush1.msra.mxu0 %v131
    %2185 = vmatprep.subr.mxu0 %v136
    %2186 = vmatpush1.msra.mxu0 %v135
    %2187 = vmatprep.subr.mxu0 %v140
    %2188 = vmatpush1.msra.mxu0 %v139
    %2189 = vmatprep.subr.mxu0 %v144
    %2190 = vmatpush1.msra.mxu0 %v143
    %2191 = vmatprep.subr.mxu0 %v148
    %2192 = vmatpush1.msra.mxu0 %v147
    %2193 = vmatprep.subr.mxu0 %v152
    %2194 = vmatpush1.msra.mxu0 %v151
    %2195 = vmatprep.subr.mxu0 %v156
    %2196 = vmatpush1.msra.mxu0 %v155
    %2197 = vmatprep.subr.mxu0 %v160
    %2198 = vmatpush1.msra.mxu0 %v159
    %2199 = vmatprep.subr.mxu0 0.0
    %2200 = vmatpush1.msra.mxu0 0.0
    %2201 = vmatprep.subr.mxu0 0.0
    %2202 = vmatpush1.msra.mxu0 0.0
    %2203 = vmatprep.subr.mxu0 0.0
    %2204 = vmatpush1.msra.mxu0 0.0
    %2205 = vmatprep.subr.mxu0 0.0
    %2206 = vmatpush1.msra.mxu0 0.0
    %2207 = vmatprep.subr.mxu0 0.0
    %2208 = vmatpush1.msra.mxu0 0.0
    %2209 = vmatprep.subr.mxu0 0.0
    %2210 = vmatpush1.msra.mxu0 0.0
    %2211 = vmatprep.subr.mxu0 0.0
    %2212 = vmatpush1.msra.mxu0 0.0
    %2213 = vmatprep.subr.mxu0 0.0
    %2214 = vmatpush1.msra.mxu0 0.0
    %2215 = vmatprep.subr.mxu0 0.0
    %2216 = vmatpush1.msra.mxu0 0.0
    %2217 = vmatprep.subr.mxu0 0.0
    %2218 = vmatpush1.msra.mxu0 0.0
    %2219 = vmatprep.subr.mxu0 0.0
    %2220 = vmatpush1.msra.mxu0 0.0
    %2221 = vmatprep.subr.mxu0 0.0
    %2222 = vmatpush1.msra.mxu0 0.0
    %2223 = vmatprep.subr.mxu0 0.0
    %2224 = vmatpush1.msra.mxu0 0.0
    %2225 = vmatprep.subr.mxu0 0.0
    %2226 = vmatpush1.msra.mxu0 0.0
    %2227 = vmatprep.subr.mxu0 0.0
    %2228 = vmatpush1.msra.mxu0 0.0
    %2229 = vmatprep.subr.mxu0 0.0
    %2230 = vmatpush1.msra.mxu0 0.0
    %2231 = vmatprep.mubr.f32.mxu0 0.0
    %2232 = vmatmul.mubr.f32.gmra.mrb[0].mxu0 %v1784
    %v2233 = vpop.f32.mrb[0].mxu0
    %v2234 = vadd.f32 0.0, %v2233
    %v2235 = vpop.f32.mrb[0].mxu0
    %v2236 = vadd.f32 0.0, %v2235
    %2237 = vdwg.mxu0
    %v2238 = vadd.f32 %v2092, %v2163
    %v2239 = vadd.f32 %v2093, %v2165
    %v2240 = vadd.f32 %v2094, %v2234
    %v2241 = vadd.f32 %v2095, %v2236
    %v2242 = vmul.f32 %v2238, 0.5
    %v2243 = vtanh.pop %v2242
    %v2244 = vmul.f32 %v2243, 0.5
    %v2245 = vadd.f32 %v2244, 0.5
    %v2246 = vmul.f32 %v2239, 0.5
    %v2247 = vtanh.pop %v2246
    %v2248 = vmul.f32 %v2247, 0.5
    %v2249 = vadd.f32 %v2248, 0.5
    %v2250 = vtanh.pop %v2240
    %v2251 = vmul.f32 %v2241, 0.5
    %v2252 = vtanh.pop %v2251
    %v2253 = vmul.f32 %v2252, 0.5
    %v2254 = vadd.f32 %v2253, 0.5
    %v2255 = vmul.f32 %v2249, %v1782
    %v2256 = vmul.f32 %v2245, %v2250
    %v2257 = vadd.f32 %v2255, %v2256
    %v2258 = vtanh.pop %v2257
    %v2259 = vmul.f32 %v2254, %v2258
    %2260 = vmatprep.subr.mxu0 %v226
    %2261 = vmatpush1.msra.mxu0 %v225
    %2262 = vmatprep.subr.mxu0 %v230
    %2263 = vmatpush1.msra.mxu0 %v229
    %2264 = vmatprep.subr.mxu0 %v234
    %2265 = vmatpush1.msra.mxu0 %v233
    %2266 = vmatprep.subr.mxu0 %v238
    %2267 = vmatpush1.msra.mxu0 %v237
    %2268 = vmatprep.subr.mxu0 %v242
    %2269 = vmatpush1.msra.mxu0 %v241
    %2270 = vmatprep.subr.mxu0 %v246
    %2271 = vmatpush1.msra.mxu0 %v245
    %2272 = vmatprep.subr.mxu0 %v250
    %2273 = vmatpush1.msra.mxu0 %v249
    %2274 = vmatprep.subr.mxu0 %v254
    %2275 = vmatpush1.msra.mxu0 %v253
    %2276 = vmatprep.subr.mxu0 %v258
    %2277 = vmatpush1.msra.mxu0 %v257
    %2278 = vmatprep.subr.mxu0 %v262
    %2279 = vmatpush1.msra.mxu0 %v261
    %2280 = vmatprep.subr.mxu0 %v266
    %2281 = vmatpush1.msra.mxu0 %v265
    %2282 = vmatprep.subr.mxu0 %v270
    %2283 = vmatpush1.msra.mxu0 %v269
    %2284 = vmatprep.subr.mxu0 %v274
    %2285 = vmatpush1.msra.mxu0 %v273
    %2286 = vmatprep.subr.mxu0 %v278
    %2287 = vmatpush1.msra.mxu0 %v277
    %2288 = vmatprep.subr.mxu0 %v282
    %2289 = vmatpush1.msra.mxu0 %v281
    %2290 = vmatprep.subr.mxu0 %v286
    %2291 = vmatpush1.msra.mxu0 %v285
    %2292 = vmatprep.subr.mxu0 0.0
    %2293 = vmatpush1.msra.mxu0 0.0
    %2294 = vmatprep.subr.mxu0 0.0
    %2295 = vmatpush1.msra.mxu0 0.0
    %2296 = vmatprep.subr.mxu0 0.0
    %2297 = vmatpush1.msra.mxu0 0.0
    %2298 = vmatprep.subr.mxu0 0.0
    %2299 = vmatpush1.msra.mxu0 0.0
    %2300 = vmatprep.subr.mxu0 0.0
    %2301 = vmatpush1.msra.mxu0 0.0
    %2302 = vmatprep.subr.mxu0 0.0
    %2303 = vmatpush1.msra.mxu0 0.0
    %2304 = vmatprep.subr.mxu0 0.0
    %2305 = vmatpush1.msra.mxu0 0.0
    %2306 = vmatprep.subr.mxu0 0.0
    %2307 = vmatpush1.msra.mxu0 0.0
    %2308 = vmatprep.subr.mxu0 0.0
    %2309 = vmatpush1.msra.mxu0 0.0
    %2310 = vmatprep.subr.mxu0 0.0
    %2311 = vmatpush1.msra.mxu0 0.0
    %2312 = vmatprep.subr.mxu0 0.0
    %2313 = vmatpush1.msra.mxu0 0.0
    %2314 = vmatprep.subr.mxu0 0.0
    %2315 = vmatpush1.msra.mxu0 0.0
    %2316 = vmatprep.subr.mxu0 0.0
    %2317 = vmatpush1.msra.mxu0 0.0
    %2318 = vmatprep.subr.mxu0 0.0
    %2319 = vmatpush1.msra.mxu0 0.0
    %2320 = vmatprep.subr.mxu0 0.0
    %2321 = vmatpush1.msra.mxu0 0.0
    %2322 = vmatprep.subr.mxu0 0.0
    %2323 = vmatpush1.msra.mxu0 0.0
    %2324 = vmatprep.mubr.f32.mxu0 0.0
    %2325 = vmatmul.mubr.f32.gmra.mrb[0].mxu0 %v2090
    %v2326 = vpop.f32.mrb[0].mxu0
    %v2327 = vadd.f32 0.0, %v2326
    %v2328 = vpop.f32.mrb[0].mxu0
    %v2329 = vadd.f32 0.0, %v2328
    %2330 = vdwg.mxu0
    %2331 = vmatprep.subr.mxu0 %v228
    %2332 = vmatpush1.msra.mxu0 %v227
    %2333 = vmatprep.subr.mxu0 %v232
    %2334 = vmatpush1.msra.mxu0 %v231
    %2335 = vmatprep.subr.mxu0 %v236
    %2336 = vmatpush1.msra.mxu0 %v235
    %2337 = vmatprep.subr.mxu0 %v240
    %2338 = vmatpush1.msra.mxu0 %v239
    %2339 = vmatprep.subr.mxu0 %v244
    %2340 = vmatpush1.msra.mxu0 %v243
    %2341 = vmatprep.subr.mxu0 %v248
    %2342 = vmatpush1.msra.mxu0 %v247
    %2343 = vmatprep.subr.mxu0 %v252
    %2344 = vmatpush1.msra.mxu0 %v251
    %2345 = vmatprep.subr.mxu0 %v256
    %2346 = vmatpush1.msra.mxu0 %v255
    %2347 = vmatprep.subr.mxu0 %v260
    %2348 = vmatpush1.msra.mxu0 %v259
    %2349 = vmatprep.subr.mxu0 %v264
    %2350 = vmatpush1.msra.mxu0 %v263
    %2351 = vmatprep.subr.mxu0 %v268
    %2352 = vmatpush1.msra.mxu0 %v267
    %2353 = vmatprep.subr.mxu0 %v272
    %2354 = vmatpush1.msra.mxu0 %v271
    %2355 = vmatprep.subr.mxu0 %v276
    %2356 = vmatpush1.msra.mxu0 %v275
    %2357 = vmatprep.subr.mxu0 %v280
    %2358 = vmatpush1.msra.mxu0 %v279
    %2359 = vmatprep.subr.mxu0 %v284
    %2360 = vmatpush1.msra.mxu0 %v283
    %2361 = vmatprep.subr.mxu0 %v288
    %2362 = vmatpush1.msra.mxu0 %v287
    %2363 = vmatprep.subr.mxu0 0.0
    %2364 = vmatpush1.msra.mxu0 0.0
    %2365 = vmatprep.subr.mxu0 0.0
    %2366 = vmatpush1.msra.mxu0 0.0
    %2367 = vmatprep.subr.mxu0 0.0
    %2368 = vmatpush1.msra.mxu0 0.0
    %2369 = vmatprep.subr.mxu0 0.0
    %2370 = vmatpush1.msra.mxu0 0.0
    %2371 = vmatprep.subr.mxu0 0.0
    %2372 = vmatpush1.msra.mxu0 0.0
    %2373 = vmatprep.subr.mxu0 0.0
    %2374 = vmatpush1.msra.mxu0 0.0
    %2375 = vmatprep.subr.mxu0 0.0
    %2376 = vmatpush1.msra.mxu0 0.0
    %2377 = vmatprep.subr.mxu0 0.0
    %2378 = vmatpush1.msra.mxu0 0.0
    %2379 = vmatprep.subr.mxu0 0.0
    %2380 = vmatpush1.msra.mxu0 0.0
    %2381 = vmatprep.subr.mxu0 0.0
    %2382 = vmatpush1.msra.mxu0 0.0
    %2383 = vmatprep.subr.mxu0 0.0
    %2384 = vmatpush1.msra.mxu0 0.0
    %2385 = vmatprep.subr.mxu0 0.0
    %2386 = vmatpush1.msra.mxu0 0.0
    %2387 = vmatprep.subr.mxu0 0.0
    %2388 = vmatpush1.msra.mxu0 0.0
    %2389 = vmatprep.subr.mxu0 0.0
    %2390 = vmatpush1.msra.mxu0 0.0
    %2391 = vmatprep.subr.mxu0 0.0
    %2392 = vmatpush1.msra.mxu0 0.0
    %2393 = vmatprep.subr.mxu0 0.0
    %2394 = vmatpush1.msra.mxu0 0.0
    %2395 = vmatprep.mubr.f32.mxu0 0.0
    %2396 = vmatmul.mubr.f32.gmra.mrb[0].mxu0 %v2090
    %v2397 = vpop.f32.mrb[0].mxu0
    %v2398 = vadd.f32 0.0, %v2397
    %v2399 = vpop.f32.mrb[0].mxu0
    %v2400 = vadd.f32 0.0, %v2399
    %2401 = vdwg.mxu0
    %2402 = vmatprep.subr.mxu0 %v162
    %2403 = vmatpush1.msra.mxu0 %v161
    %2404 = vmatprep.subr.mxu0 %v166
    %2405 = vmatpush1.msra.mxu0 %v165
    %2406 = vmatprep.subr.mxu0 %v170
    %2407 = vmatpush1.msra.mxu0 %v169
    %2408 = vmatprep.subr.mxu0 %v174
    %2409 = vmatpush1.msra.mxu0 %v173
    %2410 = vmatprep.subr.mxu0 %v178
    %2411 = vmatpush1.msra.mxu0 %v177
    %2412 = vmatprep.subr.mxu0 %v182
    %2413 = vmatpush1.msra.mxu0 %v181
    %2414 = vmatprep.subr.mxu0 %v186
    %2415 = vmatpush1.msra.mxu0 %v185
    %2416 = vmatprep.subr.mxu0 %v190
    %2417 = vmatpush1.msra.mxu0 %v189
    %2418 = vmatprep.subr.mxu0 %v194
    %2419 = vmatpush1.msra.mxu0 %v193
    %2420 = vmatprep.subr.mxu0 %v198
    %2421 = vmatpush1.msra.mxu0 %v197
    %2422 = vmatprep.subr.mxu0 %v202
    %2423 = vmatpush1.msra.mxu0 %v201
    %2424 = vmatprep.subr.mxu0 %v206
    %2425 = vmatpush1.msra.mxu0 %v205
    %2426 = vmatprep.subr.mxu0 %v210
    %2427 = vmatpush1.msra.mxu0 %v209
    %2428 = vmatprep.subr.mxu0 %v214
    %2429 = vmatpush1.msra.mxu0 %v213
    %2430 = vmatprep.subr.mxu0 %v218
    %2431 = vmatpush1.msra.mxu0 %v217
    %2432 = vmatprep.subr.mxu0 %v222
    %2433 = vmatpush1.msra.mxu0 %v221
    %2434 = vmatprep.subr.mxu0 0.0
    %2435 = vmatpush1.msra.mxu0 0.0
    %2436 = vmatprep.subr.mxu0 0.0
    %2437 = vmatpush1.msra.mxu0 0.0
    %2438 = vmatprep.subr.mxu0 0.0
    %2439 = vmatpush1.msra.mxu0 0.0
    %2440 = vmatprep.subr.mxu0 0.0
    %2441 = vmatpush1.msra.mxu0 0.0
    %2442 = vmatprep.subr.mxu0 0.0
    %2443 = vmatpush1.msra.mxu0 0.0
    %2444 = vmatprep.subr.mxu0 0.0
    %2445 = vmatpush1.msra.mxu0 0.0
    %2446 = vmatprep.subr.mxu0 0.0
    %2447 = vmatpush1.msra.mxu0 0.0
    %2448 = vmatprep.subr.mxu0 0.0
    %2449 = vmatpush1.msra.mxu0 0.0
    %2450 = vmatprep.subr.mxu0 0.0
    %2451 = vmatpush1.msra.mxu0 0.0
    %2452 = vmatprep.subr.mxu0 0.0
    %2453 = vmatpush1.msra.mxu0 0.0
    %2454 = vmatprep.subr.mxu0 0.0
    %2455 = vmatpush1.msra.mxu0 0.0
    %2456 = vmatprep.subr.mxu0 0.0
    %2457 = vmatpush1.msra.mxu0 0.0
    %2458 = vmatprep.subr.mxu0 0.0
    %2459 = vmatpush1.msra.mxu0 0.0
    %2460 = vmatprep.subr.mxu0 0.0
    %2461 = vmatpush1.msra.mxu0 0.0
    %2462 = vmatprep.subr.mxu0 0.0
    %2463 = vmatpush1.msra.mxu0 0.0
    %2464 = vmatprep.subr.mxu0 0.0
    %2465 = vmatpush1.msra.mxu0 0.0
    %2466 = vmatprep.mubr.f32.mxu0 0.0
    %2467 = vmatmul.mubr.f32.gmra.mrb[0].mxu0 %v2259
    %v2468 = vpop.f32.mrb[0].mxu0
    %v2469 = vadd.f32 %v2327, %v2468
    %v2470 = vpop.f32.mrb[0].mxu0
    %v2471 = vadd.f32 %v2329, %v2470
    %2472 = vdwg.mxu0
    %2473 = vmatprep.subr.mxu0 %v164
    %2474 = vmatpush1.msra.mxu0 %v163
    %2475 = vmatprep.subr.mxu0 %v168
    %2476 = vmatpush1.msra.mxu0 %v167
    %2477 = vmatprep.subr.mxu0 %v172
    %2478 = vmatpush1.msra.mxu0 %v171
    %2479 = vmatprep.subr.mxu0 %v176
    %2480 = vmatpush1.msra.mxu0 %v175
    %2481 = vmatprep.subr.mxu0 %v180
    %2482 = vmatpush1.msra.mxu0 %v179
    %2483 = vmatprep.subr.mxu0 %v184
    %2484 = vmatpush1.msra.mxu0 %v183
    %2485 = vmatprep.subr.mxu0 %v188
    %2486 = vmatpush1.msra.mxu0 %v187
    %2487 = vmatprep.subr.mxu0 %v192
    %2488 = vmatpush1.msra.mxu0 %v191
    %2489 = vmatprep.subr.mxu0 %v196
    %2490 = vmatpush1.msra.mxu0 %v195
    %2491 = vmatprep.subr.mxu0 %v200
    %2492 = vmatpush1.msra.mxu0 %v199
    %2493 = vmatprep.subr.mxu0 %v204
    %2494 = vmatpush1.msra.mxu0 %v203
    %2495 = vmatprep.subr.mxu0 %v208
    %2496 = vmatpush1.msra.mxu0 %v207
    %2497 = vmatprep.subr.mxu0 %v212
    %2498 = vmatpush1.msra.mxu0 %v211
    %2499 = vmatprep.subr.mxu0 %v216
    %2500 = vmatpush1.msra.mxu0 %v215
    %2501 = vmatprep.subr.mxu0 %v220
    %2502 = vmatpush1.msra.mxu0 %v219
    %2503 = vmatprep.subr.mxu0 %v224
    %2504 = vmatpush1.msra.mxu0 %v223
    %2505 = vmatprep.subr.mxu0 0.0
    %2506 = vmatpush1.msra.mxu0 0.0
    %2507 = vmatprep.subr.mxu0 0.0
    %2508 = vmatpush1.msra.mxu0 0.0
    %2509 = vmatprep.subr.mxu0 0.0
    %2510 = vmatpush1.msra.mxu0 0.0
    %2511 = vmatprep.subr.mxu0 0.0
    %2512 = vmatpush1.msra.mxu0 0.0
    %2513 = vmatprep.subr.mxu0 0.0
    %2514 = vmatpush1.msra.mxu0 0.0
    %2515 = vmatprep.subr.mxu0 0.0
    %2516 = vmatpush1.msra.mxu0 0.0
    %2517 = vmatprep.subr.mxu0 0.0
    %2518 = vmatpush1.msra.mxu0 0.0
    %2519 = vmatprep.subr.mxu0 0.0
    %2520 = vmatpush1.msra.mxu0 0.0
    %2521 = vmatprep.subr.mxu0 0.0
    %2522 = vmatpush1.msra.mxu0 0.0
    %2523 = vmatprep.subr.mxu0 0.0
    %2524 = vmatpush1.msra.mxu0 0.0
    %2525 = vmatprep.subr.mxu0 0.0
    %2526 = vmatpush1.msra.mxu0 0.0
    %2527 = vmatprep.subr.mxu0 0.0
    %2528 = vmatpush1.msra.mxu0 0.0
    %2529 = vmatprep.subr.mxu0 0.0
    %2530 = vmatpush1.msra.mxu0 0.0
    %2531 = vmatprep.subr.mxu0 0.0
    %2532 = vmatpush1.msra.mxu0 0.0
    %2533 = vmatprep.subr.mxu0 0.0
    %2534 = vmatpush1.msra.mxu0 0.0
    %2535 = vmatprep.subr.mxu0 0.0
    %2536 = vmatpush1.msra.mxu0 0.0
    %2537 = vmatprep.mubr.f32.mxu0 0.0
    %2538 = vmatmul.mubr.f32.gmra.mrb[0].mxu0 %v2259
    %v2539 = vpop.f32.mrb[0].mxu0
    %v2540 = vadd.f32 %v2398, %v2539
    %v2541 = vpop.f32.mrb[0].mxu0
    %v2542 = vadd.f32 %v2400, %v2541
    %2543 = vdwg.mxu0
    %v2544 = vadd.f32 %v2469, %v294
    %v2545 = vadd.f32 %v2471, %v298
    %v2546 = vadd.f32 %v2540, %v302
    %v2547 = vadd.f32 %v2542, %v306
    %v2548 = vmul.f32 %v2544, 0.5
    %v2549 = vtanh.pop %v2548
    %v2550 = vmul.f32 %v2549, 0.5
    %v2551 = vadd.f32 %v2550, 0.5
    %v2552 = vmul.f32 %v2545, 0.5
    %v2553 = vtanh.pop %v2552
    %v2554 = vmul.f32 %v2553, 0.5
    %v2555 = vadd.f32 %v2554, 0.5
    %v2556 = vtanh.pop %v2546
    %v2557 = vmul.f32 %v2547, 0.5
    %v2558 = vtanh.pop %v2557
    %v2559 = vmul.f32 %v2558, 0.5
    %v2560 = vadd.f32 %v2559, 0.5
    %v2561 = vmul.f32 %v2555, %v2088
    %v2562 = vmul.f32 %v2551, %v2556
    %v2563 = vadd.f32 %v2561, %v2562
    %v2564 = vtanh.pop %v2563
    %v2565 = vmul.f32 %v2560, %v2564
    %s2566 = scalar_lea.vmem [#allocation2], 128
    %v2567 = vld [vmem:[%s2566] sm:$0xff]
    %v2568 = vld [vmem:[%s2566 + $0x8] sm:$0xff]
    %v2569 = vld [vmem:[%s2566 + $0x10] sm:$0xff]
    %v2570 = vld [vmem:[%s2566 + $0x18] sm:$0xff]
    %2571 = vmatprep.subr.mxu0 %v98
    %2572 = vmatpush1.msra.mxu0 %v97
    %2573 = vmatprep.subr.mxu0 %v102
    %2574 = vmatpush1.msra.mxu0 %v101
    %2575 = vmatprep.subr.mxu0 %v106
    %2576 = vmatpush1.msra.mxu0 %v105
    %2577 = vmatprep.subr.mxu0 %v110
    %2578 = vmatpush1.msra.mxu0 %v109
    %2579 = vmatprep.subr.mxu0 %v114
    %2580 = vmatpush1.msra.mxu0 %v113
    %2581 = vmatprep.subr.mxu0 %v118
    %2582 = vmatpush1.msra.mxu0 %v117
    %2583 = vmatprep.subr.mxu0 %v122
    %2584 = vmatpush1.msra.mxu0 %v121
    %2585 = vmatprep.subr.mxu0 %v126
    %2586 = vmatpush1.msra.mxu0 %v125
    %2587 = vmatprep.subr.mxu0 %v130
    %2588 = vmatpush1.msra.mxu0 %v129
    %2589 = vmatprep.subr.mxu0 %v134
    %2590 = vmatpush1.msra.mxu0 %v133
    %2591 = vmatprep.subr.mxu0 %v138
    %2592 = vmatpush1.msra.mxu0 %v137
    %2593 = vmatprep.subr.mxu0 %v142
    %2594 = vmatpush1.msra.mxu0 %v141
    %2595 = vmatprep.subr.mxu0 %v146
    %2596 = vmatpush1.msra.mxu0 %v145
    %2597 = vmatprep.subr.mxu0 %v150
    %2598 = vmatpush1.msra.mxu0 %v149
    %2599 = vmatprep.subr.mxu0 %v154
    %2600 = vmatpush1.msra.mxu0 %v153
    %2601 = vmatprep.subr.mxu0 %v158
    %2602 = vmatpush1.msra.mxu0 %v157
    %2603 = vmatprep.subr.mxu0 0.0
    %2604 = vmatpush1.msra.mxu0 0.0
    %2605 = vmatprep.subr.mxu0 0.0
    %2606 = vmatpush1.msra.mxu0 0.0
    %2607 = vmatprep.subr.mxu0 0.0
    %2608 = vmatpush1.msra.mxu0 0.0
    %2609 = vmatprep.subr.mxu0 0.0
    %2610 = vmatpush1.msra.mxu0 0.0
    %2611 = vmatprep.subr.mxu0 0.0
    %2612 = vmatpush1.msra.mxu0 0.0
    %2613 = vmatprep.subr.mxu0 0.0
    %2614 = vmatpush1.msra.mxu0 0.0
    %2615 = vmatprep.subr.mxu0 0.0
    %2616 = vmatpush1.msra.mxu0 0.0
    %2617 = vmatprep.subr.mxu0 0.0
    %2618 = vmatpush1.msra.mxu0 0.0
    %2619 = vmatprep.subr.mxu0 0.0
    %2620 = vmatpush1.msra.mxu0 0.0
    %2621 = vmatprep.subr.mxu0 0.0
    %2622 = vmatpush1.msra.mxu0 0.0
    %2623 = vmatprep.subr.mxu0 0.0
    %2624 = vmatpush1.msra.mxu0 0.0
    %2625 = vmatprep.subr.mxu0 0.0
    %2626 = vmatpush1.msra.mxu0 0.0
    %2627 = vmatprep.subr.mxu0 0.0
    %2628 = vmatpush1.msra.mxu0 0.0
    %2629 = vmatprep.subr.mxu0 0.0
    %2630 = vmatpush1.msra.mxu0 0.0
    %2631 = vmatprep.subr.mxu0 0.0
    %2632 = vmatpush1.msra.mxu0 0.0
    %2633 = vmatprep.subr.mxu0 0.0
    %2634 = vmatpush1.msra.mxu0 0.0
    %2635 = vmatprep.mubr.f32.mxu0 0.0
    %2636 = vmatmul.mubr.f32.gmra.mrb[0].mxu0 %v2259
    %v2637 = vpop.f32.mrb[0].mxu0
    %v2638 = vadd.f32 0.0, %v2637
    %v2639 = vpop.f32.mrb[0].mxu0
    %v2640 = vadd.f32 0.0, %v2639
    %2641 = vdwg.mxu0
    %2642 = vmatprep.subr.mxu0 %v100
    %2643 = vmatpush1.msra.mxu0 %v99
    %2644 = vmatprep.subr.mxu0 %v104
    %2645 = vmatpush1.msra.mxu0 %v103
    %2646 = vmatprep.subr.mxu0 %v108
    %2647 = vmatpush1.msra.mxu0 %v107
    %2648 = vmatprep.subr.mxu0 %v112
    %2649 = vmatpush1.msra.mxu0 %v111
    %2650 = vmatprep.subr.mxu0 %v116
    %2651 = vmatpush1.msra.mxu0 %v115
    %2652 = vmatprep.subr.mxu0 %v120
    %2653 = vmatpush1.msra.mxu0 %v119
    %2654 = vmatprep.subr.mxu0 %v124
    %2655 = vmatpush1.msra.mxu0 %v123
    %2656 = vmatprep.subr.mxu0 %v128
    %2657 = vmatpush1.msra.mxu0 %v127
    %2658 = vmatprep.subr.mxu0 %v132
    %2659 = vmatpush1.msra.mxu0 %v131
    %2660 = vmatprep.subr.mxu0 %v136
    %2661 = vmatpush1.msra.mxu0 %v135
    %2662 = vmatprep.subr.mxu0 %v140
    %2663 = vmatpush1.msra.mxu0 %v139
    %2664 = vmatprep.subr.mxu0 %v144
    %2665 = vmatpush1.msra.mxu0 %v143
    %2666 = vmatprep.subr.mxu0 %v148
    %2667 = vmatpush1.msra.mxu0 %v147
    %2668 = vmatprep.subr.mxu0 %v152
    %2669 = vmatpush1.msra.mxu0 %v151
    %2670 = vmatprep.subr.mxu0 %v156
    %2671 = vmatpush1.msra.mxu0 %v155
    %2672 = vmatprep.subr.mxu0 %v160
    %2673 = vmatpush1.msra.mxu0 %v159
    %2674 = vmatprep.subr.mxu0 0.0
    %2675 = vmatpush1.msra.mxu0 0.0
    %2676 = vmatprep.subr.mxu0 0.0
    %2677 = vmatpush1.msra.mxu0 0.0
    %2678 = vmatprep.subr.mxu0 0.0
    %2679 = vmatpush1.msra.mxu0 0.0
    %2680 = vmatprep.subr.mxu0 0.0
    %2681 = vmatpush1.msra.mxu0 0.0
    %2682 = vmatprep.subr.mxu0 0.0
    %2683 = vmatpush1.msra.mxu0 0.0
    %2684 = vmatprep.subr.mxu0 0.0
    %2685 = vmatpush1.msra.mxu0 0.0
    %2686 = vmatprep.subr.mxu0 0.0
    %2687 = vmatpush1.msra.mxu0 0.0
    %2688 = vmatprep.subr.mxu0 0.0
    %2689 = vmatpush1.msra.mxu0 0.0
    %2690 = vmatprep.subr.mxu0 0.0
    %2691 = vmatpush1.msra.mxu0 0.0
    %2692 = vmatprep.subr.mxu0 0.0
    %2693 = vmatpush1.msra.mxu0 0.0
    %2694 = vmatprep.subr.mxu0 0.0
    %2695 = vmatpush1.msra.mxu0 0.0
    %2696 = vmatprep.subr.mxu0 0.0
    %2697 = vmatpush1.msra.mxu0 0.0
    %2698 = vmatprep.subr.mxu0 0.0
    %2699 = vmatpush1.msra.mxu0 0.0
    %2700 = vmatprep.subr.mxu0 0.0
    %2701 = vmatpush1.msra.mxu0 0.0
    %2702 = vmatprep.subr.mxu0 0.0
    %2703 = vmatpush1.msra.mxu0 0.0
    %2704 = vmatprep.subr.mxu0 0.0
    %2705 = vmatpush1.msra.mxu0 0.0
    %2706 = vmatprep.mubr.f32.mxu0 0.0
    %2707 = vmatmul.mubr.f32.gmra.mrb[0].mxu0 %v2259
    %v2708 = vpop.f32.mrb[0].mxu0
    %v2709 = vadd.f32 0.0, %v2708
    %v2710 = vpop.f32.mrb[0].mxu0
    %v2711 = vadd.f32 0.0, %v2710
    %2712 = vdwg.mxu0
    %v2713 = vadd.f32 %v2567, %v2638
    %v2714 = vadd.f32 %v2568, %v2640
    %v2715 = vadd.f32 %v2569, %v2709
    %v2716 = vadd.f32 %v2570, %v2711
    %v2717 = vmul.f32 %v2713, 0.5
    %v2718 = vtanh.pop %v2717
    %v2719 = vmul.f32 %v2718, 0.5
    %v2720 = vadd.f32 %v2719, 0.5
    %v2721 = vmul.f32 %v2714, 0.5
    %v2722 = vtanh.pop %v2721
    %v2723 = vmul.f32 %v2722, 0.5
    %v2724 = vadd.f32 %v2723, 0.5
    %v2725 = vtanh.pop %v2715
    %v2726 = vmul.f32 %v2716, 0.5
    %v2727 = vtanh.pop %v2726
    %v2728 = vmul.f32 %v2727, 0.5
    %v2729 = vadd.f32 %v2728, 0.5
    %v2730 = vmul.f32 %v2724, %v2257
    %v2731 = vmul.f32 %v2720, %v2725
    %v2732 = vadd.f32 %v2730, %v2731
    %v2733 = vtanh.pop %v2732
    %v2734 = vmul.f32 %v2729, %v2733
    %2735 = vmatprep.subr.mxu0 %v226
    %2736 = vmatpush1.msra.mxu0 %v225
    %2737 = vmatprep.subr.mxu0 %v230
    %2738 = vmatpush1.msra.mxu0 %v229
    %2739 = vmatprep.subr.mxu0 %v234
    %2740 = vmatpush1.msra.mxu0 %v233
    %2741 = vmatprep.subr.mxu0 %v238
    %2742 = vmatpush1.msra.mxu0 %v237
    %2743 = vmatprep.subr.mxu0 %v242
    %2744 = vmatpush1.msra.mxu0 %v241
    %2745 = vmatprep.subr.mxu0 %v246
    %2746 = vmatpush1.msra.mxu0 %v245
    %2747 = vmatprep.subr.mxu0 %v250
    %2748 = vmatpush1.msra.mxu0 %v249
    %2749 = vmatprep.subr.mxu0 %v254
    %2750 = vmatpush1.msra.mxu0 %v253
    %2751 = vmatprep.subr.mxu0 %v258
    %2752 = vmatpush1.msra.mxu0 %v257
    %2753 = vmatprep.subr.mxu0 %v262
    %2754 = vmatpush1.msra.mxu0 %v261
    %2755 = vmatprep.subr.mxu0 %v266
    %2756 = vmatpush1.msra.mxu0 %v265
    %2757 = vmatprep.subr.mxu0 %v270
    %2758 = vmatpush1.msra.mxu0 %v269
    %2759 = vmatprep.subr.mxu0 %v274
    %2760 = vmatpush1.msra.mxu0 %v273
    %2761 = vmatprep.subr.mxu0 %v278
    %2762 = vmatpush1.msra.mxu0 %v277
    %2763 = vmatprep.subr.mxu0 %v282
    %2764 = vmatpush1.msra.mxu0 %v281
    %2765 = vmatprep.subr.mxu0 %v286
    %2766 = vmatpush1.msra.mxu0 %v285
    %2767 = vmatprep.subr.mxu0 0.0
    %2768 = vmatpush1.msra.mxu0 0.0
    %2769 = vmatprep.subr.mxu0 0.0
    %2770 = vmatpush1.msra.mxu0 0.0
    %2771 = vmatprep.subr.mxu0 0.0
    %2772 = vmatpush1.msra.mxu0 0.0
    %2773 = vmatprep.subr.mxu0 0.0
    %2774 = vmatpush1.msra.mxu0 0.0
    %2775 = vmatprep.subr.mxu0 0.0
    %2776 = vmatpush1.msra.mxu0 0.0
    %2777 = vmatprep.subr.mxu0 0.0
    %2778 = vmatpush1.msra.mxu0 0.0
    %2779 = vmatprep.subr.mxu0 0.0
    %2780 = vmatpush1.msra.mxu0 0.0
    %2781 = vmatprep.subr.mxu0 0.0
    %2782 = vmatpush1.msra.mxu0 0.0
    %2783 = vmatprep.subr.mxu0 0.0
    %2784 = vmatpush1.msra.mxu0 0.0
    %2785 = vmatprep.subr.mxu0 0.0
    %2786 = vmatpush1.msra.mxu0 0.0
    %2787 = vmatprep.subr.mxu0 0.0
    %2788 = vmatpush1.msra.mxu0 0.0
    %2789 = vmatprep.subr.mxu0 0.0
    %2790 = vmatpush1.msra.mxu0 0.0
    %2791 = vmatprep.subr.mxu0 0.0
    %2792 = vmatpush1.msra.mxu0 0.0
    %2793 = vmatprep.subr.mxu0 0.0
    %2794 = vmatpush1.msra.mxu0 0.0
    %2795 = vmatprep.subr.mxu0 0.0
    %2796 = vmatpush1.msra.mxu0 0.0
    %2797 = vmatprep.subr.mxu0 0.0
    %2798 = vmatpush1.msra.mxu0 0.0
    %2799 = vmatprep.mubr.f32.mxu0 0.0
    %2800 = vmatmul.mubr.f32.gmra.mrb[0].mxu0 %v2565
    %v2801 = vpop.f32.mrb[0].mxu0
    %v2802 = vadd.f32 0.0, %v2801
    %v2803 = vpop.f32.mrb[0].mxu0
    %v2804 = vadd.f32 0.0, %v2803
    %2805 = vdwg.mxu0
    %2806 = vmatprep.subr.mxu0 %v228
    %2807 = vmatpush1.msra.mxu0 %v227
    %2808 = vmatprep.subr.mxu0 %v232
    %2809 = vmatpush1.msra.mxu0 %v231
    %2810 = vmatprep.subr.mxu0 %v236
    %2811 = vmatpush1.msra.mxu0 %v235
    %2812 = vmatprep.subr.mxu0 %v240
    %2813 = vmatpush1.msra.mxu0 %v239
    %2814 = vmatprep.subr.mxu0 %v244
    %2815 = vmatpush1.msra.mxu0 %v243
    %2816 = vmatprep.subr.mxu0 %v248
    %2817 = vmatpush1.msra.mxu0 %v247
    %2818 = vmatprep.subr.mxu0 %v252
    %2819 = vmatpush1.msra.mxu0 %v251
    %2820 = vmatprep.subr.mxu0 %v256
    %2821 = vmatpush1.msra.mxu0 %v255
    %2822 = vmatprep.subr.mxu0 %v260
    %2823 = vmatpush1.msra.mxu0 %v259
    %2824 = vmatprep.subr.mxu0 %v264
    %2825 = vmatpush1.msra.mxu0 %v263
    %2826 = vmatprep.subr.mxu0 %v268
    %2827 = vmatpush1.msra.mxu0 %v267
    %2828 = vmatprep.subr.mxu0 %v272
    %2829 = vmatpush1.msra.mxu0 %v271
    %2830 = vmatprep.subr.mxu0 %v276
    %2831 = vmatpush1.msra.mxu0 %v275
    %2832 = vmatprep.subr.mxu0 %v280
    %2833 = vmatpush1.msra.mxu0 %v279
    %2834 = vmatprep.subr.mxu0 %v284
    %2835 = vmatpush1.msra.mxu0 %v283
    %2836 = vmatprep.subr.mxu0 %v288
    %2837 = vmatpush1.msra.mxu0 %v287
    %2838 = vmatprep.subr.mxu0 0.0
    %2839 = vmatpush1.msra.mxu0 0.0
    %2840 = vmatprep.subr.mxu0 0.0
    %2841 = vmatpush1.msra.mxu0 0.0
    %2842 = vmatprep.subr.mxu0 0.0
    %2843 = vmatpush1.msra.mxu0 0.0
    %2844 = vmatprep.subr.mxu0 0.0
    %2845 = vmatpush1.msra.mxu0 0.0
    %2846 = vmatprep.subr.mxu0 0.0
    %2847 = vmatpush1.msra.mxu0 0.0
    %2848 = vmatprep.subr.mxu0 0.0
    %2849 = vmatpush1.msra.mxu0 0.0
    %2850 = vmatprep.subr.mxu0 0.0
    %2851 = vmatpush1.msra.mxu0 0.0
    %2852 = vmatprep.subr.mxu0 0.0
    %2853 = vmatpush1.msra.mxu0 0.0
    %2854 = vmatprep.subr.mxu0 0.0
    %2855 = vmatpush1.msra.mxu0 0.0
    %2856 = vmatprep.subr.mxu0 0.0
    %2857 = vmatpush1.msra.mxu0 0.0
    %2858 = vmatprep.subr.mxu0 0.0
    %2859 = vmatpush1.msra.mxu0 0.0
    %2860 = vmatprep.subr.mxu0 0.0
    %2861 = vmatpush1.msra.mxu0 0.0
    %2862 = vmatprep.subr.mxu0 0.0
    %2863 = vmatpush1.msra.mxu0 0.0
    %2864 = vmatprep.subr.mxu0 0.0
    %2865 = vmatpush1.msra.mxu0 0.0
    %2866 = vmatprep.subr.mxu0 0.0
    %2867 = vmatpush1.msra.mxu0 0.0
    %2868 = vmatprep.subr.mxu0 0.0
    %2869 = vmatpush1.msra.mxu0 0.0
    %2870 = vmatprep.mubr.f32.mxu0 0.0
    %2871 = vmatmul.mubr.f32.gmra.mrb[0].mxu0 %v2565
    %v2872 = vpop.f32.mrb[0].mxu0
    %v2873 = vadd.f32 0.0, %v2872
    %v2874 = vpop.f32.mrb[0].mxu0
    %v2875 = vadd.f32 0.0, %v2874
    %2876 = vdwg.mxu0
    %2877 = vmatprep.subr.mxu0 %v162
    %2878 = vmatpush1.msra.mxu0 %v161
    %2879 = vmatprep.subr.mxu0 %v166
    %2880 = vmatpush1.msra.mxu0 %v165
    %2881 = vmatprep.subr.mxu0 %v170
    %2882 = vmatpush1.msra.mxu0 %v169
    %2883 = vmatprep.subr.mxu0 %v174
    %2884 = vmatpush1.msra.mxu0 %v173
    %2885 = vmatprep.subr.mxu0 %v178
    %2886 = vmatpush1.msra.mxu0 %v177
    %2887 = vmatprep.subr.mxu0 %v182
    %2888 = vmatpush1.msra.mxu0 %v181
    %2889 = vmatprep.subr.mxu0 %v186
    %2890 = vmatpush1.msra.mxu0 %v185
    %2891 = vmatprep.subr.mxu0 %v190
    %2892 = vmatpush1.msra.mxu0 %v189
    %2893 = vmatprep.subr.mxu0 %v194
    %2894 = vmatpush1.msra.mxu0 %v193
    %2895 = vmatprep.subr.mxu0 %v198
    %2896 = vmatpush1.msra.mxu0 %v197
    %2897 = vmatprep.subr.mxu0 %v202
    %2898 = vmatpush1.msra.mxu0 %v201
    %2899 = vmatprep.subr.mxu0 %v206
    %2900 = vmatpush1.msra.mxu0 %v205
    %2901 = vmatprep.subr.mxu0 %v210
    %2902 = vmatpush1.msra.mxu0 %v209
    %2903 = vmatprep.subr.mxu0 %v214
    %2904 = vmatpush1.msra.mxu0 %v213
    %2905 = vmatprep.subr.mxu0 %v218
    %2906 = vmatpush1.msra.mxu0 %v217
    %2907 = vmatprep.subr.mxu0 %v222
    %2908 = vmatpush1.msra.mxu0 %v221
    %2909 = vmatprep.subr.mxu0 0.0
    %2910 = vmatpush1.msra.mxu0 0.0
    %2911 = vmatprep.subr.mxu0 0.0
    %2912 = vmatpush1.msra.mxu0 0.0
    %2913 = vmatprep.subr.mxu0 0.0
    %2914 = vmatpush1.msra.mxu0 0.0
    %2915 = vmatprep.subr.mxu0 0.0
    %2916 = vmatpush1.msra.mxu0 0.0
    %2917 = vmatprep.subr.mxu0 0.0
    %2918 = vmatpush1.msra.mxu0 0.0
    %2919 = vmatprep.subr.mxu0 0.0
    %2920 = vmatpush1.msra.mxu0 0.0
    %2921 = vmatprep.subr.mxu0 0.0
    %2922 = vmatpush1.msra.mxu0 0.0
    %2923 = vmatprep.subr.mxu0 0.0
    %2924 = vmatpush1.msra.mxu0 0.0
    %2925 = vmatprep.subr.mxu0 0.0
    %2926 = vmatpush1.msra.mxu0 0.0
    %2927 = vmatprep.subr.mxu0 0.0
    %2928 = vmatpush1.msra.mxu0 0.0
    %2929 = vmatprep.subr.mxu0 0.0
    %2930 = vmatpush1.msra.mxu0 0.0
    %2931 = vmatprep.subr.mxu0 0.0
    %2932 = vmatpush1.msra.mxu0 0.0
    %2933 = vmatprep.subr.mxu0 0.0
    %2934 = vmatpush1.msra.mxu0 0.0
    %2935 = vmatprep.subr.mxu0 0.0
    %2936 = vmatpush1.msra.mxu0 0.0
    %2937 = vmatprep.subr.mxu0 0.0
    %2938 = vmatpush1.msra.mxu0 0.0
    %2939 = vmatprep.subr.mxu0 0.0
    %2940 = vmatpush1.msra.mxu0 0.0
    %2941 = vmatprep.mubr.f32.mxu0 0.0
    %2942 = vmatmul.mubr.f32.gmra.mrb[0].mxu0 %v2734
    %v2943 = vpop.f32.mrb[0].mxu0
    %v2944 = vadd.f32 %v2802, %v2943
    %v2945 = vpop.f32.mrb[0].mxu0
    %v2946 = vadd.f32 %v2804, %v2945
    %2947 = vdwg.mxu0
    %2948 = vmatprep.subr.mxu0 %v164
    %2949 = vmatpush1.msra.mxu0 %v163
    %2950 = vmatprep.subr.mxu0 %v168
    %2951 = vmatpush1.msra.mxu0 %v167
    %2952 = vmatprep.subr.mxu0 %v172
    %2953 = vmatpush1.msra.mxu0 %v171
    %2954 = vmatprep.subr.mxu0 %v176
    %2955 = vmatpush1.msra.mxu0 %v175
    %2956 = vmatprep.subr.mxu0 %v180
    %2957 = vmatpush1.msra.mxu0 %v179
    %2958 = vmatprep.subr.mxu0 %v184
    %2959 = vmatpush1.msra.mxu0 %v183
    %2960 = vmatprep.subr.mxu0 %v188
    %2961 = vmatpush1.msra.mxu0 %v187
    %2962 = vmatprep.subr.mxu0 %v192
    %2963 = vmatpush1.msra.mxu0 %v191
    %2964 = vmatprep.subr.mxu0 %v196
    %2965 = vmatpush1.msra.mxu0 %v195
    %2966 = vmatprep.subr.mxu0 %v200
    %2967 = vmatpush1.msra.mxu0 %v199
    %2968 = vmatprep.subr.mxu0 %v204
    %2969 = vmatpush1.msra.mxu0 %v203
    %2970 = vmatprep.subr.mxu0 %v208
    %2971 = vmatpush1.msra.mxu0 %v207
    %2972 = vmatprep.subr.mxu0 %v212
    %2973 = vmatpush1.msra.mxu0 %v211
    %2974 = vmatprep.subr.mxu0 %v216
    %2975 = vmatpush1.msra.mxu0 %v215
    %2976 = vmatprep.subr.mxu0 %v220
    %2977 = vmatpush1.msra.mxu0 %v219
    %2978 = vmatprep.subr.mxu0 %v224
    %2979 = vmatpush1.msra.mxu0 %v223
    %2980 = vmatprep.subr.mxu0 0.0
    %2981 = vmatpush1.msra.mxu0 0.0
    %2982 = vmatprep.subr.mxu0 0.0
    %2983 = vmatpush1.msra.mxu0 0.0
    %2984 = vmatprep.subr.mxu0 0.0
    %2985 = vmatpush1.msra.mxu0 0.0
    %2986 = vmatprep.subr.mxu0 0.0
    %2987 = vmatpush1.msra.mxu0 0.0
    %2988 = vmatprep.subr.mxu0 0.0
    %2989 = vmatpush1.msra.mxu0 0.0
    %2990 = vmatprep.subr.mxu0 0.0
    %2991 = vmatpush1.msra.mxu0 0.0
    %2992 = vmatprep.subr.mxu0 0.0
    %2993 = vmatpush1.msra.mxu0 0.0
    %2994 = vmatprep.subr.mxu0 0.0
    %2995 = vmatpush1.msra.mxu0 0.0
    %2996 = vmatprep.subr.mxu0 0.0
    %2997 = vmatpush1.msra.mxu0 0.0
    %2998 = vmatprep.subr.mxu0 0.0
    %2999 = vmatpush1.msra.mxu0 0.0
    %3000 = vmatprep.subr.mxu0 0.0
    %3001 = vmatpush1.msra.mxu0 0.0
    %3002 = vmatprep.subr.mxu0 0.0
    %3003 = vmatpush1.msra.mxu0 0.0
    %3004 = vmatprep.subr.mxu0 0.0
    %3005 = vmatpush1.msra.mxu0 0.0
    %3006 = vmatprep.subr.mxu0 0.0
    %3007 = vmatpush1.msra.mxu0 0.0
    %3008 = vmatprep.subr.mxu0 0.0
    %3009 = vmatpush1.msra.mxu0 0.0
    %3010 = vmatprep.subr.mxu0 0.0
    %3011 = vmatpush1.msra.mxu0 0.0
    %3012 = vmatprep.mubr.f32.mxu0 0.0
    %3013 = vmatmul.mubr.f32.gmra.mrb[0].mxu0 %v2734
    %v3014 = vpop.f32.mrb[0].mxu0
    %v3015 = vadd.f32 %v2873, %v3014
    %v3016 = vpop.f32.mrb[0].mxu0
    %v3017 = vadd.f32 %v2875, %v3016
    %3018 = vdwg.mxu0
    %v3019 = vadd.f32 %v2944, %v294
    %v3020 = vadd.f32 %v2946, %v298
    %v3021 = vadd.f32 %v3015, %v302
    %v3022 = vadd.f32 %v3017, %v306
    %v3023 = vmul.f32 %v3019, 0.5
    %v3024 = vtanh.pop %v3023
    %v3025 = vmul.f32 %v3024, 0.5
    %v3026 = vadd.f32 %v3025, 0.5
    %v3027 = vmul.f32 %v3020, 0.5
    %v3028 = vtanh.pop %v3027
    %v3029 = vmul.f32 %v3028, 0.5
    %v3030 = vadd.f32 %v3029, 0.5
    %v3031 = vtanh.pop %v3021
    %v3032 = vmul.f32 %v3022, 0.5
    %v3033 = vtanh.pop %v3032
    %v3034 = vmul.f32 %v3033, 0.5
    %v3035 = vadd.f32 %v3034, 0.5
    %v3036 = vmul.f32 %v3030, %v2563
    %v3037 = vmul.f32 %v3026, %v3031
    %v3038 = vadd.f32 %v3036, %v3037
    %v3039 = vtanh.pop %v3038
    %v3040 = vmul.f32 %v3035, %v3039
    %s3041 = scalar_lea.vmem [#allocation2], 160
    %v3042 = vld [vmem:[%s3041] sm:$0xff]
    %v3043 = vld [vmem:[%s3041 + $0x8] sm:$0xff]
    %v3044 = vld [vmem:[%s3041 + $0x10] sm:$0xff]
    %v3045 = vld [vmem:[%s3041 + $0x18] sm:$0xff]
    %3046 = vmatprep.subr.mxu0 %v98
    %3047 = vmatpush1.msra.mxu0 %v97
    %3048 = vmatprep.subr.mxu0 %v102
    %3049 = vmatpush1.msra.mxu0 %v101
    %3050 = vmatprep.subr.mxu0 %v106
    %3051 = vmatpush1.msra.mxu0 %v105
    %3052 = vmatprep.subr.mxu0 %v110
    %3053 = vmatpush1.msra.mxu0 %v109
    %3054 = vmatprep.subr.mxu0 %v114
    %3055 = vmatpush1.msra.mxu0 %v113
    %3056 = vmatprep.subr.mxu0 %v118
    %3057 = vmatpush1.msra.mxu0 %v117
    %3058 = vmatprep.subr.mxu0 %v122
    %3059 = vmatpush1.msra.mxu0 %v121
    %3060 = vmatprep.subr.mxu0 %v126
    %3061 = vmatpush1.msra.mxu0 %v125
    %3062 = vmatprep.subr.mxu0 %v130
    %3063 = vmatpush1.msra.mxu0 %v129
    %3064 = vmatprep.subr.mxu0 %v134
    %3065 = vmatpush1.msra.mxu0 %v133
    %3066 = vmatprep.subr.mxu0 %v138
    %3067 = vmatpush1.msra.mxu0 %v137
    %3068 = vmatprep.subr.mxu0 %v142
    %3069 = vmatpush1.msra.mxu0 %v141
    %3070 = vmatprep.subr.mxu0 %v146
    %3071 = vmatpush1.msra.mxu0 %v145
    %3072 = vmatprep.subr.mxu0 %v150
    %3073 = vmatpush1.msra.mxu0 %v149
    %3074 = vmatprep.subr.mxu0 %v154
    %3075 = vmatpush1.msra.mxu0 %v153
    %3076 = vmatprep.subr.mxu0 %v158
    %3077 = vmatpush1.msra.mxu0 %v157
    %3078 = vmatprep.subr.mxu0 0.0
    %3079 = vmatpush1.msra.mxu0 0.0
    %3080 = vmatprep.subr.mxu0 0.0
    %3081 = vmatpush1.msra.mxu0 0.0
    %3082 = vmatprep.subr.mxu0 0.0
    %3083 = vmatpush1.msra.mxu0 0.0
    %3084 = vmatprep.subr.mxu0 0.0
    %3085 = vmatpush1.msra.mxu0 0.0
    %3086 = vmatprep.subr.mxu0 0.0
    %3087 = vmatpush1.msra.mxu0 0.0
    %3088 = vmatprep.subr.mxu0 0.0
    %3089 = vmatpush1.msra.mxu0 0.0
    %3090 = vmatprep.subr.mxu0 0.0
    %3091 = vmatpush1.msra.mxu0 0.0
    %3092 = vmatprep.subr.mxu0 0.0
    %3093 = vmatpush1.msra.mxu0 0.0
    %3094 = vmatprep.subr.mxu0 0.0
    %3095 = vmatpush1.msra.mxu0 0.0
    %3096 = vmatprep.subr.mxu0 0.0
    %3097 = vmatpush1.msra.mxu0 0.0
    %3098 = vmatprep.subr.mxu0 0.0
    %3099 = vmatpush1.msra.mxu0 0.0
    %3100 = vmatprep.subr.mxu0 0.0
    %3101 = vmatpush1.msra.mxu0 0.0
    %3102 = vmatprep.subr.mxu0 0.0
    %3103 = vmatpush1.msra.mxu0 0.0
    %3104 = vmatprep.subr.mxu0 0.0
    %3105 = vmatpush1.msra.mxu0 0.0
    %3106 = vmatprep.subr.mxu0 0.0
    %3107 = vmatpush1.msra.mxu0 0.0
    %3108 = vmatprep.subr.mxu0 0.0
    %3109 = vmatpush1.msra.mxu0 0.0
    %3110 = vmatprep.mubr.f32.mxu0 0.0
    %3111 = vmatmul.mubr.f32.gmra.mrb[0].mxu0 %v2734
    %v3112 = vpop.f32.mrb[0].mxu0
    %v3113 = vadd.f32 0.0, %v3112
    %v3114 = vpop.f32.mrb[0].mxu0
    %v3115 = vadd.f32 0.0, %v3114
    %3116 = vdwg.mxu0
    %3117 = vmatprep.subr.mxu0 %v100
    %3118 = vmatpush1.msra.mxu0 %v99
    %3119 = vmatprep.subr.mxu0 %v104
    %3120 = vmatpush1.msra.mxu0 %v103
    %3121 = vmatprep.subr.mxu0 %v108
    %3122 = vmatpush1.msra.mxu0 %v107
    %3123 = vmatprep.subr.mxu0 %v112
    %3124 = vmatpush1.msra.mxu0 %v111
    %3125 = vmatprep.subr.mxu0 %v116
    %3126 = vmatpush1.msra.mxu0 %v115
    %3127 = vmatprep.subr.mxu0 %v120
    %3128 = vmatpush1.msra.mxu0 %v119
    %3129 = vmatprep.subr.mxu0 %v124
    %3130 = vmatpush1.msra.mxu0 %v123
    %3131 = vmatprep.subr.mxu0 %v128
    %3132 = vmatpush1.msra.mxu0 %v127
    %3133 = vmatprep.subr.mxu0 %v132
    %3134 = vmatpush1.msra.mxu0 %v131
    %3135 = vmatprep.subr.mxu0 %v136
    %3136 = vmatpush1.msra.mxu0 %v135
    %3137 = vmatprep.subr.mxu0 %v140
    %3138 = vmatpush1.msra.mxu0 %v139
    %3139 = vmatprep.subr.mxu0 %v144
    %3140 = vmatpush1.msra.mxu0 %v143
    %3141 = vmatprep.subr.mxu0 %v148
    %3142 = vmatpush1.msra.mxu0 %v147
    %3143 = vmatprep.subr.mxu0 %v152
    %3144 = vmatpush1.msra.mxu0 %v151
    %3145 = vmatprep.subr.mxu0 %v156
    %3146 = vmatpush1.msra.mxu0 %v155
    %3147 = vmatprep.subr.mxu0 %v160
    %3148 = vmatpush1.msra.mxu0 %v159
    %3149 = vmatprep.subr.mxu0 0.0
    %3150 = vmatpush1.msra.mxu0 0.0
    %3151 = vmatprep.subr.mxu0 0.0
    %3152 = vmatpush1.msra.mxu0 0.0
    %3153 = vmatprep.subr.mxu0 0.0
    %3154 = vmatpush1.msra.mxu0 0.0
    %3155 = vmatprep.subr.mxu0 0.0
    %3156 = vmatpush1.msra.mxu0 0.0
    %3157 = vmatprep.subr.mxu0 0.0
    %3158 = vmatpush1.msra.mxu0 0.0
    %3159 = vmatprep.subr.mxu0 0.0
    %3160 = vmatpush1.msra.mxu0 0.0
    %3161 = vmatprep.subr.mxu0 0.0
    %3162 = vmatpush1.msra.mxu0 0.0
    %3163 = vmatprep.subr.mxu0 0.0
    %3164 = vmatpush1.msra.mxu0 0.0
    %3165 = vmatprep.subr.mxu0 0.0
    %3166 = vmatpush1.msra.mxu0 0.0
    %3167 = vmatprep.subr.mxu0 0.0
    %3168 = vmatpush1.msra.mxu0 0.0
    %3169 = vmatprep.subr.mxu0 0.0
    %3170 = vmatpush1.msra.mxu0 0.0
    %3171 = vmatprep.subr.mxu0 0.0
    %3172 = vmatpush1.msra.mxu0 0.0
    %3173 = vmatprep.subr.mxu0 0.0
    %3174 = vmatpush1.msra.mxu0 0.0
    %3175 = vmatprep.subr.mxu0 0.0
    %3176 = vmatpush1.msra.mxu0 0.0
    %3177 = vmatprep.subr.mxu0 0.0
    %3178 = vmatpush1.msra.mxu0 0.0
    %3179 = vmatprep.subr.mxu0 0.0
    %3180 = vmatpush1.msra.mxu0 0.0
    %3181 = vmatprep.mubr.f32.mxu0 0.0
    %3182 = vmatmul.mubr.f32.gmra.mrb[0].mxu0 %v2734
    %v3183 = vpop.f32.mrb[0].mxu0
    %v3184 = vadd.f32 0.0, %v3183
    %v3185 = vpop.f32.mrb[0].mxu0
    %v3186 = vadd.f32 0.0, %v3185
    %3187 = vdwg.mxu0
    %v3188 = vadd.f32 %v3042, %v3113
    %v3189 = vadd.f32 %v3043, %v3115
    %v3190 = vadd.f32 %v3044, %v3184
    %v3191 = vadd.f32 %v3045, %v3186
    %v3192 = vmul.f32 %v3188, 0.5
    %v3193 = vtanh.pop %v3192
    %v3194 = vmul.f32 %v3193, 0.5
    %v3195 = vadd.f32 %v3194, 0.5
    %v3196 = vmul.f32 %v3189, 0.5
    %v3197 = vtanh.pop %v3196
    %v3198 = vmul.f32 %v3197, 0.5
    %v3199 = vadd.f32 %v3198, 0.5
    %v3200 = vtanh.pop %v3190
    %v3201 = vmul.f32 %v3191, 0.5
    %v3202 = vtanh.pop %v3201
    %v3203 = vmul.f32 %v3202, 0.5
    %v3204 = vadd.f32 %v3203, 0.5
    %v3205 = vmul.f32 %v3199, %v2732
    %v3206 = vmul.f32 %v3195, %v3200
    %v3207 = vadd.f32 %v3205, %v3206
    %v3208 = vtanh.pop %v3207
    %v3209 = vmul.f32 %v3204, %v3208
    %3210 = vmatprep.subr.mxu0 %v226
    %3211 = vmatpush1.msra.mxu0 %v225
    %3212 = vmatprep.subr.mxu0 %v230
    %3213 = vmatpush1.msra.mxu0 %v229
    %3214 = vmatprep.subr.mxu0 %v234
    %3215 = vmatpush1.msra.mxu0 %v233
    %3216 = vmatprep.subr.mxu0 %v238
    %3217 = vmatpush1.msra.mxu0 %v237
    %3218 = vmatprep.subr.mxu0 %v242
    %3219 = vmatpush1.msra.mxu0 %v241
    %3220 = vmatprep.subr.mxu0 %v246
    %3221 = vmatpush1.msra.mxu0 %v245
    %3222 = vmatprep.subr.mxu0 %v250
    %3223 = vmatpush1.msra.mxu0 %v249
    %3224 = vmatprep.subr.mxu0 %v254
    %3225 = vmatpush1.msra.mxu0 %v253
    %3226 = vmatprep.subr.mxu0 %v258
    %3227 = vmatpush1.msra.mxu0 %v257
    %3228 = vmatprep.subr.mxu0 %v262
    %3229 = vmatpush1.msra.mxu0 %v261
    %3230 = vmatprep.subr.mxu0 %v266
    %3231 = vmatpush1.msra.mxu0 %v265
    %3232 = vmatprep.subr.mxu0 %v270
    %3233 = vmatpush1.msra.mxu0 %v269
    %3234 = vmatprep.subr.mxu0 %v274
    %3235 = vmatpush1.msra.mxu0 %v273
    %3236 = vmatprep.subr.mxu0 %v278
    %3237 = vmatpush1.msra.mxu0 %v277
    %3238 = vmatprep.subr.mxu0 %v282
    %3239 = vmatpush1.msra.mxu0 %v281
    %3240 = vmatprep.subr.mxu0 %v286
    %3241 = vmatpush1.msra.mxu0 %v285
    %3242 = vmatprep.subr.mxu0 0.0
    %3243 = vmatpush1.msra.mxu0 0.0
    %3244 = vmatprep.subr.mxu0 0.0
    %3245 = vmatpush1.msra.mxu0 0.0
    %3246 = vmatprep.subr.mxu0 0.0
    %3247 = vmatpush1.msra.mxu0 0.0
    %3248 = vmatprep.subr.mxu0 0.0
    %3249 = vmatpush1.msra.mxu0 0.0
    %3250 = vmatprep.subr.mxu0 0.0
    %3251 = vmatpush1.msra.mxu0 0.0
    %3252 = vmatprep.subr.mxu0 0.0
    %3253 = vmatpush1.msra.mxu0 0.0
    %3254 = vmatprep.subr.mxu0 0.0
    %3255 = vmatpush1.msra.mxu0 0.0
    %3256 = vmatprep.subr.mxu0 0.0
    %3257 = vmatpush1.msra.mxu0 0.0
    %3258 = vmatprep.subr.mxu0 0.0
    %3259 = vmatpush1.msra.mxu0 0.0
    %3260 = vmatprep.subr.mxu0 0.0
    %3261 = vmatpush1.msra.mxu0 0.0
    %3262 = vmatprep.subr.mxu0 0.0
    %3263 = vmatpush1.msra.mxu0 0.0
    %3264 = vmatprep.subr.mxu0 0.0
    %3265 = vmatpush1.msra.mxu0 0.0
    %3266 = vmatprep.subr.mxu0 0.0
    %3267 = vmatpush1.msra.mxu0 0.0
    %3268 = vmatprep.subr.mxu0 0.0
    %3269 = vmatpush1.msra.mxu0 0.0
    %3270 = vmatprep.subr.mxu0 0.0
    %3271 = vmatpush1.msra.mxu0 0.0
    %3272 = vmatprep.subr.mxu0 0.0
    %3273 = vmatpush1.msra.mxu0 0.0
    %3274 = vmatprep.mubr.f32.mxu0 0.0
    %3275 = vmatmul.mubr.f32.gmra.mrb[0].mxu0 %v3040
    %v3276 = vpop.f32.mrb[0].mxu0
    %v3277 = vadd.f32 0.0, %v3276
    %v3278 = vpop.f32.mrb[0].mxu0
    %v3279 = vadd.f32 0.0, %v3278
    %3280 = vdwg.mxu0
    %3281 = vmatprep.subr.mxu0 %v228
    %3282 = vmatpush1.msra.mxu0 %v227
    %3283 = vmatprep.subr.mxu0 %v232
    %3284 = vmatpush1.msra.mxu0 %v231
    %3285 = vmatprep.subr.mxu0 %v236
    %3286 = vmatpush1.msra.mxu0 %v235
    %3287 = vmatprep.subr.mxu0 %v240
    %3288 = vmatpush1.msra.mxu0 %v239
    %3289 = vmatprep.subr.mxu0 %v244
    %3290 = vmatpush1.msra.mxu0 %v243
    %3291 = vmatprep.subr.mxu0 %v248
    %3292 = vmatpush1.msra.mxu0 %v247
    %3293 = vmatprep.subr.mxu0 %v252
    %3294 = vmatpush1.msra.mxu0 %v251
    %3295 = vmatprep.subr.mxu0 %v256
    %3296 = vmatpush1.msra.mxu0 %v255
    %3297 = vmatprep.subr.mxu0 %v260
    %3298 = vmatpush1.msra.mxu0 %v259
    %3299 = vmatprep.subr.mxu0 %v264
    %3300 = vmatpush1.msra.mxu0 %v263
    %3301 = vmatprep.subr.mxu0 %v268
    %3302 = vmatpush1.msra.mxu0 %v267
    %3303 = vmatprep.subr.mxu0 %v272
    %3304 = vmatpush1.msra.mxu0 %v271
    %3305 = vmatprep.subr.mxu0 %v276
    %3306 = vmatpush1.msra.mxu0 %v275
    %3307 = vmatprep.subr.mxu0 %v280
    %3308 = vmatpush1.msra.mxu0 %v279
    %3309 = vmatprep.subr.mxu0 %v284
    %3310 = vmatpush1.msra.mxu0 %v283
    %3311 = vmatprep.subr.mxu0 %v288
    %3312 = vmatpush1.msra.mxu0 %v287
    %3313 = vmatprep.subr.mxu0 0.0
    %3314 = vmatpush1.msra.mxu0 0.0
    %3315 = vmatprep.subr.mxu0 0.0
    %3316 = vmatpush1.msra.mxu0 0.0
    %3317 = vmatprep.subr.mxu0 0.0
    %3318 = vmatpush1.msra.mxu0 0.0
    %3319 = vmatprep.subr.mxu0 0.0
    %3320 = vmatpush1.msra.mxu0 0.0
    %3321 = vmatprep.subr.mxu0 0.0
    %3322 = vmatpush1.msra.mxu0 0.0
    %3323 = vmatprep.subr.mxu0 0.0
    %3324 = vmatpush1.msra.mxu0 0.0
    %3325 = vmatprep.subr.mxu0 0.0
    %3326 = vmatpush1.msra.mxu0 0.0
    %3327 = vmatprep.subr.mxu0 0.0
    %3328 = vmatpush1.msra.mxu0 0.0
    %3329 = vmatprep.subr.mxu0 0.0
    %3330 = vmatpush1.msra.mxu0 0.0
    %3331 = vmatprep.subr.mxu0 0.0
    %3332 = vmatpush1.msra.mxu0 0.0
    %3333 = vmatprep.subr.mxu0 0.0
    %3334 = vmatpush1.msra.mxu0 0.0
    %3335 = vmatprep.subr.mxu0 0.0
    %3336 = vmatpush1.msra.mxu0 0.0
    %3337 = vmatprep.subr.mxu0 0.0
    %3338 = vmatpush1.msra.mxu0 0.0
    %3339 = vmatprep.subr.mxu0 0.0
    %3340 = vmatpush1.msra.mxu0 0.0
    %3341 = vmatprep.subr.mxu0 0.0
    %3342 = vmatpush1.msra.mxu0 0.0
    %3343 = vmatprep.subr.mxu0 0.0
    %3344 = vmatpush1.msra.mxu0 0.0
    %3345 = vmatprep.mubr.f32.mxu0 0.0
    %3346 = vmatmul.mubr.f32.gmra.mrb[0].mxu0 %v3040
    %v3347 = vpop.f32.mrb[0].mxu0
    %v3348 = vadd.f32 0.0, %v3347
    %v3349 = vpop.f32.mrb[0].mxu0
    %v3350 = vadd.f32 0.0, %v3349
    %3351 = vdwg.mxu0
    %3352 = vmatprep.subr.mxu0 %v162
    %3353 = vmatpush1.msra.mxu0 %v161
    %3354 = vmatprep.subr.mxu0 %v166
    %3355 = vmatpush1.msra.mxu0 %v165
    %3356 = vmatprep.subr.mxu0 %v170
    %3357 = vmatpush1.msra.mxu0 %v169
    %3358 = vmatprep.subr.mxu0 %v174
    %3359 = vmatpush1.msra.mxu0 %v173
    %3360 = vmatprep.subr.mxu0 %v178
    %3361 = vmatpush1.msra.mxu0 %v177
    %3362 = vmatprep.subr.mxu0 %v182
    %3363 = vmatpush1.msra.mxu0 %v181
    %3364 = vmatprep.subr.mxu0 %v186
    %3365 = vmatpush1.msra.mxu0 %v185
    %3366 = vmatprep.subr.mxu0 %v190
    %3367 = vmatpush1.msra.mxu0 %v189
    %3368 = vmatprep.subr.mxu0 %v194
    %3369 = vmatpush1.msra.mxu0 %v193
    %3370 = vmatprep.subr.mxu0 %v198
    %3371 = vmatpush1.msra.mxu0 %v197
    %3372 = vmatprep.subr.mxu0 %v202
    %3373 = vmatpush1.msra.mxu0 %v201
    %3374 = vmatprep.subr.mxu0 %v206
    %3375 = vmatpush1.msra.mxu0 %v205
    %3376 = vmatprep.subr.mxu0 %v210
    %3377 = vmatpush1.msra.mxu0 %v209
    %3378 = vmatprep.subr.mxu0 %v214
    %3379 = vmatpush1.msra.mxu0 %v213
    %3380 = vmatprep.subr.mxu0 %v218
    %3381 = vmatpush1.msra.mxu0 %v217
    %3382 = vmatprep.subr.mxu0 %v222
    %3383 = vmatpush1.msra.mxu0 %v221
    %3384 = vmatprep.subr.mxu0 0.0
    %3385 = vmatpush1.msra.mxu0 0.0
    %3386 = vmatprep.subr.mxu0 0.0
    %3387 = vmatpush1.msra.mxu0 0.0
    %3388 = vmatprep.subr.mxu0 0.0
    %3389 = vmatpush1.msra.mxu0 0.0
    %3390 = vmatprep.subr.mxu0 0.0
    %3391 = vmatpush1.msra.mxu0 0.0
    %3392 = vmatprep.subr.mxu0 0.0
    %3393 = vmatpush1.msra.mxu0 0.0
    %3394 = vmatprep.subr.mxu0 0.0
    %3395 = vmatpush1.msra.mxu0 0.0
    %3396 = vmatprep.subr.mxu0 0.0
    %3397 = vmatpush1.msra.mxu0 0.0
    %3398 = vmatprep.subr.mxu0 0.0
    %3399 = vmatpush1.msra.mxu0 0.0
    %3400 = vmatprep.subr.mxu0 0.0
    %3401 = vmatpush1.msra.mxu0 0.0
    %3402 = vmatprep.subr.mxu0 0.0
    %3403 = vmatpush1.msra.mxu0 0.0
    %3404 = vmatprep.subr.mxu0 0.0
    %3405 = vmatpush1.msra.mxu0 0.0
    %3406 = vmatprep.subr.mxu0 0.0
    %3407 = vmatpush1.msra.mxu0 0.0
    %3408 = vmatprep.subr.mxu0 0.0
    %3409 = vmatpush1.msra.mxu0 0.0
    %3410 = vmatprep.subr.mxu0 0.0
    %3411 = vmatpush1.msra.mxu0 0.0
    %3412 = vmatprep.subr.mxu0 0.0
    %3413 = vmatpush1.msra.mxu0 0.0
    %3414 = vmatprep.subr.mxu0 0.0
    %3415 = vmatpush1.msra.mxu0 0.0
    %3416 = vmatprep.mubr.f32.mxu0 0.0
    %3417 = vmatmul.mubr.f32.gmra.mrb[0].mxu0 %v3209
    %v3418 = vpop.f32.mrb[0].mxu0
    %v3419 = vadd.f32 %v3277, %v3418
    %v3420 = vpop.f32.mrb[0].mxu0
    %v3421 = vadd.f32 %v3279, %v3420
    %3422 = vdwg.mxu0
    %3423 = vmatprep.subr.mxu0 %v164
    %3424 = vmatpush1.msra.mxu0 %v163
    %3425 = vmatprep.subr.mxu0 %v168
    %3426 = vmatpush1.msra.mxu0 %v167
    %3427 = vmatprep.subr.mxu0 %v172
    %3428 = vmatpush1.msra.mxu0 %v171
    %3429 = vmatprep.subr.mxu0 %v176
    %3430 = vmatpush1.msra.mxu0 %v175
    %3431 = vmatprep.subr.mxu0 %v180
    %3432 = vmatpush1.msra.mxu0 %v179
    %3433 = vmatprep.subr.mxu0 %v184
    %3434 = vmatpush1.msra.mxu0 %v183
    %3435 = vmatprep.subr.mxu0 %v188
    %3436 = vmatpush1.msra.mxu0 %v187
    %3437 = vmatprep.subr.mxu0 %v192
    %3438 = vmatpush1.msra.mxu0 %v191
    %3439 = vmatprep.subr.mxu0 %v196
    %3440 = vmatpush1.msra.mxu0 %v195
    %3441 = vmatprep.subr.mxu0 %v200
    %3442 = vmatpush1.msra.mxu0 %v199
    %3443 = vmatprep.subr.mxu0 %v204
    %3444 = vmatpush1.msra.mxu0 %v203
    %3445 = vmatprep.subr.mxu0 %v208
    %3446 = vmatpush1.msra.mxu0 %v207
    %3447 = vmatprep.subr.mxu0 %v212
    %3448 = vmatpush1.msra.mxu0 %v211
    %3449 = vmatprep.subr.mxu0 %v216
    %3450 = vmatpush1.msra.mxu0 %v215
    %3451 = vmatprep.subr.mxu0 %v220
    %3452 = vmatpush1.msra.mxu0 %v219
    %3453 = vmatprep.subr.mxu0 %v224
    %3454 = vmatpush1.msra.mxu0 %v223
    %3455 = vmatprep.subr.mxu0 0.0
    %3456 = vmatpush1.msra.mxu0 0.0
    %3457 = vmatprep.subr.mxu0 0.0
    %3458 = vmatpush1.msra.mxu0 0.0
    %3459 = vmatprep.subr.mxu0 0.0
    %3460 = vmatpush1.msra.mxu0 0.0
    %3461 = vmatprep.subr.mxu0 0.0
    %3462 = vmatpush1.msra.mxu0 0.0
    %3463 = vmatprep.subr.mxu0 0.0
    %3464 = vmatpush1.msra.mxu0 0.0
    %3465 = vmatprep.subr.mxu0 0.0
    %3466 = vmatpush1.msra.mxu0 0.0
    %3467 = vmatprep.subr.mxu0 0.0
    %3468 = vmatpush1.msra.mxu0 0.0
    %3469 = vmatprep.subr.mxu0 0.0
    %3470 = vmatpush1.msra.mxu0 0.0
    %3471 = vmatprep.subr.mxu0 0.0
    %3472 = vmatpush1.msra.mxu0 0.0
    %3473 = vmatprep.subr.mxu0 0.0
    %3474 = vmatpush1.msra.mxu0 0.0
    %3475 = vmatprep.subr.mxu0 0.0
    %3476 = vmatpush1.msra.mxu0 0.0
    %3477 = vmatprep.subr.mxu0 0.0
    %3478 = vmatpush1.msra.mxu0 0.0
    %3479 = vmatprep.subr.mxu0 0.0
    %3480 = vmatpush1.msra.mxu0 0.0
    %3481 = vmatprep.subr.mxu0 0.0
    %3482 = vmatpush1.msra.mxu0 0.0
    %3483 = vmatprep.subr.mxu0 0.0
    %3484 = vmatpush1.msra.mxu0 0.0
    %3485 = vmatprep.subr.mxu0 0.0
    %3486 = vmatpush1.msra.mxu0 0.0
    %3487 = vmatprep.mubr.f32.mxu0 0.0
    %3488 = vmatmul.mubr.f32.gmra.mrb[0].mxu0 %v3209
    %v3489 = vpop.f32.mrb[0].mxu0
    %v3490 = vadd.f32 %v3348, %v3489
    %v3491 = vpop.f32.mrb[0].mxu0
    %v3492 = vadd.f32 %v3350, %v3491
    %3493 = vdwg.mxu0
    %v3494 = vadd.f32 %v3419, %v294
    %v3495 = vadd.f32 %v3421, %v298
    %v3496 = vadd.f32 %v3490, %v302
    %v3497 = vadd.f32 %v3492, %v306
    %v3498 = vmul.f32 %v3494, 0.5
    %v3499 = vtanh.pop %v3498
    %v3500 = vmul.f32 %v3499, 0.5
    %v3501 = vadd.f32 %v3500, 0.5
    %v3502 = vmul.f32 %v3495, 0.5
    %v3503 = vtanh.pop %v3502
    %v3504 = vmul.f32 %v3503, 0.5
    %v3505 = vadd.f32 %v3504, 0.5
    %v3506 = vtanh.pop %v3496
    %v3507 = vmul.f32 %v3497, 0.5
    %v3508 = vtanh.pop %v3507
    %v3509 = vmul.f32 %v3508, 0.5
    %v3510 = vadd.f32 %v3509, 0.5
    %v3511 = vmul.f32 %v3505, %v3038
    %v3512 = vmul.f32 %v3501, %v3506
    %v3513 = vadd.f32 %v3511, %v3512
    %v3514 = vtanh.pop %v3513
    %v3515 = vmul.f32 %v3510, %v3514
    %s3516 = scalar_lea.vmem [#allocation2], 192
    %v3517 = vld [vmem:[%s3516] sm:$0xff]
    %v3518 = vld [vmem:[%s3516 + $0x8] sm:$0xff]
    %v3519 = vld [vmem:[%s3516 + $0x10] sm:$0xff]
    %v3520 = vld [vmem:[%s3516 + $0x18] sm:$0xff]
    %3521 = vmatprep.subr.mxu0 %v98
    %3522 = vmatpush1.msra.mxu0 %v97
    %3523 = vmatprep.subr.mxu0 %v102
    %3524 = vmatpush1.msra.mxu0 %v101
    %3525 = vmatprep.subr.mxu0 %v106
    %3526 = vmatpush1.msra.mxu0 %v105
    %3527 = vmatprep.subr.mxu0 %v110
    %3528 = vmatpush1.msra.mxu0 %v109
    %3529 = vmatprep.subr.mxu0 %v114
    %3530 = vmatpush1.msra.mxu0 %v113
    %3531 = vmatprep.subr.mxu0 %v118
    %3532 = vmatpush1.msra.mxu0 %v117
    %3533 = vmatprep.subr.mxu0 %v122
    %3534 = vmatpush1.msra.mxu0 %v121
    %3535 = vmatprep.subr.mxu0 %v126
    %3536 = vmatpush1.msra.mxu0 %v125
    %3537 = vmatprep.subr.mxu0 %v130
    %3538 = vmatpush1.msra.mxu0 %v129
    %3539 = vmatprep.subr.mxu0 %v134
    %3540 = vmatpush1.msra.mxu0 %v133
    %3541 = vmatprep.subr.mxu0 %v138
    %3542 = vmatpush1.msra.mxu0 %v137
    %3543 = vmatprep.subr.mxu0 %v142
    %3544 = vmatpush1.msra.mxu0 %v141
    %3545 = vmatprep.subr.mxu0 %v146
    %3546 = vmatpush1.msra.mxu0 %v145
    %3547 = vmatprep.subr.mxu0 %v150
    %3548 = vmatpush1.msra.mxu0 %v149
    %3549 = vmatprep.subr.mxu0 %v154
    %3550 = vmatpush1.msra.mxu0 %v153
    %3551 = vmatprep.subr.mxu0 %v158
    %3552 = vmatpush1.msra.mxu0 %v157
    %3553 = vmatprep.subr.mxu0 0.0
    %3554 = vmatpush1.msra.mxu0 0.0
    %3555 = vmatprep.subr.mxu0 0.0
    %3556 = vmatpush1.msra.mxu0 0.0
    %3557 = vmatprep.subr.mxu0 0.0
    %3558 = vmatpush1.msra.mxu0 0.0
    %3559 = vmatprep.subr.mxu0 0.0
    %3560 = vmatpush1.msra.mxu0 0.0
    %3561 = vmatprep.subr.mxu0 0.0
    %3562 = vmatpush1.msra.mxu0 0.0
    %3563 = vmatprep.subr.mxu0 0.0
    %3564 = vmatpush1.msra.mxu0 0.0
    %3565 = vmatprep.subr.mxu0 0.0
    %3566 = vmatpush1.msra.mxu0 0.0
    %3567 = vmatprep.subr.mxu0 0.0
    %3568 = vmatpush1.msra.mxu0 0.0
    %3569 = vmatprep.subr.mxu0 0.0
    %3570 = vmatpush1.msra.mxu0 0.0
    %3571 = vmatprep.subr.mxu0 0.0
    %3572 = vmatpush1.msra.mxu0 0.0
    %3573 = vmatprep.subr.mxu0 0.0
    %3574 = vmatpush1.msra.mxu0 0.0
    %3575 = vmatprep.subr.mxu0 0.0
    %3576 = vmatpush1.msra.mxu0 0.0
    %3577 = vmatprep.subr.mxu0 0.0
    %3578 = vmatpush1.msra.mxu0 0.0
    %3579 = vmatprep.subr.mxu0 0.0
    %3580 = vmatpush1.msra.mxu0 0.0
    %3581 = vmatprep.subr.mxu0 0.0
    %3582 = vmatpush1.msra.mxu0 0.0
    %3583 = vmatprep.subr.mxu0 0.0
    %3584 = vmatpush1.msra.mxu0 0.0
    %3585 = vmatprep.mubr.f32.mxu0 0.0
    %3586 = vmatmul.mubr.f32.gmra.mrb[0].mxu0 %v3209
    %v3587 = vpop.f32.mrb[0].mxu0
    %v3588 = vadd.f32 0.0, %v3587
    %v3589 = vpop.f32.mrb[0].mxu0
    %v3590 = vadd.f32 0.0, %v3589
    %3591 = vdwg.mxu0
    %3592 = vmatprep.subr.mxu0 %v100
    %3593 = vmatpush1.msra.mxu0 %v99
    %3594 = vmatprep.subr.mxu0 %v104
    %3595 = vmatpush1.msra.mxu0 %v103
    %3596 = vmatprep.subr.mxu0 %v108
    %3597 = vmatpush1.msra.mxu0 %v107
    %3598 = vmatprep.subr.mxu0 %v112
    %3599 = vmatpush1.msra.mxu0 %v111
    %3600 = vmatprep.subr.mxu0 %v116
    %3601 = vmatpush1.msra.mxu0 %v115
    %3602 = vmatprep.subr.mxu0 %v120
    %3603 = vmatpush1.msra.mxu0 %v119
    %3604 = vmatprep.subr.mxu0 %v124
    %3605 = vmatpush1.msra.mxu0 %v123
    %3606 = vmatprep.subr.mxu0 %v128
    %3607 = vmatpush1.msra.mxu0 %v127
    %3608 = vmatprep.subr.mxu0 %v132
    %3609 = vmatpush1.msra.mxu0 %v131
    %3610 = vmatprep.subr.mxu0 %v136
    %3611 = vmatpush1.msra.mxu0 %v135
    %3612 = vmatprep.subr.mxu0 %v140
    %3613 = vmatpush1.msra.mxu0 %v139
    %3614 = vmatprep.subr.mxu0 %v144
    %3615 = vmatpush1.msra.mxu0 %v143
    %3616 = vmatprep.subr.mxu0 %v148
    %3617 = vmatpush1.msra.mxu0 %v147
    %3618 = vmatprep.subr.mxu0 %v152
    %3619 = vmatpush1.msra.mxu0 %v151
    %3620 = vmatprep.subr.mxu0 %v156
    %3621 = vmatpush1.msra.mxu0 %v155
    %3622 = vmatprep.subr.mxu0 %v160
    %3623 = vmatpush1.msra.mxu0 %v159
    %3624 = vmatprep.subr.mxu0 0.0
    %3625 = vmatpush1.msra.mxu0 0.0
    %3626 = vmatprep.subr.mxu0 0.0
    %3627 = vmatpush1.msra.mxu0 0.0
    %3628 = vmatprep.subr.mxu0 0.0
    %3629 = vmatpush1.msra.mxu0 0.0
    %3630 = vmatprep.subr.mxu0 0.0
    %3631 = vmatpush1.msra.mxu0 0.0
    %3632 = vmatprep.subr.mxu0 0.0
    %3633 = vmatpush1.msra.mxu0 0.0
    %3634 = vmatprep.subr.mxu0 0.0
    %3635 = vmatpush1.msra.mxu0 0.0
    %3636 = vmatprep.subr.mxu0 0.0
    %3637 = vmatpush1.msra.mxu0 0.0
    %3638 = vmatprep.subr.mxu0 0.0
    %3639 = vmatpush1.msra.mxu0 0.0
    %3640 = vmatprep.subr.mxu0 0.0
    %3641 = vmatpush1.msra.mxu0 0.0
    %3642 = vmatprep.subr.mxu0 0.0
    %3643 = vmatpush1.msra.mxu0 0.0
    %3644 = vmatprep.subr.mxu0 0.0
    %3645 = vmatpush1.msra.mxu0 0.0
    %3646 = vmatprep.subr.mxu0 0.0
    %3647 = vmatpush1.msra.mxu0 0.0
    %3648 = vmatprep.subr.mxu0 0.0
    %3649 = vmatpush1.msra.mxu0 0.0
    %3650 = vmatprep.subr.mxu0 0.0
    %3651 = vmatpush1.msra.mxu0 0.0
    %3652 = vmatprep.subr.mxu0 0.0
    %3653 = vmatpush1.msra.mxu0 0.0
    %3654 = vmatprep.subr.mxu0 0.0
    %3655 = vmatpush1.msra.mxu0 0.0
    %3656 = vmatprep.mubr.f32.mxu0 0.0
    %3657 = vmatmul.mubr.f32.gmra.mrb[0].mxu0 %v3209
    %v3658 = vpop.f32.mrb[0].mxu0
    %v3659 = vadd.f32 0.0, %v3658
    %v3660 = vpop.f32.mrb[0].mxu0
    %v3661 = vadd.f32 0.0, %v3660
    %3662 = vdwg.mxu0
    %v3663 = vadd.f32 %v3517, %v3588
    %v3664 = vadd.f32 %v3518, %v3590
    %v3665 = vadd.f32 %v3519, %v3659
    %v3666 = vadd.f32 %v3520, %v3661
    %v3667 = vmul.f32 %v3663, 0.5
    %v3668 = vtanh.pop %v3667
    %v3669 = vmul.f32 %v3668, 0.5
    %v3670 = vadd.f32 %v3669, 0.5
    %v3671 = vmul.f32 %v3664, 0.5
    %v3672 = vtanh.pop %v3671
    %v3673 = vmul.f32 %v3672, 0.5
    %v3674 = vadd.f32 %v3673, 0.5
    %v3675 = vtanh.pop %v3665
    %v3676 = vmul.f32 %v3666, 0.5
    %v3677 = vtanh.pop %v3676
    %v3678 = vmul.f32 %v3677, 0.5
    %v3679 = vadd.f32 %v3678, 0.5
    %v3680 = vmul.f32 %v3674, %v3207
    %v3681 = vmul.f32 %v3670, %v3675
    %v3682 = vadd.f32 %v3680, %v3681
    %v3683 = vtanh.pop %v3682
    %v3684 = vmul.f32 %v3679, %v3683
    %3685 = vmatprep.subr.mxu0 %v226
    %3686 = vmatpush1.msra.mxu0 %v225
    %3687 = vmatprep.subr.mxu0 %v230
    %3688 = vmatpush1.msra.mxu0 %v229
    %3689 = vmatprep.subr.mxu0 %v234
    %3690 = vmatpush1.msra.mxu0 %v233
    %3691 = vmatprep.subr.mxu0 %v238
    %3692 = vmatpush1.msra.mxu0 %v237
    %3693 = vmatprep.subr.mxu0 %v242
    %3694 = vmatpush1.msra.mxu0 %v241
    %3695 = vmatprep.subr.mxu0 %v246
    %3696 = vmatpush1.msra.mxu0 %v245
    %3697 = vmatprep.subr.mxu0 %v250
    %3698 = vmatpush1.msra.mxu0 %v249
    %3699 = vmatprep.subr.mxu0 %v254
    %3700 = vmatpush1.msra.mxu0 %v253
    %3701 = vmatprep.subr.mxu0 %v258
    %3702 = vmatpush1.msra.mxu0 %v257
    %3703 = vmatprep.subr.mxu0 %v262
    %3704 = vmatpush1.msra.mxu0 %v261
    %3705 = vmatprep.subr.mxu0 %v266
    %3706 = vmatpush1.msra.mxu0 %v265
    %3707 = vmatprep.subr.mxu0 %v270
    %3708 = vmatpush1.msra.mxu0 %v269
    %3709 = vmatprep.subr.mxu0 %v274
    %3710 = vmatpush1.msra.mxu0 %v273
    %3711 = vmatprep.subr.mxu0 %v278
    %3712 = vmatpush1.msra.mxu0 %v277
    %3713 = vmatprep.subr.mxu0 %v282
    %3714 = vmatpush1.msra.mxu0 %v281
    %3715 = vmatprep.subr.mxu0 %v286
    %3716 = vmatpush1.msra.mxu0 %v285
    %3717 = vmatprep.subr.mxu0 0.0
    %3718 = vmatpush1.msra.mxu0 0.0
    %3719 = vmatprep.subr.mxu0 0.0
    %3720 = vmatpush1.msra.mxu0 0.0
    %3721 = vmatprep.subr.mxu0 0.0
    %3722 = vmatpush1.msra.mxu0 0.0
    %3723 = vmatprep.subr.mxu0 0.0
    %3724 = vmatpush1.msra.mxu0 0.0
    %3725 = vmatprep.subr.mxu0 0.0
    %3726 = vmatpush1.msra.mxu0 0.0
    %3727 = vmatprep.subr.mxu0 0.0
    %3728 = vmatpush1.msra.mxu0 0.0
    %3729 = vmatprep.subr.mxu0 0.0
    %3730 = vmatpush1.msra.mxu0 0.0
    %3731 = vmatprep.subr.mxu0 0.0
    %3732 = vmatpush1.msra.mxu0 0.0
    %3733 = vmatprep.subr.mxu0 0.0
    %3734 = vmatpush1.msra.mxu0 0.0
    %3735 = vmatprep.subr.mxu0 0.0
    %3736 = vmatpush1.msra.mxu0 0.0
    %3737 = vmatprep.subr.mxu0 0.0
    %3738 = vmatpush1.msra.mxu0 0.0
    %3739 = vmatprep.subr.mxu0 0.0
    %3740 = vmatpush1.msra.mxu0 0.0
    %3741 = vmatprep.subr.mxu0 0.0
    %3742 = vmatpush1.msra.mxu0 0.0
    %3743 = vmatprep.subr.mxu0 0.0
    %3744 = vmatpush1.msra.mxu0 0.0
    %3745 = vmatprep.subr.mxu0 0.0
    %3746 = vmatpush1.msra.mxu0 0.0
    %3747 = vmatprep.subr.mxu0 0.0
    %3748 = vmatpush1.msra.mxu0 0.0
    %3749 = vmatprep.mubr.f32.mxu0 0.0
    %3750 = vmatmul.mubr.f32.gmra.mrb[0].mxu0 %v3515
    %v3751 = vpop.f32.mrb[0].mxu0
    %v3752 = vadd.f32 0.0, %v3751
    %v3753 = vpop.f32.mrb[0].mxu0
    %v3754 = vadd.f32 0.0, %v3753
    %3755 = vdwg.mxu0
    %3756 = vmatprep.subr.mxu0 %v228
    %3757 = vmatpush1.msra.mxu0 %v227
    %3758 = vmatprep.subr.mxu0 %v232
    %3759 = vmatpush1.msra.mxu0 %v231
    %3760 = vmatprep.subr.mxu0 %v236
    %3761 = vmatpush1.msra.mxu0 %v235
    %3762 = vmatprep.subr.mxu0 %v240
    %3763 = vmatpush1.msra.mxu0 %v239
    %3764 = vmatprep.subr.mxu0 %v244
    %3765 = vmatpush1.msra.mxu0 %v243
    %3766 = vmatprep.subr.mxu0 %v248
    %3767 = vmatpush1.msra.mxu0 %v247
    %3768 = vmatprep.subr.mxu0 %v252
    %3769 = vmatpush1.msra.mxu0 %v251
    %3770 = vmatprep.subr.mxu0 %v256
    %3771 = vmatpush1.msra.mxu0 %v255
    %3772 = vmatprep.subr.mxu0 %v260
    %3773 = vmatpush1.msra.mxu0 %v259
    %3774 = vmatprep.subr.mxu0 %v264
    %3775 = vmatpush1.msra.mxu0 %v263
    %3776 = vmatprep.subr.mxu0 %v268
    %3777 = vmatpush1.msra.mxu0 %v267
    %3778 = vmatprep.subr.mxu0 %v272
    %3779 = vmatpush1.msra.mxu0 %v271
    %3780 = vmatprep.subr.mxu0 %v276
    %3781 = vmatpush1.msra.mxu0 %v275
    %3782 = vmatprep.subr.mxu0 %v280
    %3783 = vmatpush1.msra.mxu0 %v279
    %3784 = vmatprep.subr.mxu0 %v284
    %3785 = vmatpush1.msra.mxu0 %v283
    %3786 = vmatprep.subr.mxu0 %v288
    %3787 = vmatpush1.msra.mxu0 %v287
    %3788 = vmatprep.subr.mxu0 0.0
    %3789 = vmatpush1.msra.mxu0 0.0
    %3790 = vmatprep.subr.mxu0 0.0
    %3791 = vmatpush1.msra.mxu0 0.0
    %3792 = vmatprep.subr.mxu0 0.0
    %3793 = vmatpush1.msra.mxu0 0.0
    %3794 = vmatprep.subr.mxu0 0.0
    %3795 = vmatpush1.msra.mxu0 0.0
    %3796 = vmatprep.subr.mxu0 0.0
    %3797 = vmatpush1.msra.mxu0 0.0
    %3798 = vmatprep.subr.mxu0 0.0
    %3799 = vmatpush1.msra.mxu0 0.0
    %3800 = vmatprep.subr.mxu0 0.0
    %3801 = vmatpush1.msra.mxu0 0.0
    %3802 = vmatprep.subr.mxu0 0.0
    %3803 = vmatpush1.msra.mxu0 0.0
    %3804 = vmatprep.subr.mxu0 0.0
    %3805 = vmatpush1.msra.mxu0 0.0
    %3806 = vmatprep.subr.mxu0 0.0
    %3807 = vmatpush1.msra.mxu0 0.0
    %3808 = vmatprep.subr.mxu0 0.0
    %3809 = vmatpush1.msra.mxu0 0.0
    %3810 = vmatprep.subr.mxu0 0.0
    %3811 = vmatpush1.msra.mxu0 0.0
    %3812 = vmatprep.subr.mxu0 0.0
    %3813 = vmatpush1.msra.mxu0 0.0
    %3814 = vmatprep.subr.mxu0 0.0
    %3815 = vmatpush1.msra.mxu0 0.0
    %3816 = vmatprep.subr.mxu0 0.0
    %3817 = vmatpush1.msra.mxu0 0.0
    %3818 = vmatprep.subr.mxu0 0.0
    %3819 = vmatpush1.msra.mxu0 0.0
    %3820 = vmatprep.mubr.f32.mxu0 0.0
    %3821 = vmatmul.mubr.f32.gmra.mrb[0].mxu0 %v3515
    %v3822 = vpop.f32.mrb[0].mxu0
    %v3823 = vadd.f32 0.0, %v3822
    %v3824 = vpop.f32.mrb[0].mxu0
    %v3825 = vadd.f32 0.0, %v3824
    %3826 = vdwg.mxu0
    %3827 = vmatprep.subr.mxu0 %v162
    %3828 = vmatpush1.msra.mxu0 %v161
    %3829 = vmatprep.subr.mxu0 %v166
    %3830 = vmatpush1.msra.mxu0 %v165
    %3831 = vmatprep.subr.mxu0 %v170
    %3832 = vmatpush1.msra.mxu0 %v169
    %3833 = vmatprep.subr.mxu0 %v174
    %3834 = vmatpush1.msra.mxu0 %v173
    %3835 = vmatprep.subr.mxu0 %v178
    %3836 = vmatpush1.msra.mxu0 %v177
    %3837 = vmatprep.subr.mxu0 %v182
    %3838 = vmatpush1.msra.mxu0 %v181
    %3839 = vmatprep.subr.mxu0 %v186
    %3840 = vmatpush1.msra.mxu0 %v185
    %3841 = vmatprep.subr.mxu0 %v190
    %3842 = vmatpush1.msra.mxu0 %v189
    %3843 = vmatprep.subr.mxu0 %v194
    %3844 = vmatpush1.msra.mxu0 %v193
    %3845 = vmatprep.subr.mxu0 %v198
    %3846 = vmatpush1.msra.mxu0 %v197
    %3847 = vmatprep.subr.mxu0 %v202
    %3848 = vmatpush1.msra.mxu0 %v201
    %3849 = vmatprep.subr.mxu0 %v206
    %3850 = vmatpush1.msra.mxu0 %v205
    %3851 = vmatprep.subr.mxu0 %v210
    %3852 = vmatpush1.msra.mxu0 %v209
    %3853 = vmatprep.subr.mxu0 %v214
    %3854 = vmatpush1.msra.mxu0 %v213
    %3855 = vmatprep.subr.mxu0 %v218
    %3856 = vmatpush1.msra.mxu0 %v217
    %3857 = vmatprep.subr.mxu0 %v222
    %3858 = vmatpush1.msra.mxu0 %v221
    %3859 = vmatprep.subr.mxu0 0.0
    %3860 = vmatpush1.msra.mxu0 0.0
    %3861 = vmatprep.subr.mxu0 0.0
    %3862 = vmatpush1.msra.mxu0 0.0
    %3863 = vmatprep.subr.mxu0 0.0
    %3864 = vmatpush1.msra.mxu0 0.0
    %3865 = vmatprep.subr.mxu0 0.0
    %3866 = vmatpush1.msra.mxu0 0.0
    %3867 = vmatprep.subr.mxu0 0.0
    %3868 = vmatpush1.msra.mxu0 0.0
    %3869 = vmatprep.subr.mxu0 0.0
    %3870 = vmatpush1.msra.mxu0 0.0
    %3871 = vmatprep.subr.mxu0 0.0
    %3872 = vmatpush1.msra.mxu0 0.0
    %3873 = vmatprep.subr.mxu0 0.0
    %3874 = vmatpush1.msra.mxu0 0.0
    %3875 = vmatprep.subr.mxu0 0.0
    %3876 = vmatpush1.msra.mxu0 0.0
    %3877 = vmatprep.subr.mxu0 0.0
    %3878 = vmatpush1.msra.mxu0 0.0
    %3879 = vmatprep.subr.mxu0 0.0
    %3880 = vmatpush1.msra.mxu0 0.0
    %3881 = vmatprep.subr.mxu0 0.0
    %3882 = vmatpush1.msra.mxu0 0.0
    %3883 = vmatprep.subr.mxu0 0.0
    %3884 = vmatpush1.msra.mxu0 0.0
    %3885 = vmatprep.subr.mxu0 0.0
    %3886 = vmatpush1.msra.mxu0 0.0
    %3887 = vmatprep.subr.mxu0 0.0
    %3888 = vmatpush1.msra.mxu0 0.0
    %3889 = vmatprep.subr.mxu0 0.0
    %3890 = vmatpush1.msra.mxu0 0.0
    %3891 = vmatprep.mubr.f32.mxu0 0.0
    %3892 = vmatmul.mubr.f32.gmra.mrb[0].mxu0 %v3684
    %v3893 = vpop.f32.mrb[0].mxu0
    %v3894 = vadd.f32 %v3752, %v3893
    %v3895 = vpop.f32.mrb[0].mxu0
    %v3896 = vadd.f32 %v3754, %v3895
    %3897 = vdwg.mxu0
    %3898 = vmatprep.subr.mxu0 %v164
    %3899 = vmatpush1.msra.mxu0 %v163
    %3900 = vmatprep.subr.mxu0 %v168
    %3901 = vmatpush1.msra.mxu0 %v167
    %3902 = vmatprep.subr.mxu0 %v172
    %3903 = vmatpush1.msra.mxu0 %v171
    %3904 = vmatprep.subr.mxu0 %v176
    %3905 = vmatpush1.msra.mxu0 %v175
    %3906 = vmatprep.subr.mxu0 %v180
    %3907 = vmatpush1.msra.mxu0 %v179
    %3908 = vmatprep.subr.mxu0 %v184
    %3909 = vmatpush1.msra.mxu0 %v183
    %3910 = vmatprep.subr.mxu0 %v188
    %3911 = vmatpush1.msra.mxu0 %v187
    %3912 = vmatprep.subr.mxu0 %v192
    %3913 = vmatpush1.msra.mxu0 %v191
    %3914 = vmatprep.subr.mxu0 %v196
    %3915 = vmatpush1.msra.mxu0 %v195
    %3916 = vmatprep.subr.mxu0 %v200
    %3917 = vmatpush1.msra.mxu0 %v199
    %3918 = vmatprep.subr.mxu0 %v204
    %3919 = vmatpush1.msra.mxu0 %v203
    %3920 = vmatprep.subr.mxu0 %v208
    %3921 = vmatpush1.msra.mxu0 %v207
    %3922 = vmatprep.subr.mxu0 %v212
    %3923 = vmatpush1.msra.mxu0 %v211
    %3924 = vmatprep.subr.mxu0 %v216
    %3925 = vmatpush1.msra.mxu0 %v215
    %3926 = vmatprep.subr.mxu0 %v220
    %3927 = vmatpush1.msra.mxu0 %v219
    %3928 = vmatprep.subr.mxu0 %v224
    %3929 = vmatpush1.msra.mxu0 %v223
    %3930 = vmatprep.subr.mxu0 0.0
    %3931 = vmatpush1.msra.mxu0 0.0
    %3932 = vmatprep.subr.mxu0 0.0
    %3933 = vmatpush1.msra.mxu0 0.0
    %3934 = vmatprep.subr.mxu0 0.0
    %3935 = vmatpush1.msra.mxu0 0.0
    %3936 = vmatprep.subr.mxu0 0.0
    %3937 = vmatpush1.msra.mxu0 0.0
    %3938 = vmatprep.subr.mxu0 0.0
    %3939 = vmatpush1.msra.mxu0 0.0
    %3940 = vmatprep.subr.mxu0 0.0
    %3941 = vmatpush1.msra.mxu0 0.0
    %3942 = vmatprep.subr.mxu0 0.0
    %3943 = vmatpush1.msra.mxu0 0.0
    %3944 = vmatprep.subr.mxu0 0.0
    %3945 = vmatpush1.msra.mxu0 0.0
    %3946 = vmatprep.subr.mxu0 0.0
    %3947 = vmatpush1.msra.mxu0 0.0
    %3948 = vmatprep.subr.mxu0 0.0
    %3949 = vmatpush1.msra.mxu0 0.0
    %3950 = vmatprep.subr.mxu0 0.0
    %3951 = vmatpush1.msra.mxu0 0.0
    %3952 = vmatprep.subr.mxu0 0.0
    %3953 = vmatpush1.msra.mxu0 0.0
    %3954 = vmatprep.subr.mxu0 0.0
    %3955 = vmatpush1.msra.mxu0 0.0
    %3956 = vmatprep.subr.mxu0 0.0
    %3957 = vmatpush1.msra.mxu0 0.0
    %3958 = vmatprep.subr.mxu0 0.0
    %3959 = vmatpush1.msra.mxu0 0.0
    %3960 = vmatprep.subr.mxu0 0.0
    %3961 = vmatpush1.msra.mxu0 0.0
    %3962 = vmatprep.mubr.f32.mxu0 0.0
    %3963 = vmatmul.mubr.f32.gmra.mrb[0].mxu0 %v3684
    %v3964 = vpop.f32.mrb[0].mxu0
    %v3965 = vadd.f32 %v3823, %v3964
    %v3966 = vpop.f32.mrb[0].mxu0
    %v3967 = vadd.f32 %v3825, %v3966
    %3968 = vdwg.mxu0
    %v3969 = vadd.f32 %v3894, %v294
    %v3970 = vadd.f32 %v3896, %v298
    %v3971 = vadd.f32 %v3965, %v302
    %v3972 = vadd.f32 %v3967, %v306
    %v3973 = vmul.f32 %v3969, 0.5
    %v3974 = vtanh.pop %v3973
    %v3975 = vmul.f32 %v3974, 0.5
    %v3976 = vadd.f32 %v3975, 0.5
    %v3977 = vmul.f32 %v3970, 0.5
    %v3978 = vtanh.pop %v3977
    %v3979 = vmul.f32 %v3978, 0.5
    %v3980 = vadd.f32 %v3979, 0.5
    %v3981 = vtanh.pop %v3971
    %v3982 = vmul.f32 %v3972, 0.5
    %v3983 = vtanh.pop %v3982
    %v3984 = vmul.f32 %v3983, 0.5
    %v3985 = vadd.f32 %v3984, 0.5
    %v3986 = vmul.f32 %v3980, %v3513
    %v3987 = vmul.f32 %v3976, %v3981
    %v3988 = vadd.f32 %v3986, %v3987
    %v3989 = vtanh.pop %v3988
    %v3990 = vmul.f32 %v3985, %v3989
    %s3991 = scalar_lea.vmem [#allocation2], 224
    %v3992 = vld [vmem:[%s3991] sm:$0xff]
    %v3993 = vld [vmem:[%s3991 + $0x8] sm:$0xff]
    %v3994 = vld [vmem:[%s3991 + $0x10] sm:$0xff]
    %v3995 = vld [vmem:[%s3991 + $0x18] sm:$0xff]
    %3996 = vmatprep.subr.mxu0 %v98
    %3997 = vmatpush1.msra.mxu0 %v97
    %3998 = vmatprep.subr.mxu0 %v102
    %3999 = vmatpush1.msra.mxu0 %v101
    %4000 = vmatprep.subr.mxu0 %v106
    %4001 = vmatpush1.msra.mxu0 %v105
    %4002 = vmatprep.subr.mxu0 %v110
    %4003 = vmatpush1.msra.mxu0 %v109
    %4004 = vmatprep.subr.mxu0 %v114
    %4005 = vmatpush1.msra.mxu0 %v113
    %4006 = vmatprep.subr.mxu0 %v118
    %4007 = vmatpush1.msra.mxu0 %v117
    %4008 = vmatprep.subr.mxu0 %v122
    %4009 = vmatpush1.msra.mxu0 %v121
    %4010 = vmatprep.subr.mxu0 %v126
    %4011 = vmatpush1.msra.mxu0 %v125
    %4012 = vmatprep.subr.mxu0 %v130
    %4013 = vmatpush1.msra.mxu0 %v129
    %4014 = vmatprep.subr.mxu0 %v134
    %4015 = vmatpush1.msra.mxu0 %v133
    %4016 = vmatprep.subr.mxu0 %v138
    %4017 = vmatpush1.msra.mxu0 %v137
    %4018 = vmatprep.subr.mxu0 %v142
    %4019 = vmatpush1.msra.mxu0 %v141
    %4020 = vmatprep.subr.mxu0 %v146
    %4021 = vmatpush1.msra.mxu0 %v145
    %4022 = vmatprep.subr.mxu0 %v150
    %4023 = vmatpush1.msra.mxu0 %v149
    %4024 = vmatprep.subr.mxu0 %v154
    %4025 = vmatpush1.msra.mxu0 %v153
    %4026 = vmatprep.subr.mxu0 %v158
    %4027 = vmatpush1.msra.mxu0 %v157
    %4028 = vmatprep.subr.mxu0 0.0
    %4029 = vmatpush1.msra.mxu0 0.0
    %4030 = vmatprep.subr.mxu0 0.0
    %4031 = vmatpush1.msra.mxu0 0.0
    %4032 = vmatprep.subr.mxu0 0.0
    %4033 = vmatpush1.msra.mxu0 0.0
    %4034 = vmatprep.subr.mxu0 0.0
    %4035 = vmatpush1.msra.mxu0 0.0
    %4036 = vmatprep.subr.mxu0 0.0
    %4037 = vmatpush1.msra.mxu0 0.0
    %4038 = vmatprep.subr.mxu0 0.0
    %4039 = vmatpush1.msra.mxu0 0.0
    %4040 = vmatprep.subr.mxu0 0.0
    %4041 = vmatpush1.msra.mxu0 0.0
    %4042 = vmatprep.subr.mxu0 0.0
    %4043 = vmatpush1.msra.mxu0 0.0
    %4044 = vmatprep.subr.mxu0 0.0
    %4045 = vmatpush1.msra.mxu0 0.0
    %4046 = vmatprep.subr.mxu0 0.0
    %4047 = vmatpush1.msra.mxu0 0.0
    %4048 = vmatprep.subr.mxu0 0.0
    %4049 = vmatpush1.msra.mxu0 0.0
    %4050 = vmatprep.subr.mxu0 0.0
    %4051 = vmatpush1.msra.mxu0 0.0
    %4052 = vmatprep.subr.mxu0 0.0
    %4053 = vmatpush1.msra.mxu0 0.0
    %4054 = vmatprep.subr.mxu0 0.0
    %4055 = vmatpush1.msra.mxu0 0.0
    %4056 = vmatprep.subr.mxu0 0.0
    %4057 = vmatpush1.msra.mxu0 0.0
    %4058 = vmatprep.subr.mxu0 0.0
    %4059 = vmatpush1.msra.mxu0 0.0
    %4060 = vmatprep.mubr.f32.mxu0 0.0
    %4061 = vmatmul.mubr.f32.gmra.mrb[0].mxu0 %v3684
    %v4062 = vpop.f32.mrb[0].mxu0
    %v4063 = vadd.f32 0.0, %v4062
    %v4064 = vpop.f32.mrb[0].mxu0
    %v4065 = vadd.f32 0.0, %v4064
    %4066 = vdwg.mxu0
    %4067 = vmatprep.subr.mxu0 %v100
    %4068 = vmatpush1.msra.mxu0 %v99
    %4069 = vmatprep.subr.mxu0 %v104
    %4070 = vmatpush1.msra.mxu0 %v103
    %4071 = vmatprep.subr.mxu0 %v108
    %4072 = vmatpush1.msra.mxu0 %v107
    %4073 = vmatprep.subr.mxu0 %v112
    %4074 = vmatpush1.msra.mxu0 %v111
    %4075 = vmatprep.subr.mxu0 %v116
    %4076 = vmatpush1.msra.mxu0 %v115
    %4077 = vmatprep.subr.mxu0 %v120
    %4078 = vmatpush1.msra.mxu0 %v119
    %4079 = vmatprep.subr.mxu0 %v124
    %4080 = vmatpush1.msra.mxu0 %v123
    %4081 = vmatprep.subr.mxu0 %v128
    %4082 = vmatpush1.msra.mxu0 %v127
    %4083 = vmatprep.subr.mxu0 %v132
    %4084 = vmatpush1.msra.mxu0 %v131
    %4085 = vmatprep.subr.mxu0 %v136
    %4086 = vmatpush1.msra.mxu0 %v135
    %4087 = vmatprep.subr.mxu0 %v140
    %4088 = vmatpush1.msra.mxu0 %v139
    %4089 = vmatprep.subr.mxu0 %v144
    %4090 = vmatpush1.msra.mxu0 %v143
    %4091 = vmatprep.subr.mxu0 %v148
    %4092 = vmatpush1.msra.mxu0 %v147
    %4093 = vmatprep.subr.mxu0 %v152
    %4094 = vmatpush1.msra.mxu0 %v151
    %4095 = vmatprep.subr.mxu0 %v156
    %4096 = vmatpush1.msra.mxu0 %v155
    %4097 = vmatprep.subr.mxu0 %v160
    %4098 = vmatpush1.msra.mxu0 %v159
    %4099 = vmatprep.subr.mxu0 0.0
    %4100 = vmatpush1.msra.mxu0 0.0
    %4101 = vmatprep.subr.mxu0 0.0
    %4102 = vmatpush1.msra.mxu0 0.0
    %4103 = vmatprep.subr.mxu0 0.0
    %4104 = vmatpush1.msra.mxu0 0.0
    %4105 = vmatprep.subr.mxu0 0.0
    %4106 = vmatpush1.msra.mxu0 0.0
    %4107 = vmatprep.subr.mxu0 0.0
    %4108 = vmatpush1.msra.mxu0 0.0
    %4109 = vmatprep.subr.mxu0 0.0
    %4110 = vmatpush1.msra.mxu0 0.0
    %4111 = vmatprep.subr.mxu0 0.0
    %4112 = vmatpush1.msra.mxu0 0.0
    %4113 = vmatprep.subr.mxu0 0.0
    %4114 = vmatpush1.msra.mxu0 0.0
    %4115 = vmatprep.subr.mxu0 0.0
    %4116 = vmatpush1.msra.mxu0 0.0
    %4117 = vmatprep.subr.mxu0 0.0
    %4118 = vmatpush1.msra.mxu0 0.0
    %4119 = vmatprep.subr.mxu0 0.0
    %4120 = vmatpush1.msra.mxu0 0.0
    %4121 = vmatprep.subr.mxu0 0.0
    %4122 = vmatpush1.msra.mxu0 0.0
    %4123 = vmatprep.subr.mxu0 0.0
    %4124 = vmatpush1.msra.mxu0 0.0
    %4125 = vmatprep.subr.mxu0 0.0
    %4126 = vmatpush1.msra.mxu0 0.0
    %4127 = vmatprep.subr.mxu0 0.0
    %4128 = vmatpush1.msra.mxu0 0.0
    %4129 = vmatprep.subr.mxu0 0.0
    %4130 = vmatpush1.msra.mxu0 0.0
    %4131 = vmatprep.mubr.f32.mxu0 0.0
    %4132 = vmatmul.mubr.f32.gmra.mrb[0].mxu0 %v3684
    %v4133 = vpop.f32.mrb[0].mxu0
    %v4134 = vadd.f32 0.0, %v4133
    %v4135 = vpop.f32.mrb[0].mxu0
    %v4136 = vadd.f32 0.0, %v4135
    %4137 = vdwg.mxu0
    %v4138 = vadd.f32 %v3992, %v4063
    %v4139 = vadd.f32 %v3993, %v4065
    %v4140 = vadd.f32 %v3994, %v4134
    %v4141 = vadd.f32 %v3995, %v4136
    %v4142 = vmul.f32 %v4138, 0.5
    %v4143 = vtanh.pop %v4142
    %v4144 = vmul.f32 %v4143, 0.5
    %v4145 = vadd.f32 %v4144, 0.5
    %v4146 = vmul.f32 %v4139, 0.5
    %v4147 = vtanh.pop %v4146
    %v4148 = vmul.f32 %v4147, 0.5
    %v4149 = vadd.f32 %v4148, 0.5
    %v4150 = vtanh.pop %v4140
    %v4151 = vmul.f32 %v4141, 0.5
    %v4152 = vtanh.pop %v4151
    %v4153 = vmul.f32 %v4152, 0.5
    %v4154 = vadd.f32 %v4153, 0.5
    %v4155 = vmul.f32 %v4149, %v3682
    %v4156 = vmul.f32 %v4145, %v4150
    %v4157 = vadd.f32 %v4155, %v4156
    %v4158 = vtanh.pop %v4157
    %v4159 = vmul.f32 %v4154, %v4158
    %4160 = vmatprep.subr.mxu0 %v226
    %4161 = vmatpush1.msra.mxu0 %v225
    %4162 = vmatprep.subr.mxu0 %v230
    %4163 = vmatpush1.msra.mxu0 %v229
    %4164 = vmatprep.subr.mxu0 %v234
    %4165 = vmatpush1.msra.mxu0 %v233
    %4166 = vmatprep.subr.mxu0 %v238
    %4167 = vmatpush1.msra.mxu0 %v237
    %4168 = vmatprep.subr.mxu0 %v242
    %4169 = vmatpush1.msra.mxu0 %v241
    %4170 = vmatprep.subr.mxu0 %v246
    %4171 = vmatpush1.msra.mxu0 %v245
    %4172 = vmatprep.subr.mxu0 %v250
    %4173 = vmatpush1.msra.mxu0 %v249
    %4174 = vmatprep.subr.mxu0 %v254
    %4175 = vmatpush1.msra.mxu0 %v253
    %4176 = vmatprep.subr.mxu0 %v258
    %4177 = vmatpush1.msra.mxu0 %v257
    %4178 = vmatprep.subr.mxu0 %v262
    %4179 = vmatpush1.msra.mxu0 %v261
    %4180 = vmatprep.subr.mxu0 %v266
    %4181 = vmatpush1.msra.mxu0 %v265
    %4182 = vmatprep.subr.mxu0 %v270
    %4183 = vmatpush1.msra.mxu0 %v269
    %4184 = vmatprep.subr.mxu0 %v274
    %4185 = vmatpush1.msra.mxu0 %v273
    %4186 = vmatprep.subr.mxu0 %v278
    %4187 = vmatpush1.msra.mxu0 %v277
    %4188 = vmatprep.subr.mxu0 %v282
    %4189 = vmatpush1.msra.mxu0 %v281
    %4190 = vmatprep.subr.mxu0 %v286
    %4191 = vmatpush1.msra.mxu0 %v285
    %4192 = vmatprep.subr.mxu0 0.0
    %4193 = vmatpush1.msra.mxu0 0.0
    %4194 = vmatprep.subr.mxu0 0.0
    %4195 = vmatpush1.msra.mxu0 0.0
    %4196 = vmatprep.subr.mxu0 0.0
    %4197 = vmatpush1.msra.mxu0 0.0
    %4198 = vmatprep.subr.mxu0 0.0
    %4199 = vmatpush1.msra.mxu0 0.0
    %4200 = vmatprep.subr.mxu0 0.0
    %4201 = vmatpush1.msra.mxu0 0.0
    %4202 = vmatprep.subr.mxu0 0.0
    %4203 = vmatpush1.msra.mxu0 0.0
    %4204 = vmatprep.subr.mxu0 0.0
    %4205 = vmatpush1.msra.mxu0 0.0
    %4206 = vmatprep.subr.mxu0 0.0
    %4207 = vmatpush1.msra.mxu0 0.0
    %4208 = vmatprep.subr.mxu0 0.0
    %4209 = vmatpush1.msra.mxu0 0.0
    %4210 = vmatprep.subr.mxu0 0.0
    %4211 = vmatpush1.msra.mxu0 0.0
    %4212 = vmatprep.subr.mxu0 0.0
    %4213 = vmatpush1.msra.mxu0 0.0
    %4214 = vmatprep.subr.mxu0 0.0
    %4215 = vmatpush1.msra.mxu0 0.0
    %4216 = vmatprep.subr.mxu0 0.0
    %4217 = vmatpush1.msra.mxu0 0.0
    %4218 = vmatprep.subr.mxu0 0.0
    %4219 = vmatpush1.msra.mxu0 0.0
    %4220 = vmatprep.subr.mxu0 0.0
    %4221 = vmatpush1.msra.mxu0 0.0
    %4222 = vmatprep.subr.mxu0 0.0
    %4223 = vmatpush1.msra.mxu0 0.0
    %4224 = vmatprep.mubr.f32.mxu0 0.0
    %4225 = vmatmul.mubr.f32.gmra.mrb[0].mxu0 %v3990
    %v4226 = vpop.f32.mrb[0].mxu0
    %v4227 = vadd.f32 0.0, %v4226
    %v4228 = vpop.f32.mrb[0].mxu0
    %v4229 = vadd.f32 0.0, %v4228
    %4230 = vdwg.mxu0
    %4231 = vmatprep.subr.mxu0 %v228
    %4232 = vmatpush1.msra.mxu0 %v227
    %4233 = vmatprep.subr.mxu0 %v232
    %4234 = vmatpush1.msra.mxu0 %v231
    %4235 = vmatprep.subr.mxu0 %v236
    %4236 = vmatpush1.msra.mxu0 %v235
    %4237 = vmatprep.subr.mxu0 %v240
    %4238 = vmatpush1.msra.mxu0 %v239
    %4239 = vmatprep.subr.mxu0 %v244
    %4240 = vmatpush1.msra.mxu0 %v243
    %4241 = vmatprep.subr.mxu0 %v248
    %4242 = vmatpush1.msra.mxu0 %v247
    %4243 = vmatprep.subr.mxu0 %v252
    %4244 = vmatpush1.msra.mxu0 %v251
    %4245 = vmatprep.subr.mxu0 %v256
    %4246 = vmatpush1.msra.mxu0 %v255
    %4247 = vmatprep.subr.mxu0 %v260
    %4248 = vmatpush1.msra.mxu0 %v259
    %4249 = vmatprep.subr.mxu0 %v264
    %4250 = vmatpush1.msra.mxu0 %v263
    %4251 = vmatprep.subr.mxu0 %v268
    %4252 = vmatpush1.msra.mxu0 %v267
    %4253 = vmatprep.subr.mxu0 %v272
    %4254 = vmatpush1.msra.mxu0 %v271
    %4255 = vmatprep.subr.mxu0 %v276
    %4256 = vmatpush1.msra.mxu0 %v275
    %4257 = vmatprep.subr.mxu0 %v280
    %4258 = vmatpush1.msra.mxu0 %v279
    %4259 = vmatprep.subr.mxu0 %v284
    %4260 = vmatpush1.msra.mxu0 %v283
    %4261 = vmatprep.subr.mxu0 %v288
    %4262 = vmatpush1.msra.mxu0 %v287
    %4263 = vmatprep.subr.mxu0 0.0
    %4264 = vmatpush1.msra.mxu0 0.0
    %4265 = vmatprep.subr.mxu0 0.0
    %4266 = vmatpush1.msra.mxu0 0.0
    %4267 = vmatprep.subr.mxu0 0.0
    %4268 = vmatpush1.msra.mxu0 0.0
    %4269 = vmatprep.subr.mxu0 0.0
    %4270 = vmatpush1.msra.mxu0 0.0
    %4271 = vmatprep.subr.mxu0 0.0
    %4272 = vmatpush1.msra.mxu0 0.0
    %4273 = vmatprep.subr.mxu0 0.0
    %4274 = vmatpush1.msra.mxu0 0.0
    %4275 = vmatprep.subr.mxu0 0.0
    %4276 = vmatpush1.msra.mxu0 0.0
    %4277 = vmatprep.subr.mxu0 0.0
    %4278 = vmatpush1.msra.mxu0 0.0
    %4279 = vmatprep.subr.mxu0 0.0
    %4280 = vmatpush1.msra.mxu0 0.0
    %4281 = vmatprep.subr.mxu0 0.0
    %4282 = vmatpush1.msra.mxu0 0.0
    %4283 = vmatprep.subr.mxu0 0.0
    %4284 = vmatpush1.msra.mxu0 0.0
    %4285 = vmatprep.subr.mxu0 0.0
    %4286 = vmatpush1.msra.mxu0 0.0
    %4287 = vmatprep.subr.mxu0 0.0
    %4288 = vmatpush1.msra.mxu0 0.0
    %4289 = vmatprep.subr.mxu0 0.0
    %4290 = vmatpush1.msra.mxu0 0.0
    %4291 = vmatprep.subr.mxu0 0.0
    %4292 = vmatpush1.msra.mxu0 0.0
    %4293 = vmatprep.subr.mxu0 0.0
    %4294 = vmatpush1.msra.mxu0 0.0
    %4295 = vmatprep.mubr.f32.mxu0 0.0
    %4296 = vmatmul.mubr.f32.gmra.mrb[0].mxu0 %v3990
    %v4297 = vpop.f32.mrb[0].mxu0
    %v4298 = vadd.f32 0.0, %v4297
    %v4299 = vpop.f32.mrb[0].mxu0
    %v4300 = vadd.f32 0.0, %v4299
    %4301 = vdwg.mxu0
    %4302 = vmatprep.subr.mxu0 %v162
    %4303 = vmatpush1.msra.mxu0 %v161
    %4304 = vmatprep.subr.mxu0 %v166
    %4305 = vmatpush1.msra.mxu0 %v165
    %4306 = vmatprep.subr.mxu0 %v170
    %4307 = vmatpush1.msra.mxu0 %v169
    %4308 = vmatprep.subr.mxu0 %v174
    %4309 = vmatpush1.msra.mxu0 %v173
    %4310 = vmatprep.subr.mxu0 %v178
    %4311 = vmatpush1.msra.mxu0 %v177
    %4312 = vmatprep.subr.mxu0 %v182
    %4313 = vmatpush1.msra.mxu0 %v181
    %4314 = vmatprep.subr.mxu0 %v186
    %4315 = vmatpush1.msra.mxu0 %v185
    %4316 = vmatprep.subr.mxu0 %v190
    %4317 = vmatpush1.msra.mxu0 %v189
    %4318 = vmatprep.subr.mxu0 %v194
    %4319 = vmatpush1.msra.mxu0 %v193
    %4320 = vmatprep.subr.mxu0 %v198
    %4321 = vmatpush1.msra.mxu0 %v197
    %4322 = vmatprep.subr.mxu0 %v202
    %4323 = vmatpush1.msra.mxu0 %v201
    %4324 = vmatprep.subr.mxu0 %v206
    %4325 = vmatpush1.msra.mxu0 %v205
    %4326 = vmatprep.subr.mxu0 %v210
    %4327 = vmatpush1.msra.mxu0 %v209
    %4328 = vmatprep.subr.mxu0 %v214
    %4329 = vmatpush1.msra.mxu0 %v213
    %4330 = vmatprep.subr.mxu0 %v218
    %4331 = vmatpush1.msra.mxu0 %v217
    %4332 = vmatprep.subr.mxu0 %v222
    %4333 = vmatpush1.msra.mxu0 %v221
    %4334 = vmatprep.subr.mxu0 0.0
    %4335 = vmatpush1.msra.mxu0 0.0
    %4336 = vmatprep.subr.mxu0 0.0
    %4337 = vmatpush1.msra.mxu0 0.0
    %4338 = vmatprep.subr.mxu0 0.0
    %4339 = vmatpush1.msra.mxu0 0.0
    %4340 = vmatprep.subr.mxu0 0.0
    %4341 = vmatpush1.msra.mxu0 0.0
    %4342 = vmatprep.subr.mxu0 0.0
    %4343 = vmatpush1.msra.mxu0 0.0
    %4344 = vmatprep.subr.mxu0 0.0
    %4345 = vmatpush1.msra.mxu0 0.0
    %4346 = vmatprep.subr.mxu0 0.0
    %4347 = vmatpush1.msra.mxu0 0.0
    %4348 = vmatprep.subr.mxu0 0.0
    %4349 = vmatpush1.msra.mxu0 0.0
    %4350 = vmatprep.subr.mxu0 0.0
    %4351 = vmatpush1.msra.mxu0 0.0
    %4352 = vmatprep.subr.mxu0 0.0
    %4353 = vmatpush1.msra.mxu0 0.0
    %4354 = vmatprep.subr.mxu0 0.0
    %4355 = vmatpush1.msra.mxu0 0.0
    %4356 = vmatprep.subr.mxu0 0.0
    %4357 = vmatpush1.msra.mxu0 0.0
    %4358 = vmatprep.subr.mxu0 0.0
    %4359 = vmatpush1.msra.mxu0 0.0
    %4360 = vmatprep.subr.mxu0 0.0
    %4361 = vmatpush1.msra.mxu0 0.0
    %4362 = vmatprep.subr.mxu0 0.0
    %4363 = vmatpush1.msra.mxu0 0.0
    %4364 = vmatprep.subr.mxu0 0.0
    %4365 = vmatpush1.msra.mxu0 0.0
    %4366 = vmatprep.mubr.f32.mxu0 0.0
    %4367 = vmatmul.mubr.f32.gmra.mrb[0].mxu0 %v4159
    %v4368 = vpop.f32.mrb[0].mxu0
    %v4369 = vadd.f32 %v4227, %v4368
    %v4370 = vpop.f32.mrb[0].mxu0
    %v4371 = vadd.f32 %v4229, %v4370
    %4372 = vdwg.mxu0
    %4373 = vmatprep.subr.mxu0 %v164
    %4374 = vmatpush1.msra.mxu0 %v163
    %4375 = vmatprep.subr.mxu0 %v168
    %4376 = vmatpush1.msra.mxu0 %v167
    %4377 = vmatprep.subr.mxu0 %v172
    %4378 = vmatpush1.msra.mxu0 %v171
    %4379 = vmatprep.subr.mxu0 %v176
    %4380 = vmatpush1.msra.mxu0 %v175
    %4381 = vmatprep.subr.mxu0 %v180
    %4382 = vmatpush1.msra.mxu0 %v179
    %4383 = vmatprep.subr.mxu0 %v184
    %4384 = vmatpush1.msra.mxu0 %v183
    %4385 = vmatprep.subr.mxu0 %v188
    %4386 = vmatpush1.msra.mxu0 %v187
    %4387 = vmatprep.subr.mxu0 %v192
    %4388 = vmatpush1.msra.mxu0 %v191
    %4389 = vmatprep.subr.mxu0 %v196
    %4390 = vmatpush1.msra.mxu0 %v195
    %4391 = vmatprep.subr.mxu0 %v200
    %4392 = vmatpush1.msra.mxu0 %v199
    %4393 = vmatprep.subr.mxu0 %v204
    %4394 = vmatpush1.msra.mxu0 %v203
    %4395 = vmatprep.subr.mxu0 %v208
    %4396 = vmatpush1.msra.mxu0 %v207
    %4397 = vmatprep.subr.mxu0 %v212
    %4398 = vmatpush1.msra.mxu0 %v211
    %4399 = vmatprep.subr.mxu0 %v216
    %4400 = vmatpush1.msra.mxu0 %v215
    %4401 = vmatprep.subr.mxu0 %v220
    %4402 = vmatpush1.msra.mxu0 %v219
    %4403 = vmatprep.subr.mxu0 %v224
    %4404 = vmatpush1.msra.mxu0 %v223
    %4405 = vmatprep.subr.mxu0 0.0
    %4406 = vmatpush1.msra.mxu0 0.0
    %4407 = vmatprep.subr.mxu0 0.0
    %4408 = vmatpush1.msra.mxu0 0.0
    %4409 = vmatprep.subr.mxu0 0.0
    %4410 = vmatpush1.msra.mxu0 0.0
    %4411 = vmatprep.subr.mxu0 0.0
    %4412 = vmatpush1.msra.mxu0 0.0
    %4413 = vmatprep.subr.mxu0 0.0
    %4414 = vmatpush1.msra.mxu0 0.0
    %4415 = vmatprep.subr.mxu0 0.0
    %4416 = vmatpush1.msra.mxu0 0.0
    %4417 = vmatprep.subr.mxu0 0.0
    %4418 = vmatpush1.msra.mxu0 0.0
    %4419 = vmatprep.subr.mxu0 0.0
    %4420 = vmatpush1.msra.mxu0 0.0
    %4421 = vmatprep.subr.mxu0 0.0
    %4422 = vmatpush1.msra.mxu0 0.0
    %4423 = vmatprep.subr.mxu0 0.0
    %4424 = vmatpush1.msra.mxu0 0.0
    %4425 = vmatprep.subr.mxu0 0.0
    %4426 = vmatpush1.msra.mxu0 0.0
    %4427 = vmatprep.subr.mxu0 0.0
    %4428 = vmatpush1.msra.mxu0 0.0
    %4429 = vmatprep.subr.mxu0 0.0
    %4430 = vmatpush1.msra.mxu0 0.0
    %4431 = vmatprep.subr.mxu0 0.0
    %4432 = vmatpush1.msra.mxu0 0.0
    %4433 = vmatprep.subr.mxu0 0.0
    %4434 = vmatpush1.msra.mxu0 0.0
    %4435 = vmatprep.subr.mxu0 0.0
    %4436 = vmatpush1.msra.mxu0 0.0
    %4437 = vmatprep.mubr.f32.mxu0 0.0
    %4438 = vmatmul.mubr.f32.gmra.mrb[0].mxu0 %v4159
    %v4439 = vpop.f32.mrb[0].mxu0
    %v4440 = vadd.f32 %v4298, %v4439
    %v4441 = vpop.f32.mrb[0].mxu0
    %v4442 = vadd.f32 %v4300, %v4441
    %4443 = vdwg.mxu0
    %v4444 = vadd.f32 %v4369, %v294
    %v4445 = vadd.f32 %v4371, %v298
    %v4446 = vadd.f32 %v4440, %v302
    %v4447 = vadd.f32 %v4442, %v306
    %v4448 = vmul.f32 %v4444, 0.5
    %v4449 = vtanh.pop %v4448
    %v4450 = vmul.f32 %v4449, 0.5
    %v4451 = vadd.f32 %v4450, 0.5
    %v4452 = vmul.f32 %v4445, 0.5
    %v4453 = vtanh.pop %v4452
    %v4454 = vmul.f32 %v4453, 0.5
    %v4455 = vadd.f32 %v4454, 0.5
    %v4456 = vtanh.pop %v4446
    %v4457 = vmul.f32 %v4447, 0.5
    %v4458 = vtanh.pop %v4457
    %v4459 = vmul.f32 %v4458, 0.5
    %v4460 = vadd.f32 %v4459, 0.5
    %v4461 = vmul.f32 %v4455, %v3988
    %v4462 = vmul.f32 %v4451, %v4456
    %v4463 = vadd.f32 %v4461, %v4462
    %v4464 = vtanh.pop %v4463
    %v4465 = vmul.f32 %v4460, %v4464
    %4466 = vst [vmem:[#allocation3] sm:$0xff] %v4159
    %4467 = vst [vmem:[#allocation4] sm:$0xff] %v4157
    %4468 = vst [vmem:[#allocation5] sm:$0xff] %v4465
    %4469 = vst [vmem:[#allocation6] sm:$0xff] %v4463
    // Predicated region
    $region58: #{tpu_custom_call.1} parent=1 // pred_check
      %p4470 = pneg %p89
    $region59: #{tpu_custom_call.1} parent=1 // pred_check_branch
      %4472 = sbr.rel (%p4470) target = $region61
    $region60: #{tpu_custom_call.1} parent=1 // pred_region
      %v4473 = vld [vmem:[%s7] sm:$0xff]
      %v4474 = vld [vmem:[%s7 + $0x8] sm:$0xff]
      %v4475 = vld [vmem:[%s7 + $0x10] sm:$0xff]
      %v4476 = vld [vmem:[%s7 + $0x18] sm:$0xff]
      %v4477 = vld [vmem:[%s7 + $0x20] sm:$0xff]
      %v4478 = vld [vmem:[%s7 + $0x28] sm:$0xff]
      %v4479 = vld [vmem:[%s7 + $0x30] sm:$0xff]
      %v4480 = vld [vmem:[%s7 + $0x38] sm:$0xff]
      %v4481 = vld [vmem:[%s7 + $0x40] sm:$0xff]
      %v4482 = vld [vmem:[%s7 + $0x48] sm:$0xff]
      %v4483 = vld [vmem:[%s7 + $0x50] sm:$0xff]
      %v4484 = vld [vmem:[%s7 + $0x58] sm:$0xff]
      %v4485 = vld [vmem:[%s7 + $0x60] sm:$0xff]
      %v4486 = vld [vmem:[%s7 + $0x68] sm:$0xff]
      %v4487 = vld [vmem:[%s7 + $0x70] sm:$0xff]
      %v4488 = vld [vmem:[%s7 + $0x78] sm:$0xff]
      %v4489 = vld [vmem:[#allocation7] sm:$0x1]
      %v4491 = vlaneseq
      %v4492 = vshrl.u32 %v4491, 7
      %v4493 = vsub.s32 0, %v4492
      %v4494 = vrot.slane %v4489, %v4493
      %4496 = vmatprep.subr.mxu0 0.0
      %4497 = vmatpush1.msra.mxu0 %v4473
      %4498 = vmatprep.subr.mxu0 0.0
      %4499 = vmatpush1.msra.mxu0 %v4474
      %4500 = vmatprep.subr.mxu0 0.0
      %4501 = vmatpush1.msra.mxu0 %v4475
      %4502 = vmatprep.subr.mxu0 0.0
      %4503 = vmatpush1.msra.mxu0 %v4476
      %4504 = vmatprep.subr.mxu0 0.0
      %4505 = vmatpush1.msra.mxu0 %v4477
      %4506 = vmatprep.subr.mxu0 0.0
      %4507 = vmatpush1.msra.mxu0 %v4478
      %4508 = vmatprep.subr.mxu0 0.0
      %4509 = vmatpush1.msra.mxu0 %v4479
      %4510 = vmatprep.subr.mxu0 0.0
      %4511 = vmatpush1.msra.mxu0 %v4480
      %4512 = vmatprep.subr.mxu0 0.0
      %4513 = vmatpush1.msra.mxu0 %v4481
      %4514 = vmatprep.subr.mxu0 0.0
      %4515 = vmatpush1.msra.mxu0 %v4482
      %4516 = vmatprep.subr.mxu0 0.0
      %4517 = vmatpush1.msra.mxu0 %v4483
      %4518 = vmatprep.subr.mxu0 0.0
      %4519 = vmatpush1.msra.mxu0 %v4484
      %4520 = vmatprep.subr.mxu0 0.0
      %4521 = vmatpush1.msra.mxu0 %v4485
      %4522 = vmatprep.subr.mxu0 0.0
      %4523 = vmatpush1.msra.mxu0 %v4486
      %4524 = vmatprep.subr.mxu0 0.0
      %4525 = vmatpush1.msra.mxu0 %v4487
      %4526 = vmatprep.subr.mxu0 0.0
      %4527 = vmatpush1.msra.mxu0 %v4488
      %4528 = vmatprep.subr.mxu0 0.0
      %4529 = vmatpush1.msra.mxu0 0.0
      %4530 = vmatprep.subr.mxu0 0.0
      %4531 = vmatpush1.msra.mxu0 0.0
      %4532 = vmatprep.subr.mxu0 0.0
      %4533 = vmatpush1.msra.mxu0 0.0
      %4534 = vmatprep.subr.mxu0 0.0
      %4535 = vmatpush1.msra.mxu0 0.0
      %4536 = vmatprep.subr.mxu0 0.0
      %4537 = vmatpush1.msra.mxu0 0.0
      %4538 = vmatprep.subr.mxu0 0.0
      %4539 = vmatpush1.msra.mxu0 0.0
      %4540 = vmatprep.subr.mxu0 0.0
      %4541 = vmatpush1.msra.mxu0 0.0
      %4542 = vmatprep.subr.mxu0 0.0
      %4543 = vmatpush1.msra.mxu0 0.0
      %4544 = vmatprep.subr.mxu0 0.0
      %4545 = vmatpush1.msra.mxu0 0.0
      %4546 = vmatprep.subr.mxu0 0.0
      %4547 = vmatpush1.msra.mxu0 0.0
      %4548 = vmatprep.subr.mxu0 0.0
      %4549 = vmatpush1.msra.mxu0 0.0
      %4550 = vmatprep.subr.mxu0 0.0
      %4551 = vmatpush1.msra.mxu0 0.0
      %4552 = vmatprep.subr.mxu0 0.0
      %4553 = vmatpush1.msra.mxu0 0.0
      %4554 = vmatprep.subr.mxu0 0.0
      %4555 = vmatpush1.msra.mxu0 0.0
      %4556 = vmatprep.subr.mxu0 0.0
      %4557 = vmatpush1.msra.mxu0 0.0
      %4558 = vmatprep.subr.mxu0 0.0
      %4559 = vmatpush1.msra.mxu0 0.0
      %4560 = vmatprep.mubr.f32.mxu0 0.0
      %4561 = vmatmul.mubr.f32.gmra.mrb[0].mxu0 %v4465
      %v4562 = vpop.f32.mrb[0].mxu0
      %v4563 = vadd.f32 %v4494, %v4562
      %v4564 = vpop.f32.mrb[0].mxu0
      %4565 = vdwg.mxu0
      %vm4566 = vcmask 7168
      %4567 = vst.msk [vmem:[%s9] sm:$0xff] %vm4566, %v4563
    $region61: #{tpu_custom_call.1} parent=1 // pred_fallthru
      _
    // Predicated region
    $region62: #{tpu_custom_call.1} parent=1 // pred_check
      _
    $region63: #{tpu_custom_call.1} parent=1 // pred_check_branch
      %4569 = sbr.rel (0) target = $region65
    $region64: #{tpu_custom_call.1} parent=1 // pred_region
      _
    $region65: #{tpu_custom_call.1} parent=1 // pred_fallthru
      _
    // Predicated region
    $region66: #{tpu_custom_call.1} parent=1 // pred_check
      _
    $region67: #{tpu_custom_call.1} parent=1 // pred_check_branch
      %4571 = sbr.rel (0) target = $region69
    $region68: #{tpu_custom_call.1} parent=1 // pred_region
      _
    $region69: #{tpu_custom_call.1} parent=1 // pred_fallthru
      _
    %4572 = vsyncpa [#allocation9], 1
    %4573 = vsyncpa [#allocation11], 1
    %4574 = vsyncpa [#allocation14], 1

</llo_original>
